<compile_context>
chip_gen: v7x
topology: tpu7x:2x2x1
jax: 0.10.0
libtpu: 0.0.40
codegen_flags: <defaults>
</compile_context>

<pallas_src>
import functools

import jax
import jax.numpy as jnp
from jax import lax
from jax.experimental import pallas as pl
from jax.experimental.pallas import tpu as pltpu

PAD_IDX = 1


def concat_pool_bigru_kernel(
    len_ref,      # (Bb, 1)     int32  valid lengths
    emb_f_ref,    # (Tc, Bb, E) bf16   forward-ordered time chunk
    emb_b_ref,    # (Tc, Bb, E) bf16   reverse-ordered time chunk (block nT-1-t)
    wih_ref,      # (2, E, 3H)  bf16   gate-fused input->hidden weights [r|z|n]
    whh_ref,      # (2, H, 3H)  bf16   gate-fused hidden->hidden weights [r|z|n]
    bgi_ref,      # (2, 1, 3H)  f32    b_ih with b_hh folded into the r,z thirds
    bhn_ref,      # (2, 1, H)   f32    b_hh n-gate part (sits inside r * (.))
    wout_ref,     # (4H, n_out) f32
    bout_ref,     # (1, n_out)  f32
    out_ref,      # (Bb, n_out) f32
    gif_ref,      # (Tc, Bb, 3H) f32 scratch: forward GI projections
    gib_ref,      # (Tc, Bb, 3H) f32 scratch: backward GI projections
    hf_ref, hb_ref, sf_ref, sb_ref, mf_ref, mb_ref,   # (Bb, H) f32 scratch
    *, t_orig, t_pad, inv_t):
  t_idx = pl.program_id(1)
  n_t = pl.num_programs(1)
  Tc, Bb, E = emb_f_ref.shape
  H = whh_ref.shape[1]

  # --- init carries at the start of each batch block's time loop -----------
  @pl.when(t_idx == 0)
  def _init():
    zeros = jnp.zeros((Bb, H), jnp.float32)
    neg = jnp.full((Bb, H), -jnp.inf, jnp.float32)
    hf_ref[...] = zeros
    hb_ref[...] = zeros
    sf_ref[...] = zeros
    sb_ref[...] = zeros
    mf_ref[...] = neg
    mb_ref[...] = neg

  # --- hoisted loads / broadcasts (once per chunk, not per step) -----------
  wih_f, wih_b = wih_ref[0], wih_ref[1]            # (E, 3H) bf16
  whh_f, whh_b = whh_ref[0], whh_ref[1]            # (H, 3H) bf16
  bgi_f = jnp.broadcast_to(bgi_ref[0], (Bb, 3 * H))
  bgi_b = jnp.broadcast_to(bgi_ref[1], (Bb, 3 * H))
  bhn_f = jnp.broadcast_to(bhn_ref[0], (Bb, H))
  bhn_b = jnp.broadcast_to(bhn_ref[1], (Bb, H))
  lens = len_ref[...]                              # (Bb, 1) int32

  # --- input->hidden projections for the whole chunk, staged in VMEM scratch
  # (independent of h -> off the serial chain; scratch keeps them out of the
  # vreg file so the recurrence loop carries only the f32 state).
  if Bb % 16 == 0:
    # Fused: one (Tc*Bb, E) @ (E, 3H) matmul per direction (layout-free reshape
    # since Bb is a multiple of the bf16 sublane tile).
    ef2 = emb_f_ref[...].reshape(Tc * Bb, E)
    eb2 = emb_b_ref[...].reshape(Tc * Bb, E)
    bgi_f2 = jnp.broadcast_to(bgi_ref[0], (Tc * Bb, 3 * H))
    bgi_b2 = jnp.broadcast_to(bgi_ref[1], (Tc * Bb, 3 * H))
    gif_ref[...] = (jnp.dot(ef2, wih_f, preferred_element_type=jnp.float32)
                    + bgi_f2).reshape(Tc, Bb, 3 * H)
    gib_ref[...] = (jnp.dot(eb2, wih_b, preferred_element_type=jnp.float32)
                    + bgi_b2).reshape(Tc, Bb, 3 * H)
  else:
    for i in range(Tc):
      gif_ref[i] = (jnp.dot(emb_f_ref[i], wih_f,
                            preferred_element_type=jnp.float32) + bgi_f)
      gib_ref[i] = (jnp.dot(emb_b_ref[i], wih_b,
                            preferred_element_type=jnp.float32) + bgi_b)

  # --- length masks for the whole chunk, hoisted out of the step loop ------
  t_base = t_idx * Tc
  t_iota = lax.broadcasted_iota(jnp.int32, (Tc, Bb, 1), 0) + t_base   # fwd time
  lens3 = lens[None]                                                  # (1,Bb,1)
  m_f_all = (t_iota < lens3).astype(jnp.float32)                      # (Tc,Bb,1)
  m_b_all = (((t_pad - 1) - t_iota) < lens3).astype(jnp.float32)      # (Tc,Bb,1)

  hf, hb = hf_ref[...], hb_ref[...]
  sf, sb = sf_ref[...], sb_ref[...]
  mf, mb = mf_ref[...], mb_ref[...]
  neg_inf = jnp.full((Bb, H), -jnp.inf, jnp.float32)

  def gru_step(h, gi, w_hh, bhn, m):
    # bf16 operands for the MXU; f32 accumulation and f32 state carry.
    gh = jnp.dot(h.astype(jnp.bfloat16), w_hh,
                 preferred_element_type=jnp.float32)                  # (Bb, 3H)
    r = jax.nn.sigmoid(gi[:, :H] + gh[:, :H])
    z = jax.nn.sigmoid(gi[:, H:2 * H] + gh[:, H:2 * H])
    n = jnp.tanh(gi[:, 2 * H:] + r * (gh[:, 2 * H:] + bhn))
    h_new = n + z * (h - n)
    h = h + m * (h_new - h)        # freeze hidden past each valid length
    return h, m * h                # padded positions of gru_out are zeros

  # --- fully unrolled chunk loop; both directions interleave each iteration.
  for i in range(Tc):
    t_f = t_base + i                    # global forward time
    t_b = (t_pad - 1) - t_f             # global backward time
    m_f = m_f_all[i]                    # (Bb, 1)
    m_b = m_b_all[i]

    hf, out_f = gru_step(hf, gif_ref[i], whh_f, bhn_f, m_f)
    hb, out_b = gru_step(hb, gib_ref[Tc - 1 - i], whh_b, bhn_b, m_b)

    sf = sf + out_f
    sb = sb + out_b
    # PyTorch semantics: padded steps (t < t_orig) contribute 0 to the max for
    # short sequences; steps past the chunk padding (t >= t_orig) are excluded.
    if t_pad == t_orig:
      cf, cb = out_f, out_b             # no chunk padding -> folds away
    else:
      cf = jnp.where(t_f < t_orig, out_f, neg_inf)
      cb = jnp.where(t_b < t_orig, out_b, neg_inf)
    mf = jnp.maximum(mf, cf)
    mb = jnp.maximum(mb, cb)

  hf_ref[...] = hf
  hb_ref[...] = hb
  sf_ref[...] = sf
  sb_ref[...] = sb
  mf_ref[...] = mf
  mb_ref[...] = mb

  # --- finalize: pooling concat + Linear + log_softmax ----------------------
  @pl.when(t_idx == n_t - 1)
  def _finalize():
    # feat = [avg_f | avg_b | max_f | max_b] @ w_out, written as four partial
    # matmuls to avoid lane-axis concatenations. Kept in f32 (tiny n_out).
    w = wout_ref[...]                              # (4H, n_out)
    logits = (jnp.dot(sf_ref[...] * inv_t, w[:H],
                      preferred_element_type=jnp.float32)
              + jnp.dot(sb_ref[...] * inv_t, w[H:2 * H],
                        preferred_element_type=jnp.float32)
              + jnp.dot(mf_ref[...], w[2 * H:3 * H],
                        preferred_element_type=jnp.float32)
              + jnp.dot(mb_ref[...], w[3 * H:],
                        preferred_element_type=jnp.float32)
              + bout_ref[...])
    mx = jnp.max(logits, axis=-1, keepdims=True)
    lse = jnp.log(jnp.sum(jnp.exp(logits - mx), axis=-1, keepdims=True)) + mx
    out_ref[...] = logits - lse                    # log_softmax


def init_params(key, vocab_size, embedding_dim, n_hidden, n_out):
  ks = jax.random.split(key, 6)
  emb = jax.random.normal(ks[0], (vocab_size, embedding_dim), jnp.float32)
  emb = emb.at[PAD_IDX].set(0.0)      # padding_idx row (frozen "pretrained" table)
  k = 1.0 / float(n_hidden) ** 0.5
  # gate-fused layouts: last dim is [r | z | n]
  w_ih = jax.random.uniform(ks[1], (2, embedding_dim, 3 * n_hidden), jnp.float32, -k, k)
  w_hh = jax.random.uniform(ks[2], (2, n_hidden, 3 * n_hidden), jnp.float32, -k, k)
  b_ih = jax.random.uniform(ks[3], (2, 1, 3 * n_hidden), jnp.float32, -k, k)
  b_hh = jax.random.uniform(ks[4], (2, 1, 3 * n_hidden), jnp.float32, -k, k)
  k2 = 1.0 / float(4 * n_hidden) ** 0.5
  w_out = jax.random.uniform(ks[5], (4 * n_hidden, n_out), jnp.float32, -k2, k2)
  b_out = jnp.zeros((1, n_out), jnp.float32)
  return dict(embedding=emb, w_ih=w_ih, w_hh=w_hh, b_ih=b_ih, b_hh=b_hh,
              w_out=w_out, b_out=b_out)


@functools.partial(jax.jit, static_argnames=("time_block", "batch_block"))
def concat_pooling_gru_adaptive(seq, lengths, params, time_block=8, batch_block=None):
  """seq: (B, T) int32 token ids, lengths: (B,) int32 valid lengths."""
  B, T = seq.shape
  E = params["embedding"].shape[1]
  H = params["w_hh"].shape[1]
  n_out = params["w_out"].shape[-1]
  if batch_block is None:
    # v7x has 2 TensorCores: give the 'parallel' batch axis >= 2 blocks when the
    # batch is large enough to keep each sub-block a multiple of the bf16
    # sublane tile; small batches keep one full-batch block (full-dim exception).
    Bb = B // 2 if (B >= 32 and (B // 2) % 16 == 0) else B
  else:
    Bb = batch_block
  assert B % Bb == 0
  assert Bb == B or Bb % 16 == 0, \
      "sub-batch blocks must be a multiple of 16 (bf16 sublane tile)"

  # Embedding gather emitted directly time-major, cast to bf16 (halves the
  # HBM->VMEM bytes of the dominant streamed tensor; MXU runs bf16 at full rate).
  # Only the small int32 id matrix is transposed, never the (B,T,E) activations.
  emb = jnp.take(params["embedding"], seq.T, axis=0).astype(jnp.bfloat16)   # (T,B,E)

  Tc = min(time_block, T)
  n_t = -(-T // Tc)
  T_pad = n_t * Tc
  if T_pad != T:
    emb = jnp.pad(emb, ((0, T_pad - T), (0, 0), (0, 0)))

  # bf16 MXU weight operands; biases stay f32 (added to f32 accumulators).
  w_ih = params["w_ih"].astype(jnp.bfloat16)
  w_hh = params["w_hh"].astype(jnp.bfloat16)
  # Fold the r,z parts of b_hh into the GI bias (added once per chunk);
  # the n part of b_hh stays separate (it sits inside the r*(.) term).
  b_gi = params["b_ih"].at[:, :, :2 * H].add(params["b_hh"][:, :, :2 * H])  # (2,1,3H)
  b_hn = params["b_hh"][:, :, 2 * H:]                                       # (2,1,H)
  lens2d = lengths.reshape(B, 1).astype(jnp.int32)

  kernel = functools.partial(concat_pool_bigru_kernel,
                             t_orig=T, t_pad=T_pad, inv_t=1.0 / T)

  out = pl.pallas_call(
      kernel,
      out_shape=jax.ShapeDtypeStruct((B, n_out), jnp.float32),
      grid_spec=pltpu.PrefetchScalarGridSpec(
          num_scalar_prefetch=0,
          grid=(B // Bb, n_t),
          in_specs=[
              pl.BlockSpec((Bb, 1), lambda b, t: (b, 0)),                   # lengths
              pl.BlockSpec((Tc, Bb, E), lambda b, t: (t, b, 0)),            # emb fwd
              pl.BlockSpec((Tc, Bb, E), lambda b, t: (n_t - 1 - t, b, 0)),  # emb rev
              pl.BlockSpec((2, E, 3 * H), lambda b, t: (0, 0, 0)),          # w_ih
              pl.BlockSpec((2, H, 3 * H), lambda b, t: (0, 0, 0)),          # w_hh
              pl.BlockSpec((2, 1, 3 * H), lambda b, t: (0, 0, 0)),          # b_gi
              pl.BlockSpec((2, 1, H), lambda b, t: (0, 0, 0)),              # b_hn
              pl.BlockSpec((4 * H, n_out), lambda b, t: (0, 0)),            # w_out
              pl.BlockSpec((1, n_out), lambda b, t: (0, 0)),                # b_out
          ],
          out_specs=pl.BlockSpec((Bb, n_out), lambda b, t: (b, 0)),
          scratch_shapes=[
              pltpu.VMEM((Tc, Bb, 3 * H), jnp.float32),   # GI forward
              pltpu.VMEM((Tc, Bb, 3 * H), jnp.float32),   # GI backward
          ] + [pltpu.VMEM((Bb, H), jnp.float32)] * 6,     # hf hb sf sb mf mb
      ),
      compiler_params=pltpu.CompilerParams(
          dimension_semantics=("parallel", "arbitrary"),
          # 64 MiB: well within v5e/v6e's 128 MiB; actual usage (bf16 emb chunks
          # x2 streams x2 buffers + GI scratch + weights) stays far below the
          # v7x 64 MiB / TC budget at these tile sizes.
          vmem_limit_bytes=64 * 1024 * 1024),
  )(lens2d, emb, emb, w_ih, w_hh, b_gi, b_hn,
    params["w_out"], params["b_out"])
  return out


@jax.jit
def reference_forward(seq, lengths, params):
  """Pure-JAX reference mirroring the kernel's bf16-operand / f32-accumulate math."""
  B, T = seq.shape
  H = params["w_hh"].shape[1]
  emb = jnp.take(params["embedding"], seq, axis=0).astype(jnp.bfloat16)   # (B,T,E)
  xs = jnp.transpose(emb, (1, 0, 2))                                      # (T,B,E)
  ms = (jnp.arange(T)[:, None] < lengths[None, :]).astype(jnp.float32)[:, :, None]
  w_ih_bf = params["w_ih"].astype(jnp.bfloat16)
  w_hh_bf = params["w_hh"].astype(jnp.bfloat16)

  def run_dir(d, reverse):
    w_ih, w_hh = w_ih_bf[d], w_hh_bf[d]
    b_ih, b_hh = params["b_ih"][d], params["b_hh"][d]
    xs_d = xs[::-1] if reverse else xs
    ms_d = ms[::-1] if reverse else ms

    def step(h, xm):
      x, m = xm
      gi = jnp.dot(x, w_ih, preferred_element_type=jnp.float32) + b_ih
      gh = jnp.dot(h.astype(jnp.bfloat16), w_hh,
                   preferred_element_type=jnp.float32) + b_hh
      r = jax.nn.sigmoid(gi[:, :H] + gh[:, :H])
      z = jax.nn.sigmoid(gi[:, H:2 * H] + gh[:, H:2 * H])
      n = jnp.tanh(gi[:, 2 * H:] + r * gh[:, 2 * H:])
      h_new = n + z * (h - n)
      h = h + m * (h_new - h)
      return h, m * h

    _, outs = lax.scan(step, jnp.zeros((B, H), jnp.float32), (xs_d, ms_d))
    return outs[::-1] if reverse else outs

  gru_out = jnp.concatenate([run_dir(0, False), run_dir(1, True)], axis=-1)  # (T,B,2H)
  avg = jnp.mean(gru_out, axis=0)
  mx = jnp.max(gru_out, axis=0)
  feat = jnp.concatenate([avg, mx], axis=1)
  logits = feat @ params["w_out"] + params["b_out"]
  return jax.nn.log_softmax(logits, axis=-1)


if __name__ == "__main__":
  B, T, V, E, H, N_OUT = 2, 8, 50, 16, 32, 3

  key = jax.random.PRNGKey(0)
  k_params, k_seq = jax.random.split(key, 2)
  params = init_params(k_params, V, E, H, N_OUT)

  seq = jax.random.randint(k_seq, (B, T), 2, V, dtype=jnp.int32)
  lengths = jnp.array([T, T - 3], dtype=jnp.int32)
  # pad positions beyond each length with PAD_IDX (like torchtext batching)
  seq = jnp.where(jnp.arange(T)[None, :] < lengths[:, None], seq, PAD_IDX)

  # time_block=4 exercises the multi-chunk streaming path (T=8 -> 2 chunks).
  out = concat_pooling_gru_adaptive(seq, lengths, params, time_block=4)
  out = jax.block_until_ready(out)

  assert out.shape == (B, N_OUT), out.shape
  assert bool(jnp.all(jnp.isfinite(out)))
  # log_softmax rows must exponentiate-sum to 1
  assert jnp.allclose(jnp.sum(jnp.exp(out), axis=-1), 1.0, atol=1e-4)
  # match the pure-JAX reference (bf16 matmul operands -> 2e-2 tolerance)
  ref = reference_forward(seq, lengths, params)
  assert jnp.allclose(out, ref, atol=2e-2, rtol=2e-2), (out, ref)
  print("KERNEL_OK")
</pallas_src>

<mosaic_0001>
module attributes {stable_mosaic.version = 11 : i64} {
  func.func @concat_pool_bigru_kernel(%arg0: i32, %arg1: i32, %arg2: memref<2x1xi32, #tpu.memory_space<vmem>>, %arg3: memref<4x2x16xbf16, #tpu.memory_space<vmem>>, %arg4: memref<4x2x16xbf16, #tpu.memory_space<vmem>>, %arg5: memref<2x16x96xbf16, #tpu.memory_space<vmem>>, %arg6: memref<2x32x96xbf16, #tpu.memory_space<vmem>>, %arg7: memref<2x1x96xf32, #tpu.memory_space<vmem>>, %arg8: memref<2x1x32xf32, #tpu.memory_space<vmem>>, %arg9: memref<128x3xf32, #tpu.memory_space<vmem>>, %arg10: memref<1x3xf32, #tpu.memory_space<vmem>>, %arg11: memref<2x3xf32, #tpu.memory_space<vmem>>, %arg12: memref<4x2x96xf32, #tpu.memory_space<vmem>>, %arg13: memref<4x2x96xf32, #tpu.memory_space<vmem>>, %arg14: memref<2x32xf32, #tpu.memory_space<vmem>>, %arg15: memref<2x32xf32, #tpu.memory_space<vmem>>, %arg16: memref<2x32xf32, #tpu.memory_space<vmem>>, %arg17: memref<2x32xf32, #tpu.memory_space<vmem>>, %arg18: memref<2x32xf32, #tpu.memory_space<vmem>>, %arg19: memref<2x32xf32, #tpu.memory_space<vmem>>) attributes {dimension_semantics = [#tpu.dimension_semantics<parallel>, #tpu.dimension_semantics<arbitrary>], iteration_bounds = array<i64: 1, 2>, scalar_prefetch = 0 : i64, scratch_operands = 8 : i64, tpu.core_type = #tpu.core_type<tc>, window_params = [{transform_indices = @transform_0, window_bounds = array<i64: 2, 1>}, {transform_indices = @transform_1, window_bounds = array<i64: 4, 2, 16>}, {transform_indices = @transform_2, window_bounds = array<i64: 4, 2, 16>}, {pipeline_mode = #tpu.pipeline_mode<synchronous>, transform_indices = @transform_3, window_bounds = array<i64: 2, 16, 96>}, {pipeline_mode = #tpu.pipeline_mode<synchronous>, transform_indices = @transform_4, window_bounds = array<i64: 2, 32, 96>}, {pipeline_mode = #tpu.pipeline_mode<synchronous>, transform_indices = @transform_5, window_bounds = array<i64: 2, 1, 96>}, {pipeline_mode = #tpu.pipeline_mode<synchronous>, transform_indices = @transform_6, window_bounds = array<i64: 2, 1, 32>}, {pipeline_mode = #tpu.pipeline_mode<synchronous>, transform_indices = @transform_7, window_bounds = array<i64: 128, 3>}, {pipeline_mode = #tpu.pipeline_mode<synchronous>, transform_indices = @transform_8, window_bounds = array<i64: 1, 3>}, {transform_indices = @transform_9, window_bounds = array<i64: 2, 3>}]} {
    %c0_i32 = arith.constant 0 : i32
    %0 = arith.cmpi eq, %arg1, %c0_i32 : i32
    %1 = arith.extui %0 : i1 to i32
    %c0_i32_0 = arith.constant 0 : i32
    %2 = arith.cmpi ne, %1, %c0_i32_0 : i32
    scf.if %2 {
      %cst_151 = arith.constant 0.000000e+00 : f32
      %426 = vector.broadcast %cst_151 : f32 to vector<2x32xf32>
      %cst_152 = arith.constant 0xFF800000 : f32
      %427 = vector.broadcast %cst_152 : f32 to vector<2x32xf32>
      %c0_153 = arith.constant 0 : index
      %c0_154 = arith.constant 0 : index
      %428 = vector.load %arg14[%c0_153, %c0_154] : memref<2x32xf32, #tpu.memory_space<vmem>>, vector<2x32xf32>
      tpu.vector_store %arg14[%c0_153, %c0_154], %426 {strides = array<i32>} : memref<2x32xf32, #tpu.memory_space<vmem>>, vector<2x32xf32>,
      %c0_155 = arith.constant 0 : index
      %c0_156 = arith.constant 0 : index
      %429 = vector.load %arg15[%c0_155, %c0_156] : memref<2x32xf32, #tpu.memory_space<vmem>>, vector<2x32xf32>
      tpu.vector_store %arg15[%c0_155, %c0_156], %426 {strides = array<i32>} : memref<2x32xf32, #tpu.memory_space<vmem>>, vector<2x32xf32>,
      %c0_157 = arith.constant 0 : index
      %c0_158 = arith.constant 0 : index
      %430 = vector.load %arg16[%c0_157, %c0_158] : memref<2x32xf32, #tpu.memory_space<vmem>>, vector<2x32xf32>
      tpu.vector_store %arg16[%c0_157, %c0_158], %426 {strides = array<i32>} : memref<2x32xf32, #tpu.memory_space<vmem>>, vector<2x32xf32>,
      %c0_159 = arith.constant 0 : index
      %c0_160 = arith.constant 0 : index
      %431 = vector.load %arg17[%c0_159, %c0_160] : memref<2x32xf32, #tpu.memory_space<vmem>>, vector<2x32xf32>
      tpu.vector_store %arg17[%c0_159, %c0_160], %426 {strides = array<i32>} : memref<2x32xf32, #tpu.memory_space<vmem>>, vector<2x32xf32>,
      %c0_161 = arith.constant 0 : index
      %c0_162 = arith.constant 0 : index
      %432 = vector.load %arg18[%c0_161, %c0_162] : memref<2x32xf32, #tpu.memory_space<vmem>>, vector<2x32xf32>
      tpu.vector_store %arg18[%c0_161, %c0_162], %427 {strides = array<i32>} : memref<2x32xf32, #tpu.memory_space<vmem>>, vector<2x32xf32>,
      %c0_163 = arith.constant 0 : index
      %c0_164 = arith.constant 0 : index
      %433 = vector.load %arg19[%c0_163, %c0_164] : memref<2x32xf32, #tpu.memory_space<vmem>>, vector<2x32xf32>
      tpu.vector_store %arg19[%c0_163, %c0_164], %427 {strides = array<i32>} : memref<2x32xf32, #tpu.memory_space<vmem>>, vector<2x32xf32>,
    } else {
    }
    %c0 = arith.constant 0 : index
    %c0_1 = arith.constant 0 : index
    %c0_2 = arith.constant 0 : index
    %3 = vector.load %arg5[%c0, %c0_1, %c0_2] : memref<2x16x96xbf16, #tpu.memory_space<vmem>>, vector<1x16x96xbf16>
    %4 = vector.shape_cast %3 : vector<1x16x96xbf16> to vector<16x96xbf16>
    %c1 = arith.constant 1 : index
    %c0_3 = arith.constant 0 : index
    %c0_4 = arith.constant 0 : index
    %5 = vector.load %arg5[%c1, %c0_3, %c0_4] : memref<2x16x96xbf16, #tpu.memory_space<vmem>>, vector<1x16x96xbf16>
    %6 = vector.shape_cast %5 : vector<1x16x96xbf16> to vector<16x96xbf16>
    %c0_5 = arith.constant 0 : index
    %c0_6 = arith.constant 0 : index
    %c0_7 = arith.constant 0 : index
    %7 = vector.load %arg6[%c0_5, %c0_6, %c0_7] : memref<2x32x96xbf16, #tpu.memory_space<vmem>>, vector<1x32x96xbf16>
    %8 = vector.shape_cast %7 : vector<1x32x96xbf16> to vector<32x96xbf16>
    %c1_8 = arith.constant 1 : index
    %c0_9 = arith.constant 0 : index
    %c0_10 = arith.constant 0 : index
    %9 = vector.load %arg6[%c1_8, %c0_9, %c0_10] : memref<2x32x96xbf16, #tpu.memory_space<vmem>>, vector<1x32x96xbf16>
    %10 = vector.shape_cast %9 : vector<1x32x96xbf16> to vector<32x96xbf16>
    %c0_11 = arith.constant 0 : index
    %c0_12 = arith.constant 0 : index
    %c0_13 = arith.constant 0 : index
    %11 = vector.load %arg7[%c0_11, %c0_12, %c0_13] : memref<2x1x96xf32, #tpu.memory_space<vmem>>, vector<1x1x96xf32>
    %12 = vector.shape_cast %11 : vector<1x1x96xf32> to vector<1x96xf32>
    %13 = vector.shape_cast %12 : vector<1x96xf32> to vector<1x96xf32>
    %14 = vector.broadcast %13 : vector<1x96xf32> to vector<2x96xf32>
    %c1_14 = arith.constant 1 : index
    %c0_15 = arith.constant 0 : index
    %c0_16 = arith.constant 0 : index
    %15 = vector.load %arg7[%c1_14, %c0_15, %c0_16] : memref<2x1x96xf32, #tpu.memory_space<vmem>>, vector<1x1x96xf32>
    %16 = vector.shape_cast %15 : vector<1x1x96xf32> to vector<1x96xf32>
    %17 = vector.shape_cast %16 : vector<1x96xf32> to vector<1x96xf32>
    %18 = vector.broadcast %17 : vector<1x96xf32> to vector<2x96xf32>
    %c0_17 = arith.constant 0 : index
    %c0_18 = arith.constant 0 : index
    %c0_19 = arith.constant 0 : index
    %19 = vector.load %arg8[%c0_17, %c0_18, %c0_19] : memref<2x1x32xf32, #tpu.memory_space<vmem>>, vector<1x1x32xf32>
    %20 = vector.shape_cast %19 : vector<1x1x32xf32> to vector<1x32xf32>
    %21 = vector.shape_cast %20 : vector<1x32xf32> to vector<1x32xf32>
    %22 = vector.broadcast %21 : vector<1x32xf32> to vector<2x32xf32>
    %c1_20 = arith.constant 1 : index
    %c0_21 = arith.constant 0 : index
    %c0_22 = arith.constant 0 : index
    %23 = vector.load %arg8[%c1_20, %c0_21, %c0_22] : memref<2x1x32xf32, #tpu.memory_space<vmem>>, vector<1x1x32xf32>
    %24 = vector.shape_cast %23 : vector<1x1x32xf32> to vector<1x32xf32>
    %25 = vector.shape_cast %24 : vector<1x32xf32> to vector<1x32xf32>
    %26 = vector.broadcast %25 : vector<1x32xf32> to vector<2x32xf32>
    %c0_23 = arith.constant 0 : index
    %c0_24 = arith.constant 0 : index
    %27 = vector.load %arg2[%c0_23, %c0_24] : memref<2x1xi32, #tpu.memory_space<vmem>>, vector<2x1xi32>
    %c0_25 = arith.constant 0 : index
    %c0_26 = arith.constant 0 : index
    %c0_27 = arith.constant 0 : index
    %28 = vector.load %arg3[%c0_25, %c0_26, %c0_27] : memref<4x2x16xbf16, #tpu.memory_space<vmem>>, vector<1x2x16xbf16>
    %29 = vector.shape_cast %28 : vector<1x2x16xbf16> to vector<2x16xbf16>
    %cst = arith.constant dense<0.000000e+00> : vector<2x96xf32>
    %30 = tpu.matmul %29, %4, %cst {dimension_numbers = #tpu.dot_dimension_numbers<[1], [0], [0], [1], [0, 0, 1, 1], [], []>} : vector<2x16xbf16>, vector<16x96xbf16>, vector<2x96xf32> -> vector<2x96xf32>
    %31 = arith.addf %30, %14 : vector<2x96xf32>
    %c0_28 = arith.constant 0 : index
    %c0_29 = arith.constant 0 : index
    %c0_30 = arith.constant 0 : index
    %32 = vector.load %arg12[%c0_28, %c0_29, %c0_30] : memref<4x2x96xf32, #tpu.memory_space<vmem>>, vector<1x2x96xf32>
    %33 = vector.shape_cast %32 : vector<1x2x96xf32> to vector<2x96xf32>
    %34 = vector.shape_cast %31 : vector<2x96xf32> to vector<1x2x96xf32>
    tpu.vector_store %arg12[%c0_28, %c0_29, %c0_30], %34 {strides = array<i32>} : memref<4x2x96xf32, #tpu.memory_space<vmem>>, vector<1x2x96xf32>,
    %c0_31 = arith.constant 0 : index
    %c0_32 = arith.constant 0 : index
    %c0_33 = arith.constant 0 : index
    %35 = vector.load %arg4[%c0_31, %c0_32, %c0_33] : memref<4x2x16xbf16, #tpu.memory_space<vmem>>, vector<1x2x16xbf16>
    %36 = vector.shape_cast %35 : vector<1x2x16xbf16> to vector<2x16xbf16>
    %cst_34 = arith.constant dense<0.000000e+00> : vector<2x96xf32>
    %37 = tpu.matmul %36, %6, %cst_34 {dimension_numbers = #tpu.dot_dimension_numbers<[1], [0], [0], [1], [0, 0, 1, 1], [], []>} : vector<2x16xbf16>, vector<16x96xbf16>, vector<2x96xf32> -> vector<2x96xf32>
    %38 = arith.addf %37, %18 : vector<2x96xf32>
    %c0_35 = arith.constant 0 : index
    %c0_36 = arith.constant 0 : index
    %c0_37 = arith.constant 0 : index
    %39 = vector.load %arg13[%c0_35, %c0_36, %c0_37] : memref<4x2x96xf32, #tpu.memory_space<vmem>>, vector<1x2x96xf32>
    %40 = vector.shape_cast %39 : vector<1x2x96xf32> to vector<2x96xf32>
    %41 = vector.shape_cast %38 : vector<2x96xf32> to vector<1x2x96xf32>
    tpu.vector_store %arg13[%c0_35, %c0_36, %c0_37], %41 {strides = array<i32>} : memref<4x2x96xf32, #tpu.memory_space<vmem>>, vector<1x2x96xf32>,
    %c1_38 = arith.constant 1 : index
    %c0_39 = arith.constant 0 : index
    %c0_40 = arith.constant 0 : index
    %42 = vector.load %arg3[%c1_38, %c0_39, %c0_40] : memref<4x2x16xbf16, #tpu.memory_space<vmem>>, vector<1x2x16xbf16>
    %43 = vector.shape_cast %42 : vector<1x2x16xbf16> to vector<2x16xbf16>
    %cst_41 = arith.constant dense<0.000000e+00> : vector<2x96xf32>
    %44 = tpu.matmul %43, %4, %cst_41 {dimension_numbers = #tpu.dot_dimension_numbers<[1], [0], [0], [1], [0, 0, 1, 1], [], []>} : vector<2x16xbf16>, vector<16x96xbf16>, vector<2x96xf32> -> vector<2x96xf32>
    %45 = arith.addf %44, %14 : vector<2x96xf32>
    %c1_42 = arith.constant 1 : index
    %c0_43 = arith.constant 0 : index
    %c0_44 = arith.constant 0 : index
    %46 = vector.load %arg12[%c1_42, %c0_43, %c0_44] : memref<4x2x96xf32, #tpu.memory_space<vmem>>, vector<1x2x96xf32>
    %47 = vector.shape_cast %46 : vector<1x2x96xf32> to vector<2x96xf32>
    %48 = vector.shape_cast %45 : vector<2x96xf32> to vector<1x2x96xf32>
    tpu.vector_store %arg12[%c1_42, %c0_43, %c0_44], %48 {strides = array<i32>} : memref<4x2x96xf32, #tpu.memory_space<vmem>>, vector<1x2x96xf32>,
    %c1_45 = arith.constant 1 : index
    %c0_46 = arith.constant 0 : index
    %c0_47 = arith.constant 0 : index
    %49 = vector.load %arg4[%c1_45, %c0_46, %c0_47] : memref<4x2x16xbf16, #tpu.memory_space<vmem>>, vector<1x2x16xbf16>
    %50 = vector.shape_cast %49 : vector<1x2x16xbf16> to vector<2x16xbf16>
    %cst_48 = arith.constant dense<0.000000e+00> : vector<2x96xf32>
    %51 = tpu.matmul %50, %6, %cst_48 {dimension_numbers = #tpu.dot_dimension_numbers<[1], [0], [0], [1], [0, 0, 1, 1], [], []>} : vector<2x16xbf16>, vector<16x96xbf16>, vector<2x96xf32> -> vector<2x96xf32>
    %52 = arith.addf %51, %18 : vector<2x96xf32>
    %c1_49 = arith.constant 1 : index
    %c0_50 = arith.constant 0 : index
    %c0_51 = arith.constant 0 : index
    %53 = vector.load %arg13[%c1_49, %c0_50, %c0_51] : memref<4x2x96xf32, #tpu.memory_space<vmem>>, vector<1x2x96xf32>
    %54 = vector.shape_cast %53 : vector<1x2x96xf32> to vector<2x96xf32>
    %55 = vector.shape_cast %52 : vector<2x96xf32> to vector<1x2x96xf32>
    tpu.vector_store %arg13[%c1_49, %c0_50, %c0_51], %55 {strides = array<i32>} : memref<4x2x96xf32, #tpu.memory_space<vmem>>, vector<1x2x96xf32>,
    %c2 = arith.constant 2 : index
    %c0_52 = arith.constant 0 : index
    %c0_53 = arith.constant 0 : index
    %56 = vector.load %arg3[%c2, %c0_52, %c0_53] : memref<4x2x16xbf16, #tpu.memory_space<vmem>>, vector<1x2x16xbf16>
    %57 = vector.shape_cast %56 : vector<1x2x16xbf16> to vector<2x16xbf16>
    %cst_54 = arith.constant dense<0.000000e+00> : vector<2x96xf32>
    %58 = tpu.matmul %57, %4, %cst_54 {dimension_numbers = #tpu.dot_dimension_numbers<[1], [0], [0], [1], [0, 0, 1, 1], [], []>} : vector<2x16xbf16>, vector<16x96xbf16>, vector<2x96xf32> -> vector<2x96xf32>
    %59 = arith.addf %58, %14 : vector<2x96xf32>
    %c2_55 = arith.constant 2 : index
    %c0_56 = arith.constant 0 : index
    %c0_57 = arith.constant 0 : index
    %60 = vector.load %arg12[%c2_55, %c0_56, %c0_57] : memref<4x2x96xf32, #tpu.memory_space<vmem>>, vector<1x2x96xf32>
    %61 = vector.shape_cast %60 : vector<1x2x96xf32> to vector<2x96xf32>
    %62 = vector.shape_cast %59 : vector<2x96xf32> to vector<1x2x96xf32>
    tpu.vector_store %arg12[%c2_55, %c0_56, %c0_57], %62 {strides = array<i32>} : memref<4x2x96xf32, #tpu.memory_space<vmem>>, vector<1x2x96xf32>,
    %c2_58 = arith.constant 2 : index
    %c0_59 = arith.constant 0 : index
    %c0_60 = arith.constant 0 : index
    %63 = vector.load %arg4[%c2_58, %c0_59, %c0_60] : memref<4x2x16xbf16, #tpu.memory_space<vmem>>, vector<1x2x16xbf16>
    %64 = vector.shape_cast %63 : vector<1x2x16xbf16> to vector<2x16xbf16>
    %cst_61 = arith.constant dense<0.000000e+00> : vector<2x96xf32>
    %65 = tpu.matmul %64, %6, %cst_61 {dimension_numbers = #tpu.dot_dimension_numbers<[1], [0], [0], [1], [0, 0, 1, 1], [], []>} : vector<2x16xbf16>, vector<16x96xbf16>, vector<2x96xf32> -> vector<2x96xf32>
    %66 = arith.addf %65, %18 : vector<2x96xf32>
    %c2_62 = arith.constant 2 : index
    %c0_63 = arith.constant 0 : index
    %c0_64 = arith.constant 0 : index
    %67 = vector.load %arg13[%c2_62, %c0_63, %c0_64] : memref<4x2x96xf32, #tpu.memory_space<vmem>>, vector<1x2x96xf32>
    %68 = vector.shape_cast %67 : vector<1x2x96xf32> to vector<2x96xf32>
    %69 = vector.shape_cast %66 : vector<2x96xf32> to vector<1x2x96xf32>
    tpu.vector_store %arg13[%c2_62, %c0_63, %c0_64], %69 {strides = array<i32>} : memref<4x2x96xf32, #tpu.memory_space<vmem>>, vector<1x2x96xf32>,
    %c3 = arith.constant 3 : index
    %c0_65 = arith.constant 0 : index
    %c0_66 = arith.constant 0 : index
    %70 = vector.load %arg3[%c3, %c0_65, %c0_66] : memref<4x2x16xbf16, #tpu.memory_space<vmem>>, vector<1x2x16xbf16>
    %71 = vector.shape_cast %70 : vector<1x2x16xbf16> to vector<2x16xbf16>
    %cst_67 = arith.constant dense<0.000000e+00> : vector<2x96xf32>
    %72 = tpu.matmul %71, %4, %cst_67 {dimension_numbers = #tpu.dot_dimension_numbers<[1], [0], [0], [1], [0, 0, 1, 1], [], []>} : vector<2x16xbf16>, vector<16x96xbf16>, vector<2x96xf32> -> vector<2x96xf32>
    %73 = arith.addf %72, %14 : vector<2x96xf32>
    %c3_68 = arith.constant 3 : index
    %c0_69 = arith.constant 0 : index
    %c0_70 = arith.constant 0 : index
    %74 = vector.load %arg12[%c3_68, %c0_69, %c0_70] : memref<4x2x96xf32, #tpu.memory_space<vmem>>, vector<1x2x96xf32>
    %75 = vector.shape_cast %74 : vector<1x2x96xf32> to vector<2x96xf32>
    %76 = vector.shape_cast %73 : vector<2x96xf32> to vector<1x2x96xf32>
    tpu.vector_store %arg12[%c3_68, %c0_69, %c0_70], %76 {strides = array<i32>} : memref<4x2x96xf32, #tpu.memory_space<vmem>>, vector<1x2x96xf32>,
    %c3_71 = arith.constant 3 : index
    %c0_72 = arith.constant 0 : index
    %c0_73 = arith.constant 0 : index
    %77 = vector.load %arg4[%c3_71, %c0_72, %c0_73] : memref<4x2x16xbf16, #tpu.memory_space<vmem>>, vector<1x2x16xbf16>
    %78 = vector.shape_cast %77 : vector<1x2x16xbf16> to vector<2x16xbf16>
    %cst_74 = arith.constant dense<0.000000e+00> : vector<2x96xf32>
    %79 = tpu.matmul %78, %6, %cst_74 {dimension_numbers = #tpu.dot_dimension_numbers<[1], [0], [0], [1], [0, 0, 1, 1], [], []>} : vector<2x16xbf16>, vector<16x96xbf16>, vector<2x96xf32> -> vector<2x96xf32>
    %80 = arith.addf %79, %18 : vector<2x96xf32>
    %c3_75 = arith.constant 3 : index
    %c0_76 = arith.constant 0 : index
    %c0_77 = arith.constant 0 : index
    %81 = vector.load %arg13[%c3_75, %c0_76, %c0_77] : memref<4x2x96xf32, #tpu.memory_space<vmem>>, vector<1x2x96xf32>
    %82 = vector.shape_cast %81 : vector<1x2x96xf32> to vector<2x96xf32>
    %83 = vector.shape_cast %80 : vector<2x96xf32> to vector<1x2x96xf32>
    tpu.vector_store %arg13[%c3_75, %c0_76, %c0_77], %83 {strides = array<i32>} : memref<4x2x96xf32, #tpu.memory_space<vmem>>, vector<1x2x96xf32>,
    %c4_i32 = arith.constant 4 : i32
    %84 = arith.muli %arg1, %c4_i32 : i32
    %85 = tpu.iota {dimensions = array<i32: 0>} : vector<4x2x1xi32>
    %86 = vector.broadcast %84 : i32 to vector<4x2x1xi32>
    %87 = arith.addi %85, %86 : vector<4x2x1xi32>
    %88 = vector.shape_cast %27 : vector<2x1xi32> to vector<1x2x1xi32>
    %89 = vector.broadcast %88 : vector<1x2x1xi32> to vector<4x2x1xi32>
    %90 = arith.cmpi slt, %87, %89 : vector<4x2x1xi32>
    %91 = arith.extui %90 : vector<4x2x1xi1> to vector<4x2x1xi32>
    %92 = arith.sitofp %91 : vector<4x2x1xi32> to vector<4x2x1xf32>
    %c7_i32 = arith.constant 7 : i32
    %93 = vector.broadcast %c7_i32 : i32 to vector<4x2x1xi32>
    %94 = arith.subi %93, %87 : vector<4x2x1xi32>
    %95 = vector.broadcast %88 : vector<1x2x1xi32> to vector<4x2x1xi32>
    %96 = arith.cmpi slt, %94, %95 : vector<4x2x1xi32>
    %97 = arith.extui %96 : vector<4x2x1xi1> to vector<4x2x1xi32>
    %98 = arith.sitofp %97 : vector<4x2x1xi32> to vector<4x2x1xf32>
    %c0_78 = arith.constant 0 : index
    %c0_79 = arith.constant 0 : index
    %99 = vector.load %arg14[%c0_78, %c0_79] : memref<2x32xf32, #tpu.memory_space<vmem>>, vector<2x32xf32>
    %c0_80 = arith.constant 0 : index
    %c0_81 = arith.constant 0 : index
    %100 = vector.load %arg15[%c0_80, %c0_81] : memref<2x32xf32, #tpu.memory_space<vmem>>, vector<2x32xf32>
    %c0_82 = arith.constant 0 : index
    %c0_83 = arith.constant 0 : index
    %101 = vector.load %arg16[%c0_82, %c0_83] : memref<2x32xf32, #tpu.memory_space<vmem>>, vector<2x32xf32>
    %c0_84 = arith.constant 0 : index
    %c0_85 = arith.constant 0 : index
    %102 = vector.load %arg17[%c0_84, %c0_85] : memref<2x32xf32, #tpu.memory_space<vmem>>, vector<2x32xf32>
    %c0_86 = arith.constant 0 : index
    %c0_87 = arith.constant 0 : index
    %103 = vector.load %arg18[%c0_86, %c0_87] : memref<2x32xf32, #tpu.memory_space<vmem>>, vector<2x32xf32>
    %c0_88 = arith.constant 0 : index
    %c0_89 = arith.constant 0 : index
    %104 = vector.load %arg19[%c0_88, %c0_89] : memref<2x32xf32, #tpu.memory_space<vmem>>, vector<2x32xf32>
    %105 = vector.extract_strided_slice %92 {offsets = [0, 0, 0], sizes = [1, 2, 1], strides = [1, 1, 1]} : vector<4x2x1xf32> to vector<1x2x1xf32>
    %106 = vector.shape_cast %105 : vector<1x2x1xf32> to vector<2x1xf32>
    %107 = vector.extract_strided_slice %98 {offsets = [0, 0, 0], sizes = [1, 2, 1], strides = [1, 1, 1]} : vector<4x2x1xf32> to vector<1x2x1xf32>
    %108 = vector.shape_cast %107 : vector<1x2x1xf32> to vector<2x1xf32>
    %c0_90 = arith.constant 0 : index
    %c0_91 = arith.constant 0 : index
    %c0_92 = arith.constant 0 : index
    %109 = vector.load %arg12[%c0_90, %c0_91, %c0_92] : memref<4x2x96xf32, #tpu.memory_space<vmem>>, vector<1x2x96xf32>
    %110 = vector.shape_cast %109 : vector<1x2x96xf32> to vector<2x96xf32>
    %111 = arith.truncf %99 : vector<2x32xf32> to vector<2x32xbf16>
    %cst_93 = arith.constant dense<0.000000e+00> : vector<2x96xf32>
    %112 = tpu.matmul %111, %8, %cst_93 {dimension_numbers = #tpu.dot_dimension_numbers<[1], [0], [0], [1], [0, 0, 1, 1], [], []>} : vector<2x32xbf16>, vector<32x96xbf16>, vector<2x96xf32> -> vector<2x96xf32>
    %113 = vector.extract_strided_slice %110 {offsets = [0, 0], sizes = [2, 32], strides = [1, 1]} : vector<2x96xf32> to vector<2x32xf32>
    %114 = vector.extract_strided_slice %112 {offsets = [0, 0], sizes = [2, 32], strides = [1, 1]} : vector<2x96xf32> to vector<2x32xf32>
    %115 = arith.addf %113, %114 : vector<2x32xf32>
    %116 = arith.negf %115 : vector<2x32xf32>
    %117 = math.exp %116 : vector<2x32xf32>
    %cst_94 = arith.constant 1.000000e+00 : f32
    %118 = vector.broadcast %cst_94 : f32 to vector<2x32xf32>
    %119 = arith.addf %118, %117 : vector<2x32xf32>
    %120 = arith.divf %118, %119 : vector<2x32xf32>
    %121 = vector.extract_strided_slice %110 {offsets = [0, 32], sizes = [2, 32], strides = [1, 1]} : vector<2x96xf32> to vector<2x32xf32>
    %122 = vector.extract_strided_slice %112 {offsets = [0, 32], sizes = [2, 32], strides = [1, 1]} : vector<2x96xf32> to vector<2x32xf32>
    %123 = arith.addf %121, %122 : vector<2x32xf32>
    %124 = arith.negf %123 : vector<2x32xf32>
    %125 = math.exp %124 : vector<2x32xf32>
    %cst_95 = arith.constant 1.000000e+00 : f32
    %126 = vector.broadcast %cst_95 : f32 to vector<2x32xf32>
    %127 = arith.addf %126, %125 : vector<2x32xf32>
    %128 = arith.divf %126, %127 : vector<2x32xf32>
    %129 = vector.extract_strided_slice %110 {offsets = [0, 64], sizes = [2, 32], strides = [1, 1]} : vector<2x96xf32> to vector<2x32xf32>
    %130 = vector.extract_strided_slice %112 {offsets = [0, 64], sizes = [2, 32], strides = [1, 1]} : vector<2x96xf32> to vector<2x32xf32>
    %131 = arith.addf %130, %22 : vector<2x32xf32>
    %132 = arith.mulf %120, %131 : vector<2x32xf32>
    %133 = arith.addf %129, %132 : vector<2x32xf32>
    %134 = math.tanh %133 : vector<2x32xf32>
    %135 = arith.subf %99, %134 : vector<2x32xf32>
    %136 = arith.mulf %128, %135 : vector<2x32xf32>
    %137 = arith.addf %134, %136 : vector<2x32xf32>
    %138 = arith.subf %137, %99 : vector<2x32xf32>
    %139 = vector.broadcast %106 : vector<2x1xf32> to vector<2x32xf32>
    %140 = arith.mulf %139, %138 : vector<2x32xf32>
    %141 = arith.addf %99, %140 : vector<2x32xf32>
    %142 = vector.broadcast %106 : vector<2x1xf32> to vector<2x32xf32>
    %143 = arith.mulf %142, %141 : vector<2x32xf32>
    %c3_96 = arith.constant 3 : index
    %c0_97 = arith.constant 0 : index
    %c0_98 = arith.constant 0 : index
    %144 = vector.load %arg13[%c3_96, %c0_97, %c0_98] : memref<4x2x96xf32, #tpu.memory_space<vmem>>, vector<1x2x96xf32>
    %145 = vector.shape_cast %144 : vector<1x2x96xf32> to vector<2x96xf32>
    %146 = arith.truncf %100 : vector<2x32xf32> to vector<2x32xbf16>
    %cst_99 = arith.constant dense<0.000000e+00> : vector<2x96xf32>
    %147 = tpu.matmul %146, %10, %cst_99 {dimension_numbers = #tpu.dot_dimension_numbers<[1], [0], [0], [1], [0, 0, 1, 1], [], []>} : vector<2x32xbf16>, vector<32x96xbf16>, vector<2x96xf32> -> vector<2x96xf32>
    %148 = vector.extract_strided_slice %145 {offsets = [0, 0], sizes = [2, 32], strides = [1, 1]} : vector<2x96xf32> to vector<2x32xf32>
    %149 = vector.extract_strided_slice %147 {offsets = [0, 0], sizes = [2, 32], strides = [1, 1]} : vector<2x96xf32> to vector<2x32xf32>
    %150 = arith.addf %148, %149 : vector<2x32xf32>
    %151 = arith.negf %150 : vector<2x32xf32>
    %152 = math.exp %151 : vector<2x32xf32>
    %cst_100 = arith.constant 1.000000e+00 : f32
    %153 = vector.broadcast %cst_100 : f32 to vector<2x32xf32>
    %154 = arith.addf %153, %152 : vector<2x32xf32>
    %155 = arith.divf %153, %154 : vector<2x32xf32>
    %156 = vector.extract_strided_slice %145 {offsets = [0, 32], sizes = [2, 32], strides = [1, 1]} : vector<2x96xf32> to vector<2x32xf32>
    %157 = vector.extract_strided_slice %147 {offsets = [0, 32], sizes = [2, 32], strides = [1, 1]} : vector<2x96xf32> to vector<2x32xf32>
    %158 = arith.addf %156, %157 : vector<2x32xf32>
    %159 = arith.negf %158 : vector<2x32xf32>
    %160 = math.exp %159 : vector<2x32xf32>
    %cst_101 = arith.constant 1.000000e+00 : f32
    %161 = vector.broadcast %cst_101 : f32 to vector<2x32xf32>
    %162 = arith.addf %161, %160 : vector<2x32xf32>
    %163 = arith.divf %161, %162 : vector<2x32xf32>
    %164 = vector.extract_strided_slice %145 {offsets = [0, 64], sizes = [2, 32], strides = [1, 1]} : vector<2x96xf32> to vector<2x32xf32>
    %165 = vector.extract_strided_slice %147 {offsets = [0, 64], sizes = [2, 32], strides = [1, 1]} : vector<2x96xf32> to vector<2x32xf32>
    %166 = arith.addf %165, %26 : vector<2x32xf32>
    %167 = arith.mulf %155, %166 : vector<2x32xf32>
    %168 = arith.addf %164, %167 : vector<2x32xf32>
    %169 = math.tanh %168 : vector<2x32xf32>
    %170 = arith.subf %100, %169 : vector<2x32xf32>
    %171 = arith.mulf %163, %170 : vector<2x32xf32>
    %172 = arith.addf %169, %171 : vector<2x32xf32>
    %173 = arith.subf %172, %100 : vector<2x32xf32>
    %174 = vector.broadcast %108 : vector<2x1xf32> to vector<2x32xf32>
    %175 = arith.mulf %174, %173 : vector<2x32xf32>
    %176 = arith.addf %100, %175 : vector<2x32xf32>
    %177 = vector.broadcast %108 : vector<2x1xf32> to vector<2x32xf32>
    %178 = arith.mulf %177, %176 : vector<2x32xf32>
    %179 = arith.addf %101, %143 : vector<2x32xf32>
    %180 = arith.addf %102, %178 : vector<2x32xf32>
    %181 = arith.maximumf %103, %143 : vector<2x32xf32>
    %182 = arith.maximumf %104, %178 : vector<2x32xf32>
    %183 = vector.extract_strided_slice %92 {offsets = [1, 0, 0], sizes = [1, 2, 1], strides = [1, 1, 1]} : vector<4x2x1xf32> to vector<1x2x1xf32>
    %184 = vector.shape_cast %183 : vector<1x2x1xf32> to vector<2x1xf32>
    %185 = vector.extract_strided_slice %98 {offsets = [1, 0, 0], sizes = [1, 2, 1], strides = [1, 1, 1]} : vector<4x2x1xf32> to vector<1x2x1xf32>
    %186 = vector.shape_cast %185 : vector<1x2x1xf32> to vector<2x1xf32>
    %c1_102 = arith.constant 1 : index
    %c0_103 = arith.constant 0 : index
    %c0_104 = arith.constant 0 : index
    %187 = vector.load %arg12[%c1_102, %c0_103, %c0_104] : memref<4x2x96xf32, #tpu.memory_space<vmem>>, vector<1x2x96xf32>
    %188 = vector.shape_cast %187 : vector<1x2x96xf32> to vector<2x96xf32>
    %189 = arith.truncf %141 : vector<2x32xf32> to vector<2x32xbf16>
    %cst_105 = arith.constant dense<0.000000e+00> : vector<2x96xf32>
    %190 = tpu.matmul %189, %8, %cst_105 {dimension_numbers = #tpu.dot_dimension_numbers<[1], [0], [0], [1], [0, 0, 1, 1], [], []>} : vector<2x32xbf16>, vector<32x96xbf16>, vector<2x96xf32> -> vector<2x96xf32>
    %191 = vector.extract_strided_slice %188 {offsets = [0, 0], sizes = [2, 32], strides = [1, 1]} : vector<2x96xf32> to vector<2x32xf32>
    %192 = vector.extract_strided_slice %190 {offsets = [0, 0], sizes = [2, 32], strides = [1, 1]} : vector<2x96xf32> to vector<2x32xf32>
    %193 = arith.addf %191, %192 : vector<2x32xf32>
    %194 = arith.negf %193 : vector<2x32xf32>
    %195 = math.exp %194 : vector<2x32xf32>
    %cst_106 = arith.constant 1.000000e+00 : f32
    %196 = vector.broadcast %cst_106 : f32 to vector<2x32xf32>
    %197 = arith.addf %196, %195 : vector<2x32xf32>
    %198 = arith.divf %196, %197 : vector<2x32xf32>
    %199 = vector.extract_strided_slice %188 {offsets = [0, 32], sizes = [2, 32], strides = [1, 1]} : vector<2x96xf32> to vector<2x32xf32>
    %200 = vector.extract_strided_slice %190 {offsets = [0, 32], sizes = [2, 32], strides = [1, 1]} : vector<2x96xf32> to vector<2x32xf32>
    %201 = arith.addf %199, %200 : vector<2x32xf32>
    %202 = arith.negf %201 : vector<2x32xf32>
    %203 = math.exp %202 : vector<2x32xf32>
    %cst_107 = arith.constant 1.000000e+00 : f32
    %204 = vector.broadcast %cst_107 : f32 to vector<2x32xf32>
    %205 = arith.addf %204, %203 : vector<2x32xf32>
    %206 = arith.divf %204, %205 : vector<2x32xf32>
    %207 = vector.extract_strided_slice %188 {offsets = [0, 64], sizes = [2, 32], strides = [1, 1]} : vector<2x96xf32> to vector<2x32xf32>
    %208 = vector.extract_strided_slice %190 {offsets = [0, 64], sizes = [2, 32], strides = [1, 1]} : vector<2x96xf32> to vector<2x32xf32>
    %209 = arith.addf %208, %22 : vector<2x32xf32>
    %210 = arith.mulf %198, %209 : vector<2x32xf32>
    %211 = arith.addf %207, %210 : vector<2x32xf32>
    %212 = math.tanh %211 : vector<2x32xf32>
    %213 = arith.subf %141, %212 : vector<2x32xf32>
    %214 = arith.mulf %206, %213 : vector<2x32xf32>
    %215 = arith.addf %212, %214 : vector<2x32xf32>
    %216 = arith.subf %215, %141 : vector<2x32xf32>
    %217 = vector.broadcast %184 : vector<2x1xf32> to vector<2x32xf32>
    %218 = arith.mulf %217, %216 : vector<2x32xf32>
    %219 = arith.addf %141, %218 : vector<2x32xf32>
    %220 = vector.broadcast %184 : vector<2x1xf32> to vector<2x32xf32>
    %221 = arith.mulf %220, %219 : vector<2x32xf32>
    %c2_108 = arith.constant 2 : index
    %c0_109 = arith.constant 0 : index
    %c0_110 = arith.constant 0 : index
    %222 = vector.load %arg13[%c2_108, %c0_109, %c0_110] : memref<4x2x96xf32, #tpu.memory_space<vmem>>, vector<1x2x96xf32>
    %223 = vector.shape_cast %222 : vector<1x2x96xf32> to vector<2x96xf32>
    %224 = arith.truncf %176 : vector<2x32xf32> to vector<2x32xbf16>
    %cst_111 = arith.constant dense<0.000000e+00> : vector<2x96xf32>
    %225 = tpu.matmul %224, %10, %cst_111 {dimension_numbers = #tpu.dot_dimension_numbers<[1], [0], [0], [1], [0, 0, 1, 1], [], []>} : vector<2x32xbf16>, vector<32x96xbf16>, vector<2x96xf32> -> vector<2x96xf32>
    %226 = vector.extract_strided_slice %223 {offsets = [0, 0], sizes = [2, 32], strides = [1, 1]} : vector<2x96xf32> to vector<2x32xf32>
    %227 = vector.extract_strided_slice %225 {offsets = [0, 0], sizes = [2, 32], strides = [1, 1]} : vector<2x96xf32> to vector<2x32xf32>
    %228 = arith.addf %226, %227 : vector<2x32xf32>
    %229 = arith.negf %228 : vector<2x32xf32>
    %230 = math.exp %229 : vector<2x32xf32>
    %cst_112 = arith.constant 1.000000e+00 : f32
    %231 = vector.broadcast %cst_112 : f32 to vector<2x32xf32>
    %232 = arith.addf %231, %230 : vector<2x32xf32>
    %233 = arith.divf %231, %232 : vector<2x32xf32>
    %234 = vector.extract_strided_slice %223 {offsets = [0, 32], sizes = [2, 32], strides = [1, 1]} : vector<2x96xf32> to vector<2x32xf32>
    %235 = vector.extract_strided_slice %225 {offsets = [0, 32], sizes = [2, 32], strides = [1, 1]} : vector<2x96xf32> to vector<2x32xf32>
    %236 = arith.addf %234, %235 : vector<2x32xf32>
    %237 = arith.negf %236 : vector<2x32xf32>
    %238 = math.exp %237 : vector<2x32xf32>
    %cst_113 = arith.constant 1.000000e+00 : f32
    %239 = vector.broadcast %cst_113 : f32 to vector<2x32xf32>
    %240 = arith.addf %239, %238 : vector<2x32xf32>
    %241 = arith.divf %239, %240 : vector<2x32xf32>
    %242 = vector.extract_strided_slice %223 {offsets = [0, 64], sizes = [2, 32], strides = [1, 1]} : vector<2x96xf32> to vector<2x32xf32>
    %243 = vector.extract_strided_slice %225 {offsets = [0, 64], sizes = [2, 32], strides = [1, 1]} : vector<2x96xf32> to vector<2x32xf32>
    %244 = arith.addf %243, %26 : vector<2x32xf32>
    %245 = arith.mulf %233, %244 : vector<2x32xf32>
    %246 = arith.addf %242, %245 : vector<2x32xf32>
    %247 = math.tanh %246 : vector<2x32xf32>
    %248 = arith.subf %176, %247 : vector<2x32xf32>
    %249 = arith.mulf %241, %248 : vector<2x32xf32>
    %250 = arith.addf %247, %249 : vector<2x32xf32>
    %251 = arith.subf %250, %176 : vector<2x32xf32>
    %252 = vector.broadcast %186 : vector<2x1xf32> to vector<2x32xf32>
    %253 = arith.mulf %252, %251 : vector<2x32xf32>
    %254 = arith.addf %176, %253 : vector<2x32xf32>
    %255 = vector.broadcast %186 : vector<2x1xf32> to vector<2x32xf32>
    %256 = arith.mulf %255, %254 : vector<2x32xf32>
    %257 = arith.addf %179, %221 : vector<2x32xf32>
    %258 = arith.addf %180, %256 : vector<2x32xf32>
    %259 = arith.maximumf %181, %221 : vector<2x32xf32>
    %260 = arith.maximumf %182, %256 : vector<2x32xf32>
    %261 = vector.extract_strided_slice %92 {offsets = [2, 0, 0], sizes = [1, 2, 1], strides = [1, 1, 1]} : vector<4x2x1xf32> to vector<1x2x1xf32>
    %262 = vector.shape_cast %261 : vector<1x2x1xf32> to vector<2x1xf32>
    %263 = vector.extract_strided_slice %98 {offsets = [2, 0, 0], sizes = [1, 2, 1], strides = [1, 1, 1]} : vector<4x2x1xf32> to vector<1x2x1xf32>
    %264 = vector.shape_cast %263 : vector<1x2x1xf32> to vector<2x1xf32>
    %c2_114 = arith.constant 2 : index
    %c0_115 = arith.constant 0 : index
    %c0_116 = arith.constant 0 : index
    %265 = vector.load %arg12[%c2_114, %c0_115, %c0_116] : memref<4x2x96xf32, #tpu.memory_space<vmem>>, vector<1x2x96xf32>
    %266 = vector.shape_cast %265 : vector<1x2x96xf32> to vector<2x96xf32>
    %267 = arith.truncf %219 : vector<2x32xf32> to vector<2x32xbf16>
    %cst_117 = arith.constant dense<0.000000e+00> : vector<2x96xf32>
    %268 = tpu.matmul %267, %8, %cst_117 {dimension_numbers = #tpu.dot_dimension_numbers<[1], [0], [0], [1], [0, 0, 1, 1], [], []>} : vector<2x32xbf16>, vector<32x96xbf16>, vector<2x96xf32> -> vector<2x96xf32>
    %269 = vector.extract_strided_slice %266 {offsets = [0, 0], sizes = [2, 32], strides = [1, 1]} : vector<2x96xf32> to vector<2x32xf32>
    %270 = vector.extract_strided_slice %268 {offsets = [0, 0], sizes = [2, 32], strides = [1, 1]} : vector<2x96xf32> to vector<2x32xf32>
    %271 = arith.addf %269, %270 : vector<2x32xf32>
    %272 = arith.negf %271 : vector<2x32xf32>
    %273 = math.exp %272 : vector<2x32xf32>
    %cst_118 = arith.constant 1.000000e+00 : f32
    %274 = vector.broadcast %cst_118 : f32 to vector<2x32xf32>
    %275 = arith.addf %274, %273 : vector<2x32xf32>
    %276 = arith.divf %274, %275 : vector<2x32xf32>
    %277 = vector.extract_strided_slice %266 {offsets = [0, 32], sizes = [2, 32], strides = [1, 1]} : vector<2x96xf32> to vector<2x32xf32>
    %278 = vector.extract_strided_slice %268 {offsets = [0, 32], sizes = [2, 32], strides = [1, 1]} : vector<2x96xf32> to vector<2x32xf32>
    %279 = arith.addf %277, %278 : vector<2x32xf32>
    %280 = arith.negf %279 : vector<2x32xf32>
    %281 = math.exp %280 : vector<2x32xf32>
    %cst_119 = arith.constant 1.000000e+00 : f32
    %282 = vector.broadcast %cst_119 : f32 to vector<2x32xf32>
    %283 = arith.addf %282, %281 : vector<2x32xf32>
    %284 = arith.divf %282, %283 : vector<2x32xf32>
    %285 = vector.extract_strided_slice %266 {offsets = [0, 64], sizes = [2, 32], strides = [1, 1]} : vector<2x96xf32> to vector<2x32xf32>
    %286 = vector.extract_strided_slice %268 {offsets = [0, 64], sizes = [2, 32], strides = [1, 1]} : vector<2x96xf32> to vector<2x32xf32>
    %287 = arith.addf %286, %22 : vector<2x32xf32>
    %288 = arith.mulf %276, %287 : vector<2x32xf32>
    %289 = arith.addf %285, %288 : vector<2x32xf32>
    %290 = math.tanh %289 : vector<2x32xf32>
    %291 = arith.subf %219, %290 : vector<2x32xf32>
    %292 = arith.mulf %284, %291 : vector<2x32xf32>
    %293 = arith.addf %290, %292 : vector<2x32xf32>
    %294 = arith.subf %293, %219 : vector<2x32xf32>
    %295 = vector.broadcast %262 : vector<2x1xf32> to vector<2x32xf32>
    %296 = arith.mulf %295, %294 : vector<2x32xf32>
    %297 = arith.addf %219, %296 : vector<2x32xf32>
    %298 = vector.broadcast %262 : vector<2x1xf32> to vector<2x32xf32>
    %299 = arith.mulf %298, %297 : vector<2x32xf32>
    %c1_120 = arith.constant 1 : index
    %c0_121 = arith.constant 0 : index
    %c0_122 = arith.constant 0 : index
    %300 = vector.load %arg13[%c1_120, %c0_121, %c0_122] : memref<4x2x96xf32, #tpu.memory_space<vmem>>, vector<1x2x96xf32>
    %301 = vector.shape_cast %300 : vector<1x2x96xf32> to vector<2x96xf32>
    %302 = arith.truncf %254 : vector<2x32xf32> to vector<2x32xbf16>
    %cst_123 = arith.constant dense<0.000000e+00> : vector<2x96xf32>
    %303 = tpu.matmul %302, %10, %cst_123 {dimension_numbers = #tpu.dot_dimension_numbers<[1], [0], [0], [1], [0, 0, 1, 1], [], []>} : vector<2x32xbf16>, vector<32x96xbf16>, vector<2x96xf32> -> vector<2x96xf32>
    %304 = vector.extract_strided_slice %301 {offsets = [0, 0], sizes = [2, 32], strides = [1, 1]} : vector<2x96xf32> to vector<2x32xf32>
    %305 = vector.extract_strided_slice %303 {offsets = [0, 0], sizes = [2, 32], strides = [1, 1]} : vector<2x96xf32> to vector<2x32xf32>
    %306 = arith.addf %304, %305 : vector<2x32xf32>
    %307 = arith.negf %306 : vector<2x32xf32>
    %308 = math.exp %307 : vector<2x32xf32>
    %cst_124 = arith.constant 1.000000e+00 : f32
    %309 = vector.broadcast %cst_124 : f32 to vector<2x32xf32>
    %310 = arith.addf %309, %308 : vector<2x32xf32>
    %311 = arith.divf %309, %310 : vector<2x32xf32>
    %312 = vector.extract_strided_slice %301 {offsets = [0, 32], sizes = [2, 32], strides = [1, 1]} : vector<2x96xf32> to vector<2x32xf32>
    %313 = vector.extract_strided_slice %303 {offsets = [0, 32], sizes = [2, 32], strides = [1, 1]} : vector<2x96xf32> to vector<2x32xf32>
    %314 = arith.addf %312, %313 : vector<2x32xf32>
    %315 = arith.negf %314 : vector<2x32xf32>
    %316 = math.exp %315 : vector<2x32xf32>
    %cst_125 = arith.constant 1.000000e+00 : f32
    %317 = vector.broadcast %cst_125 : f32 to vector<2x32xf32>
    %318 = arith.addf %317, %316 : vector<2x32xf32>
    %319 = arith.divf %317, %318 : vector<2x32xf32>
    %320 = vector.extract_strided_slice %301 {offsets = [0, 64], sizes = [2, 32], strides = [1, 1]} : vector<2x96xf32> to vector<2x32xf32>
    %321 = vector.extract_strided_slice %303 {offsets = [0, 64], sizes = [2, 32], strides = [1, 1]} : vector<2x96xf32> to vector<2x32xf32>
    %322 = arith.addf %321, %26 : vector<2x32xf32>
    %323 = arith.mulf %311, %322 : vector<2x32xf32>
    %324 = arith.addf %320, %323 : vector<2x32xf32>
    %325 = math.tanh %324 : vector<2x32xf32>
    %326 = arith.subf %254, %325 : vector<2x32xf32>
    %327 = arith.mulf %319, %326 : vector<2x32xf32>
    %328 = arith.addf %325, %327 : vector<2x32xf32>
    %329 = arith.subf %328, %254 : vector<2x32xf32>
    %330 = vector.broadcast %264 : vector<2x1xf32> to vector<2x32xf32>
    %331 = arith.mulf %330, %329 : vector<2x32xf32>
    %332 = arith.addf %254, %331 : vector<2x32xf32>
    %333 = vector.broadcast %264 : vector<2x1xf32> to vector<2x32xf32>
    %334 = arith.mulf %333, %332 : vector<2x32xf32>
    %335 = arith.addf %257, %299 : vector<2x32xf32>
    %336 = arith.addf %258, %334 : vector<2x32xf32>
    %337 = arith.maximumf %259, %299 : vector<2x32xf32>
    %338 = arith.maximumf %260, %334 : vector<2x32xf32>
    %339 = vector.extract_strided_slice %92 {offsets = [3, 0, 0], sizes = [1, 2, 1], strides = [1, 1, 1]} : vector<4x2x1xf32> to vector<1x2x1xf32>
    %340 = vector.shape_cast %339 : vector<1x2x1xf32> to vector<2x1xf32>
    %341 = vector.extract_strided_slice %98 {offsets = [3, 0, 0], sizes = [1, 2, 1], strides = [1, 1, 1]} : vector<4x2x1xf32> to vector<1x2x1xf32>
    %342 = vector.shape_cast %341 : vector<1x2x1xf32> to vector<2x1xf32>
    %c3_126 = arith.constant 3 : index
    %c0_127 = arith.constant 0 : index
    %c0_128 = arith.constant 0 : index
    %343 = vector.load %arg12[%c3_126, %c0_127, %c0_128] : memref<4x2x96xf32, #tpu.memory_space<vmem>>, vector<1x2x96xf32>
    %344 = vector.shape_cast %343 : vector<1x2x96xf32> to vector<2x96xf32>
    %345 = arith.truncf %297 : vector<2x32xf32> to vector<2x32xbf16>
    %cst_129 = arith.constant dense<0.000000e+00> : vector<2x96xf32>
    %346 = tpu.matmul %345, %8, %cst_129 {dimension_numbers = #tpu.dot_dimension_numbers<[1], [0], [0], [1], [0, 0, 1, 1], [], []>} : vector<2x32xbf16>, vector<32x96xbf16>, vector<2x96xf32> -> vector<2x96xf32>
    %347 = vector.extract_strided_slice %344 {offsets = [0, 0], sizes = [2, 32], strides = [1, 1]} : vector<2x96xf32> to vector<2x32xf32>
    %348 = vector.extract_strided_slice %346 {offsets = [0, 0], sizes = [2, 32], strides = [1, 1]} : vector<2x96xf32> to vector<2x32xf32>
    %349 = arith.addf %347, %348 : vector<2x32xf32>
    %350 = arith.negf %349 : vector<2x32xf32>
    %351 = math.exp %350 : vector<2x32xf32>
    %cst_130 = arith.constant 1.000000e+00 : f32
    %352 = vector.broadcast %cst_130 : f32 to vector<2x32xf32>
    %353 = arith.addf %352, %351 : vector<2x32xf32>
    %354 = arith.divf %352, %353 : vector<2x32xf32>
    %355 = vector.extract_strided_slice %344 {offsets = [0, 32], sizes = [2, 32], strides = [1, 1]} : vector<2x96xf32> to vector<2x32xf32>
    %356 = vector.extract_strided_slice %346 {offsets = [0, 32], sizes = [2, 32], strides = [1, 1]} : vector<2x96xf32> to vector<2x32xf32>
    %357 = arith.addf %355, %356 : vector<2x32xf32>
    %358 = arith.negf %357 : vector<2x32xf32>
    %359 = math.exp %358 : vector<2x32xf32>
    %cst_131 = arith.constant 1.000000e+00 : f32
    %360 = vector.broadcast %cst_131 : f32 to vector<2x32xf32>
    %361 = arith.addf %360, %359 : vector<2x32xf32>
    %362 = arith.divf %360, %361 : vector<2x32xf32>
    %363 = vector.extract_strided_slice %344 {offsets = [0, 64], sizes = [2, 32], strides = [1, 1]} : vector<2x96xf32> to vector<2x32xf32>
    %364 = vector.extract_strided_slice %346 {offsets = [0, 64], sizes = [2, 32], strides = [1, 1]} : vector<2x96xf32> to vector<2x32xf32>
    %365 = arith.addf %364, %22 : vector<2x32xf32>
    %366 = arith.mulf %354, %365 : vector<2x32xf32>
    %367 = arith.addf %363, %366 : vector<2x32xf32>
    %368 = math.tanh %367 : vector<2x32xf32>
    %369 = arith.subf %297, %368 : vector<2x32xf32>
    %370 = arith.mulf %362, %369 : vector<2x32xf32>
    %371 = arith.addf %368, %370 : vector<2x32xf32>
    %372 = arith.subf %371, %297 : vector<2x32xf32>
    %373 = vector.broadcast %340 : vector<2x1xf32> to vector<2x32xf32>
    %374 = arith.mulf %373, %372 : vector<2x32xf32>
    %375 = arith.addf %297, %374 : vector<2x32xf32>
    %376 = vector.broadcast %340 : vector<2x1xf32> to vector<2x32xf32>
    %377 = arith.mulf %376, %375 : vector<2x32xf32>
    %c0_132 = arith.constant 0 : index
    %c0_133 = arith.constant 0 : index
    %c0_134 = arith.constant 0 : index
    %378 = vector.load %arg13[%c0_132, %c0_133, %c0_134] : memref<4x2x96xf32, #tpu.memory_space<vmem>>, vector<1x2x96xf32>
    %379 = vector.shape_cast %378 : vector<1x2x96xf32> to vector<2x96xf32>
    %380 = arith.truncf %332 : vector<2x32xf32> to vector<2x32xbf16>
    %cst_135 = arith.constant dense<0.000000e+00> : vector<2x96xf32>
    %381 = tpu.matmul %380, %10, %cst_135 {dimension_numbers = #tpu.dot_dimension_numbers<[1], [0], [0], [1], [0, 0, 1, 1], [], []>} : vector<2x32xbf16>, vector<32x96xbf16>, vector<2x96xf32> -> vector<2x96xf32>
    %382 = vector.extract_strided_slice %379 {offsets = [0, 0], sizes = [2, 32], strides = [1, 1]} : vector<2x96xf32> to vector<2x32xf32>
    %383 = vector.extract_strided_slice %381 {offsets = [0, 0], sizes = [2, 32], strides = [1, 1]} : vector<2x96xf32> to vector<2x32xf32>
    %384 = arith.addf %382, %383 : vector<2x32xf32>
    %385 = arith.negf %384 : vector<2x32xf32>
    %386 = math.exp %385 : vector<2x32xf32>
    %cst_136 = arith.constant 1.000000e+00 : f32
    %387 = vector.broadcast %cst_136 : f32 to vector<2x32xf32>
    %388 = arith.addf %387, %386 : vector<2x32xf32>
    %389 = arith.divf %387, %388 : vector<2x32xf32>
    %390 = vector.extract_strided_slice %379 {offsets = [0, 32], sizes = [2, 32], strides = [1, 1]} : vector<2x96xf32> to vector<2x32xf32>
    %391 = vector.extract_strided_slice %381 {offsets = [0, 32], sizes = [2, 32], strides = [1, 1]} : vector<2x96xf32> to vector<2x32xf32>
    %392 = arith.addf %390, %391 : vector<2x32xf32>
    %393 = arith.negf %392 : vector<2x32xf32>
    %394 = math.exp %393 : vector<2x32xf32>
    %cst_137 = arith.constant 1.000000e+00 : f32
    %395 = vector.broadcast %cst_137 : f32 to vector<2x32xf32>
    %396 = arith.addf %395, %394 : vector<2x32xf32>
    %397 = arith.divf %395, %396 : vector<2x32xf32>
    %398 = vector.extract_strided_slice %379 {offsets = [0, 64], sizes = [2, 32], strides = [1, 1]} : vector<2x96xf32> to vector<2x32xf32>
    %399 = vector.extract_strided_slice %381 {offsets = [0, 64], sizes = [2, 32], strides = [1, 1]} : vector<2x96xf32> to vector<2x32xf32>
    %400 = arith.addf %399, %26 : vector<2x32xf32>
    %401 = arith.mulf %389, %400 : vector<2x32xf32>
    %402 = arith.addf %398, %401 : vector<2x32xf32>
    %403 = math.tanh %402 : vector<2x32xf32>
    %404 = arith.subf %332, %403 : vector<2x32xf32>
    %405 = arith.mulf %397, %404 : vector<2x32xf32>
    %406 = arith.addf %403, %405 : vector<2x32xf32>
    %407 = arith.subf %406, %332 : vector<2x32xf32>
    %408 = vector.broadcast %342 : vector<2x1xf32> to vector<2x32xf32>
    %409 = arith.mulf %408, %407 : vector<2x32xf32>
    %410 = arith.addf %332, %409 : vector<2x32xf32>
    %411 = vector.broadcast %342 : vector<2x1xf32> to vector<2x32xf32>
    %412 = arith.mulf %411, %410 : vector<2x32xf32>
    %413 = arith.addf %335, %377 : vector<2x32xf32>
    %414 = arith.addf %336, %412 : vector<2x32xf32>
    %415 = arith.maximumf %337, %377 : vector<2x32xf32>
    %416 = arith.maximumf %338, %412 : vector<2x32xf32>
    %c0_138 = arith.constant 0 : index
    %c0_139 = arith.constant 0 : index
    %417 = vector.load %arg14[%c0_138, %c0_139] : memref<2x32xf32, #tpu.memory_space<vmem>>, vector<2x32xf32>
    tpu.vector_store %arg14[%c0_138, %c0_139], %375 {strides = array<i32>} : memref<2x32xf32, #tpu.memory_space<vmem>>, vector<2x32xf32>,
    %c0_140 = arith.constant 0 : index
    %c0_141 = arith.constant 0 : index
    %418 = vector.load %arg15[%c0_140, %c0_141] : memref<2x32xf32, #tpu.memory_space<vmem>>, vector<2x32xf32>
    tpu.vector_store %arg15[%c0_140, %c0_141], %410 {strides = array<i32>} : memref<2x32xf32, #tpu.memory_space<vmem>>, vector<2x32xf32>,
    %c0_142 = arith.constant 0 : index
    %c0_143 = arith.constant 0 : index
    %419 = vector.load %arg16[%c0_142, %c0_143] : memref<2x32xf32, #tpu.memory_space<vmem>>, vector<2x32xf32>
    tpu.vector_store %arg16[%c0_142, %c0_143], %413 {strides = array<i32>} : memref<2x32xf32, #tpu.memory_space<vmem>>, vector<2x32xf32>,
    %c0_144 = arith.constant 0 : index
    %c0_145 = arith.constant 0 : index
    %420 = vector.load %arg17[%c0_144, %c0_145] : memref<2x32xf32, #tpu.memory_space<vmem>>, vector<2x32xf32>
    tpu.vector_store %arg17[%c0_144, %c0_145], %414 {strides = array<i32>} : memref<2x32xf32, #tpu.memory_space<vmem>>, vector<2x32xf32>,
    %c0_146 = arith.constant 0 : index
    %c0_147 = arith.constant 0 : index
    %421 = vector.load %arg18[%c0_146, %c0_147] : memref<2x32xf32, #tpu.memory_space<vmem>>, vector<2x32xf32>
    tpu.vector_store %arg18[%c0_146, %c0_147], %415 {strides = array<i32>} : memref<2x32xf32, #tpu.memory_space<vmem>>, vector<2x32xf32>,
    %c0_148 = arith.constant 0 : index
    %c0_149 = arith.constant 0 : index
    %422 = vector.load %arg19[%c0_148, %c0_149] : memref<2x32xf32, #tpu.memory_space<vmem>>, vector<2x32xf32>
    tpu.vector_store %arg19[%c0_148, %c0_149], %416 {strides = array<i32>} : memref<2x32xf32, #tpu.memory_space<vmem>>, vector<2x32xf32>,
    %c1_i32 = arith.constant 1 : i32
    %423 = arith.cmpi eq, %arg1, %c1_i32 : i32
    %424 = arith.extui %423 : i1 to i32
    %c0_i32_150 = arith.constant 0 : i32
    %425 = arith.cmpi ne, %424, %c0_i32_150 : i32
    scf.if %425 {
      %c0_151 = arith.constant 0 : index
      %c0_152 = arith.constant 0 : index
      %426 = vector.load %arg9[%c0_151, %c0_152] : memref<128x3xf32, #tpu.memory_space<vmem>>, vector<128x3xf32>
      %c0_153 = arith.constant 0 : index
      %c0_154 = arith.constant 0 : index
      %427 = vector.load %arg16[%c0_153, %c0_154] : memref<2x32xf32, #tpu.memory_space<vmem>>, vector<2x32xf32>
      %cst_155 = arith.constant 1.250000e-01 : f32
      %428 = vector.broadcast %cst_155 : f32 to vector<2x32xf32>
      %429 = arith.mulf %427, %428 : vector<2x32xf32>
      %430 = vector.extract_strided_slice %426 {offsets = [0, 0], sizes = [32, 3], strides = [1, 1]} : vector<128x3xf32> to vector<32x3xf32>
      %cst_156 = arith.constant dense<0.000000e+00> : vector<2x3xf32>
      %431 = tpu.matmul %429, %430, %cst_156 {dimension_numbers = #tpu.dot_dimension_numbers<[1], [0], [0], [1], [0, 0, 1, 1], [], []>} : vector<2x32xf32>, vector<32x3xf32>, vector<2x3xf32> -> vector<2x3xf32>
      %c0_157 = arith.constant 0 : index
      %c0_158 = arith.constant 0 : index
      %432 = vector.load %arg17[%c0_157, %c0_158] : memref<2x32xf32, #tpu.memory_space<vmem>>, vector<2x32xf32>
      %cst_159 = arith.constant 1.250000e-01 : f32
      %433 = vector.broadcast %cst_159 : f32 to vector<2x32xf32>
      %434 = arith.mulf %432, %433 : vector<2x32xf32>
      %435 = vector.extract_strided_slice %426 {offsets = [32, 0], sizes = [32, 3], strides = [1, 1]} : vector<128x3xf32> to vector<32x3xf32>
      %cst_160 = arith.constant dense<0.000000e+00> : vector<2x3xf32>
      %436 = tpu.matmul %434, %435, %cst_160 {dimension_numbers = #tpu.dot_dimension_numbers<[1], [0], [0], [1], [0, 0, 1, 1], [], []>} : vector<2x32xf32>, vector<32x3xf32>, vector<2x3xf32> -> vector<2x3xf32>
      %437 = arith.addf %431, %436 : vector<2x3xf32>
      %c0_161 = arith.constant 0 : index
      %c0_162 = arith.constant 0 : index
      %438 = vector.load %arg18[%c0_161, %c0_162] : memref<2x32xf32, #tpu.memory_space<vmem>>, vector<2x32xf32>
      %439 = vector.extract_strided_slice %426 {offsets = [64, 0], sizes = [32, 3], strides = [1, 1]} : vector<128x3xf32> to vector<32x3xf32>
      %cst_163 = arith.constant dense<0.000000e+00> : vector<2x3xf32>
      %440 = tpu.matmul %438, %439, %cst_163 {dimension_numbers = #tpu.dot_dimension_numbers<[1], [0], [0], [1], [0, 0, 1, 1], [], []>} : vector<2x32xf32>, vector<32x3xf32>, vector<2x3xf32> -> vector<2x3xf32>
      %441 = arith.addf %437, %440 : vector<2x3xf32>
      %c0_164 = arith.constant 0 : index
      %c0_165 = arith.constant 0 : index
      %442 = vector.load %arg19[%c0_164, %c0_165] : memref<2x32xf32, #tpu.memory_space<vmem>>, vector<2x32xf32>
      %443 = vector.extract_strided_slice %426 {offsets = [96, 0], sizes = [32, 3], strides = [1, 1]} : vector<128x3xf32> to vector<32x3xf32>
      %cst_166 = arith.constant dense<0.000000e+00> : vector<2x3xf32>
      %444 = tpu.matmul %442, %443, %cst_166 {dimension_numbers = #tpu.dot_dimension_numbers<[1], [0], [0], [1], [0, 0, 1, 1], [], []>} : vector<2x32xf32>, vector<32x3xf32>, vector<2x3xf32> -> vector<2x3xf32>
      %445 = arith.addf %441, %444 : vector<2x3xf32>
      %c0_167 = arith.constant 0 : index
      %c0_168 = arith.constant 0 : index
      %446 = vector.load %arg10[%c0_167, %c0_168] : memref<1x3xf32, #tpu.memory_space<vmem>>, vector<1x3xf32>
      %447 = vector.broadcast %446 : vector<1x3xf32> to vector<2x3xf32>
      %448 = arith.addf %445, %447 : vector<2x3xf32>
      %cst_169 = arith.constant dense<0xFF800000> : vector<2xf32>
      %449 = vector.multi_reduction <maximumf>, %448, %cst_169 [1] : vector<2x3xf32> to vector<2xf32>
      %450 = vector.shape_cast %449 : vector<2xf32> to vector<2x1xf32>
      %451 = vector.broadcast %450 : vector<2x1xf32> to vector<2x3xf32>
      %452 = arith.subf %448, %451 : vector<2x3xf32>
      %453 = math.exp %452 : vector<2x3xf32>
      %cst_170 = arith.constant dense<0.000000e+00> : vector<2xf32>
      %454 = vector.multi_reduction <add>, %453, %cst_170 [1] : vector<2x3xf32> to vector<2xf32>
      %455 = vector.shape_cast %454 : vector<2xf32> to vector<2x1xf32>
      %456 = math.log %455 : vector<2x1xf32>
      %457 = arith.addf %456, %450 : vector<2x1xf32>
      %458 = vector.broadcast %457 : vector<2x1xf32> to vector<2x3xf32>
      %459 = arith.subf %448, %458 : vector<2x3xf32>
      %c0_171 = arith.constant 0 : index
      %c0_172 = arith.constant 0 : index
      %460 = vector.load %arg11[%c0_171, %c0_172] : memref<2x3xf32, #tpu.memory_space<vmem>>, vector<2x3xf32>
      tpu.vector_store %arg11[%c0_171, %c0_172], %459 {strides = array<i32>} : memref<2x3xf32, #tpu.memory_space<vmem>>, vector<2x3xf32>,
    } else {
    }
    return
  }
  func.func @transform_0(%arg0: i32, %arg1: i32) -> (i32, i32) {
    %c0_i32 = arith.constant 0 : i32
    %c0_i32_0 = arith.constant 0 : i32
    return %arg0, %c0_i32 : i32, i32
  }
  func.func @transform_1(%arg0: i32, %arg1: i32) -> (i32, i32, i32) {
    %c0_i32 = arith.constant 0 : i32
    %c0_i32_0 = arith.constant 0 : i32
    return %arg1, %arg0, %c0_i32 : i32, i32, i32
  }
  func.func @transform_2(%arg0: i32, %arg1: i32) -> (i32, i32, i32) {
    %c1_i32 = arith.constant 1 : i32
    %0 = arith.subi %c1_i32, %arg1 : i32
    %c0_i32 = arith.constant 0 : i32
    %c0_i32_0 = arith.constant 0 : i32
    return %0, %arg0, %c0_i32 : i32, i32, i32
  }
  func.func @transform_3(%arg0: i32, %arg1: i32) -> (i32, i32, i32) {
    %c0_i32 = arith.constant 0 : i32
    %c0_i32_0 = arith.constant 0 : i32
    %c0_i32_1 = arith.constant 0 : i32
    %c0_i32_2 = arith.constant 0 : i32
    return %c0_i32, %c0_i32_0, %c0_i32_1 : i32, i32, i32
  }
  func.func @transform_4(%arg0: i32, %arg1: i32) -> (i32, i32, i32) {
    %c0_i32 = arith.constant 0 : i32
    %c0_i32_0 = arith.constant 0 : i32
    %c0_i32_1 = arith.constant 0 : i32
    %c0_i32_2 = arith.constant 0 : i32
    return %c0_i32, %c0_i32_0, %c0_i32_1 : i32, i32, i32
  }
  func.func @transform_5(%arg0: i32, %arg1: i32) -> (i32, i32, i32) {
    %c0_i32 = arith.constant 0 : i32
    %c0_i32_0 = arith.constant 0 : i32
    %c0_i32_1 = arith.constant 0 : i32
    %c0_i32_2 = arith.constant 0 : i32
    return %c0_i32, %c0_i32_0, %c0_i32_1 : i32, i32, i32
  }
  func.func @transform_6(%arg0: i32, %arg1: i32) -> (i32, i32, i32) {
    %c0_i32 = arith.constant 0 : i32
    %c0_i32_0 = arith.constant 0 : i32
    %c0_i32_1 = arith.constant 0 : i32
    %c0_i32_2 = arith.constant 0 : i32
    return %c0_i32, %c0_i32_0, %c0_i32_1 : i32, i32, i32
  }
  func.func @transform_7(%arg0: i32, %arg1: i32) -> (i32, i32) {
    %c0_i32 = arith.constant 0 : i32
    %c0_i32_0 = arith.constant 0 : i32
    %c0_i32_1 = arith.constant 0 : i32
    return %c0_i32, %c0_i32_0 : i32, i32
  }
  func.func @transform_8(%arg0: i32, %arg1: i32) -> (i32, i32) {
    %c0_i32 = arith.constant 0 : i32
    %c0_i32_0 = arith.constant 0 : i32
    %c0_i32_1 = arith.constant 0 : i32
    return %c0_i32, %c0_i32_0 : i32, i32
  }
  func.func @transform_9(%arg0: i32, %arg1: i32) -> (i32, i32) {
    %c0_i32 = arith.constant 0 : i32
    %c0_i32_0 = arith.constant 0 : i32
    return %arg0, %c0_i32 : i32, i32
  }
}

</mosaic_0001>

<llo_original>
// kernel: concat_pooling_gru_adaptive.1
$region0: #{concat_pooling_gru_adaptive.1}
  #allocation0 [shape = 'u32[]', space=smem, size = 0x4, offset = 0x4, fixed_abs, tag = 'smem constant byte address 0x4 - core index']
  #allocation1 [shape = 'u32[144,128]{1,0:T(1,128)}', space=vmem, size = 0x12000, scoped, tag = 'internal scratch']
  #allocation2 [shape = 'f32[4,2,96]{2,1,0:T(2,128)}', space=vmem, size = 0x1000, scoped, tag = 'scratch operand']
  #allocation3 [shape = 'f32[4,2,96]{2,1,0:T(2,128)}', space=vmem, size = 0x1000, scoped, tag = 'scratch operand']
  #allocation4 [shape = 'f32[2,32]{1,0:T(2,128)}', space=vmem, size = 0x400, scoped, tag = 'scratch operand']
  #allocation5 [shape = 'f32[2,32]{1,0:T(2,128)}', space=vmem, size = 0x400, scoped, tag = 'scratch operand']
  #allocation6 [shape = 'f32[2,32]{1,0:T(2,128)}', space=vmem, size = 0x400, scoped, tag = 'scratch operand']
  #allocation7 [shape = 'f32[2,32]{1,0:T(2,128)}', space=vmem, size = 0x400, scoped, tag = 'scratch operand']
  #allocation8 [shape = 'f32[2,32]{1,0:T(2,128)}', space=vmem, size = 0x400, scoped, tag = 'scratch operand']
  #allocation9 [shape = 'f32[2,32]{1,0:T(2,128)}', space=vmem, size = 0x400, scoped, tag = 'scratch operand']
  %s0 = inlined_call_operand.hbm [shape: s32[2,1], index: 0, kind: input, shape index: {}]
  %s1 = inlined_call_operand.hbm [shape: bf16[8,2,16], index: 1, kind: input, shape index: {}, may-alias: {1,2}]
  %s2 = inlined_call_operand.hbm [shape: bf16[8,2,16], index: 2, kind: input, shape index: {}, may-alias: {1,2}]
  %s3 = inlined_call_operand.hbm [shape: bf16[2,16,96], index: 3, kind: input, shape index: {}]
  %s4 = inlined_call_operand.hbm [shape: bf16[2,32,96], index: 4, kind: input, shape index: {}]
  %s5 = inlined_call_operand.hbm [shape: f32[2,1,96], index: 5, kind: input, shape index: {}]
  %s6 = inlined_call_operand.hbm [shape: f32[2,1,32], index: 6, kind: input, shape index: {}]
  %s7 = inlined_call_operand.hbm [shape: f32[128,3], index: 7, kind: input, shape index: {}]
  %s8 = inlined_call_operand.hbm [shape: f32[1,3], index: 8, kind: input, shape index: {}]
  %s9 = inlined_call_operand.hbm [shape: f32[2,3], index: 9, kind: output, shape index: {}]
  %s10 = sld [smem:[#allocation0]]
  $region113: #{concat_pooling_gru_adaptive.1} parent=0
    _
  %s12 = ssub.s32 1, %s10
  %s13 = scalar_select 0, %s12, %s10
  $region1: #{concat_pooling_gru_adaptive.1} parent=0
    #allocation10 [shape = 'u8[1024]{0}', space=vmem, size = 0x400, scoped, tag = 'input window, operand 0, single buffered']
    #allocation11 [shape = 's32[2]{0}', space=sflag, size = 0x8, scoped, tag = 'scoped memory for concat_pooling_gru_adaptive.1']
    #allocation12 [shape = 's32[2]{0}', space=sflag, size = 0x8, scoped, tag = 'scoped memory for concat_pooling_gru_adaptive.1']
    #allocation13 [shape = 'u8[4096]{0}', space=vmem, size = 0x1000, scoped, tag = 'input window, operand 1']
    #allocation14 [shape = 's32[2]{0}', space=sflag, size = 0x8, scoped, tag = 'scoped memory for concat_pooling_gru_adaptive.1']
    #allocation15 [shape = 'u8[4096]{0}', space=vmem, size = 0x1000, scoped, tag = 'input window, operand 2']
    #allocation16 [shape = 'u8[8192]{0}', space=vmem, size = 0x2000, scoped, tag = 'input window, operand 3, single buffered']
    #allocation17 [shape = 's32[1]{0}', space=sflag, size = 0x4, scoped, tag = 'scoped memory for concat_pooling_gru_adaptive.1']
    #allocation18 [shape = 'u8[16384]{0}', space=vmem, size = 0x4000, scoped, tag = 'input window, operand 4, single buffered']
    #allocation19 [shape = 'u8[1024]{0}', space=vmem, size = 0x400, scoped, tag = 'input window, operand 5, single buffered']
    #allocation20 [shape = 's32[1]{0}', space=sflag, size = 0x4, scoped, tag = 'scoped memory for concat_pooling_gru_adaptive.1']
    #allocation21 [shape = 'u8[1024]{0}', space=vmem, size = 0x400, scoped, tag = 'input window, operand 6, single buffered']
    #allocation22 [shape = 'u8[65536]{0}', space=vmem, size = 0x10000, scoped, tag = 'input window, operand 7, single buffered']
    #allocation23 [shape = 's32[1]{0}', space=sflag, size = 0x4, scoped, tag = 'scoped memory for concat_pooling_gru_adaptive.1']
    #allocation24 [shape = 'u8[512]{0}', space=vmem, size = 0x400, scoped, tag = 'input window, operand 8, single buffered']
    #allocation25 [shape = 'u8[1024]{0}', space=vmem, size = 0x400, scoped, tag = 'output window, operand 0, single buffered']
    %14 = vsyncpa [#allocation11], 0
    %15 = vsyncpa [#allocation14], 0
    %s16 = scalar_lea.sflag [#allocation14], 1
    %17 = vsyncpa %s16, 0
    %18 = vsyncpa [#allocation17], 0
    %19 = vsyncpa [#allocation20], 0
    %20 = vsyncpa [#allocation23], 0
    %21 = vsyncpa [#allocation12], 0
    loop: start=0, step=1, limit=4
    $region2: #{concat_pooling_gru_adaptive.1} parent=1 // loop_pre_header
      _
    $region3: #{concat_pooling_gru_adaptive.1} parent=1 // loop_header
      %s23 = sphi 0, %s27
      %p24 = scmp.ge.s32.totalorder %s23, 4
      %s30 = sphi 0, %s42
      %s31 = sphi 0, %s38
      %s32 = sphi 0, %s30
      %s33 = sphi 0, %s31
      %s34 = sphi 0, %s32
      %s35 = sphi 0, %s33
      %s45 = sphi 0, %s47
      %s48 = sphi 0, %s45
      %s49 = sphi 0, %s48
      %s65 = sphi 0, %s49
      %s73 = sphi 0, %s75
      %s76 = sphi 0, %s73
      %s77 = sphi 0, %s76
      %s93 = sphi 0, %s77
      %s103 = sphi 0, %s105
      %s106 = sphi 0, %s103
      %s107 = sphi 0, %s106
      %s123 = sphi 0, %s107
      %s127 = sphi 0, %s127
      %s129 = sphi 0, %s127
      %s130 = sphi 0, %s129
      %s144 = sphi 0, %s130
      %s148 = sphi 0, %s148
      %s150 = sphi 0, %s148
      %s151 = sphi 0, %s150
      %s165 = sphi 0, %s151
      %s169 = sphi 0, %s169
      %s171 = sphi 0, %s169
      %s172 = sphi 0, %s171
      %s186 = sphi 0, %s172
      %s190 = sphi 0, %s190
      %s192 = sphi 0, %s190
      %s193 = sphi 0, %s192
      %s207 = sphi 0, %s193
      %s211 = sphi 0, %s211
      %s213 = sphi 0, %s211
      %s214 = sphi 0, %s213
      %s228 = sphi 0, %s214
      %s232 = sphi 0, %s232
      %s234 = sphi 0, %s232
      %s235 = sphi 0, %s234
      %s249 = sphi 0, %s235
      %s255 = sphi 0, %s257
      %s258 = sphi 0, %s255
      %s259 = sphi 0, %s258
      %s275 = sphi 0, %s259
    $region4: #{concat_pooling_gru_adaptive.1} parent=1 // loop_header_branch
      %26 = sbr.rel (%p24) target = $region8
    $region5: #{concat_pooling_gru_adaptive.1} parent=1 // loop_body
      %s28 = ssub.s32 %s23, 1
      %s29 = ssub.s32 %s23, 2
      %s36 = sadd.s32 1, %s31
      %p37 = scmp.ge.s32.totalorder %s36, 2
      %s38 = scalar_select %p37, 0, %s36
      %s39 = sadd.s32 1, %s30
      %s40 = scalar_select %p37, %s39, %s30
      %p41 = scmp.ge.s32.totalorder %s40, 1
      %s42 = scalar_select %p41, 0, %s40
      %s43 = ssub.s32 %s30, %s42
      %p44 = scmp.eq.s32.totalorder %s43, 0
      %s46 = sadd.s32 %s45, 1
      %s47 = scalar_select %p44, %s45, %s46
      %p50 = pneg %p44
      %p51 = scmp.eq.s32.totalorder %s23, 1
      %p52 = por %p50, %p51
      %p53 = scmp.ne.s32.totalorder %s45, %s48
      %p54 = scmp.eq.s32.totalorder %s23, 0
      %p55 = por %p53, %p54
      %p56 = scmp.ne.s32.totalorder %s45, %s48
      %p57 = scmp.eq.s32.totalorder %s28, 1
      %p58 = por %p56, %p57
      %p59 = scmp.ne.s32.totalorder %s48, %s49
      %p60 = scmp.eq.s32.totalorder %s28, 0
      %p61 = por %p59, %p60
      %p62 = scmp.ne.s32.totalorder %s48, %s49
      %p63 = scmp.eq.s32.totalorder %s29, 1
      %p64 = por %p62, %p63
      %p66 = scmp.ne.s32.totalorder %s49, %s65
      %p67 = scmp.eq.s32.totalorder %s29, 0
      %p68 = por %p66, %p67
      %s69 = ssub.s32 %s31, %s38
      %s70 = ssub.s32 %s30, %s42
      %s71 = sor.u32 %s69, %s70
      %p72 = scmp.eq.s32.totalorder %s71, 0
      %s74 = sadd.s32 %s73, 1
      %s75 = scalar_select %p72, %s73, %s74
      %p78 = pneg %p72
      %p79 = scmp.eq.s32.totalorder %s23, 1
      %p80 = por %p78, %p79
      %p81 = scmp.ne.s32.totalorder %s73, %s76
      %p82 = scmp.eq.s32.totalorder %s23, 0
      %p83 = por %p81, %p82
      %p84 = scmp.ne.s32.totalorder %s73, %s76
      %p85 = scmp.eq.s32.totalorder %s28, 1
      %p86 = por %p84, %p85
      %p87 = scmp.ne.s32.totalorder %s76, %s77
      %p88 = scmp.eq.s32.totalorder %s28, 0
      %p89 = por %p87, %p88
      %p90 = scmp.ne.s32.totalorder %s76, %s77
      %p91 = scmp.eq.s32.totalorder %s29, 1
      %p92 = por %p90, %p91
      %p94 = scmp.ne.s32.totalorder %s77, %s93
      %p95 = scmp.eq.s32.totalorder %s29, 0
      %p96 = por %p94, %p95
      %s97 = ssub.s32 1, %s31
      %s98 = ssub.s32 1, %s38
      %s99 = ssub.s32 %s97, %s98
      %s100 = ssub.s32 %s30, %s42
      %s101 = sor.u32 %s99, %s100
      %p102 = scmp.eq.s32.totalorder %s101, 0
      %s104 = sadd.s32 %s103, 1
      %s105 = scalar_select %p102, %s103, %s104
      %p108 = pneg %p102
      %p109 = scmp.eq.s32.totalorder %s23, 1
      %p110 = por %p108, %p109
      %p111 = scmp.ne.s32.totalorder %s103, %s106
      %p112 = scmp.eq.s32.totalorder %s23, 0
      %p113 = por %p111, %p112
      %p114 = scmp.ne.s32.totalorder %s103, %s106
      %p115 = scmp.eq.s32.totalorder %s28, 1
      %p116 = por %p114, %p115
      %p117 = scmp.ne.s32.totalorder %s106, %s107
      %p118 = scmp.eq.s32.totalorder %s28, 0
      %p119 = por %p117, %p118
      %p120 = scmp.ne.s32.totalorder %s106, %s107
      %p121 = scmp.eq.s32.totalorder %s29, 1
      %p122 = por %p120, %p121
      %p124 = scmp.ne.s32.totalorder %s107, %s123
      %p125 = scmp.eq.s32.totalorder %s29, 0
      %p126 = por %p124, %p125
      %s128 = sadd.s32 %s127, 1
      %p131 = scmp.eq.s32.totalorder %s23, 1
      %p132 = scmp.ne.s32.totalorder %s127, %s129
      %p133 = scmp.eq.s32.totalorder %s23, 0
      %p134 = por %p132, %p133
      %p135 = scmp.ne.s32.totalorder %s127, %s129
      %p136 = scmp.eq.s32.totalorder %s28, 1
      %p137 = por %p135, %p136
      %p138 = scmp.ne.s32.totalorder %s129, %s130
      %p139 = scmp.eq.s32.totalorder %s28, 0
      %p140 = por %p138, %p139
      %p141 = scmp.ne.s32.totalorder %s129, %s130
      %p142 = scmp.eq.s32.totalorder %s29, 1
      %p143 = por %p141, %p142
      %p145 = scmp.ne.s32.totalorder %s130, %s144
      %p146 = scmp.eq.s32.totalorder %s29, 0
      %p147 = por %p145, %p146
      %s149 = sadd.s32 %s148, 1
      %p152 = scmp.eq.s32.totalorder %s23, 1
      %p153 = scmp.ne.s32.totalorder %s148, %s150
      %p154 = scmp.eq.s32.totalorder %s23, 0
      %p155 = por %p153, %p154
      %p156 = scmp.ne.s32.totalorder %s148, %s150
      %p157 = scmp.eq.s32.totalorder %s28, 1
      %p158 = por %p156, %p157
      %p159 = scmp.ne.s32.totalorder %s150, %s151
      %p160 = scmp.eq.s32.totalorder %s28, 0
      %p161 = por %p159, %p160
      %p162 = scmp.ne.s32.totalorder %s150, %s151
      %p163 = scmp.eq.s32.totalorder %s29, 1
      %p164 = por %p162, %p163
      %p166 = scmp.ne.s32.totalorder %s151, %s165
      %p167 = scmp.eq.s32.totalorder %s29, 0
      %p168 = por %p166, %p167
      %s170 = sadd.s32 %s169, 1
      %p173 = scmp.eq.s32.totalorder %s23, 1
      %p174 = scmp.ne.s32.totalorder %s169, %s171
      %p175 = scmp.eq.s32.totalorder %s23, 0
      %p176 = por %p174, %p175
      %p177 = scmp.ne.s32.totalorder %s169, %s171
      %p178 = scmp.eq.s32.totalorder %s28, 1
      %p179 = por %p177, %p178
      %p180 = scmp.ne.s32.totalorder %s171, %s172
      %p181 = scmp.eq.s32.totalorder %s28, 0
      %p182 = por %p180, %p181
      %p183 = scmp.ne.s32.totalorder %s171, %s172
      %p184 = scmp.eq.s32.totalorder %s29, 1
      %p185 = por %p183, %p184
      %p187 = scmp.ne.s32.totalorder %s172, %s186
      %p188 = scmp.eq.s32.totalorder %s29, 0
      %p189 = por %p187, %p188
      %s191 = sadd.s32 %s190, 1
      %p194 = scmp.eq.s32.totalorder %s23, 1
      %p195 = scmp.ne.s32.totalorder %s190, %s192
      %p196 = scmp.eq.s32.totalorder %s23, 0
      %p197 = por %p195, %p196
      %p198 = scmp.ne.s32.totalorder %s190, %s192
      %p199 = scmp.eq.s32.totalorder %s28, 1
      %p200 = por %p198, %p199
      %p201 = scmp.ne.s32.totalorder %s192, %s193
      %p202 = scmp.eq.s32.totalorder %s28, 0
      %p203 = por %p201, %p202
      %p204 = scmp.ne.s32.totalorder %s192, %s193
      %p205 = scmp.eq.s32.totalorder %s29, 1
      %p206 = por %p204, %p205
      %p208 = scmp.ne.s32.totalorder %s193, %s207
      %p209 = scmp.eq.s32.totalorder %s29, 0
      %p210 = por %p208, %p209
      %s212 = sadd.s32 %s211, 1
      %p215 = scmp.eq.s32.totalorder %s23, 1
      %p216 = scmp.ne.s32.totalorder %s211, %s213
      %p217 = scmp.eq.s32.totalorder %s23, 0
      %p218 = por %p216, %p217
      %p219 = scmp.ne.s32.totalorder %s211, %s213
      %p220 = scmp.eq.s32.totalorder %s28, 1
      %p221 = por %p219, %p220
      %p222 = scmp.ne.s32.totalorder %s213, %s214
      %p223 = scmp.eq.s32.totalorder %s28, 0
      %p224 = por %p222, %p223
      %p225 = scmp.ne.s32.totalorder %s213, %s214
      %p226 = scmp.eq.s32.totalorder %s29, 1
      %p227 = por %p225, %p226
      %p229 = scmp.ne.s32.totalorder %s214, %s228
      %p230 = scmp.eq.s32.totalorder %s29, 0
      %p231 = por %p229, %p230
      %s233 = sadd.s32 %s232, 1
      %p236 = scmp.eq.s32.totalorder %s23, 1
      %p237 = scmp.ne.s32.totalorder %s232, %s234
      %p238 = scmp.eq.s32.totalorder %s23, 0
      %p239 = por %p237, %p238
      %p240 = scmp.ne.s32.totalorder %s232, %s234
      %p241 = scmp.eq.s32.totalorder %s28, 1
      %p242 = por %p240, %p241
      %p243 = scmp.ne.s32.totalorder %s234, %s235
      %p244 = scmp.eq.s32.totalorder %s28, 0
      %p245 = por %p243, %p244
      %p246 = scmp.ne.s32.totalorder %s234, %s235
      %p247 = scmp.eq.s32.totalorder %s29, 1
      %p248 = por %p246, %p247
      %p250 = scmp.ne.s32.totalorder %s235, %s249
      %p251 = scmp.eq.s32.totalorder %s29, 0
      %p252 = por %p250, %p251
      %s253 = ssub.s32 %s30, %s42
      %p254 = scmp.eq.s32.totalorder %s253, 0
      %s256 = sadd.s32 %s255, 1
      %s257 = scalar_select %p254, %s255, %s256
      %p260 = pneg %p254
      %p261 = scmp.eq.s32.totalorder %s23, 1
      %p262 = por %p260, %p261
      %p263 = scmp.ne.s32.totalorder %s255, %s258
      %p264 = scmp.eq.s32.totalorder %s23, 0
      %p265 = por %p263, %p264
      %p266 = scmp.ne.s32.totalorder %s255, %s258
      %p267 = scmp.eq.s32.totalorder %s28, 1
      %p268 = por %p266, %p267
      %p269 = scmp.ne.s32.totalorder %s258, %s259
      %p270 = scmp.eq.s32.totalorder %s28, 0
      %p271 = por %p269, %p270
      %p272 = scmp.ne.s32.totalorder %s258, %s259
      %p273 = scmp.eq.s32.totalorder %s29, 1
      %p274 = por %p272, %p273
      %p276 = scmp.ne.s32.totalorder %s259, %s275
      %p277 = scmp.eq.s32.totalorder %s29, 0
      %p278 = por %p276, %p277
      %p279 = scmp.le.s32.totalorder 1, %s23
      %p280 = scmp.lt.s32.totalorder %s23, 3
      %p281 = pnand %p279, %p280
      %p282 = pneg %p281
      // Predicated region
      $region9: #{concat_pooling_gru_adaptive.1} parent=5 // pred_check
        _
      $region10: #{concat_pooling_gru_adaptive.1} parent=5 // pred_check_branch
        %284 = sbr.rel (%p281) target = $region12
      $region11: #{concat_pooling_gru_adaptive.1} parent=5 // pred_region
        %s285 = ssub.s32 %s23, 1
        // Predicated region
        $region13: #{concat_pooling_gru_adaptive.1} parent=11 // pred_check
          %p286 = pneg %p61
        $region14: #{concat_pooling_gru_adaptive.1} parent=11 // pred_check_branch
          %288 = sbr.rel (%p286) target = $region16
        $region15: #{concat_pooling_gru_adaptive.1} parent=11 // pred_region
          %s290 = ssub.s32 32, 32
          %291 = vsyncadd [#allocation11], %s290
          %s292 = smul.addr %s32, 32
          %s293 = scalar_lea.hbm %s0, %s292
          %s295 = sshll.u32 [#allocation10], 4
          %s296 = int_to_ptr.vmem [resolvable:$true] %s295
          %298 = dma.hbm_to_vmem [thread:$0]  %s293, 32, %s296, [#allocation11]
        $region16: #{concat_pooling_gru_adaptive.1} parent=11 // pred_fallthru
          _
        // Predicated region
        $region17: #{concat_pooling_gru_adaptive.1} parent=11 // pred_check
          %p299 = pneg %p140
        $region18: #{concat_pooling_gru_adaptive.1} parent=11 // pred_check_branch
          %301 = sbr.rel (%p299) target = $region20
        $region19: #{concat_pooling_gru_adaptive.1} parent=11 // pred_region
          %s303 = ssub.s32 256, 256
          %304 = vsyncadd [#allocation17], %s303
          %s305 = sshll.u32 [#allocation16], 4
          %s306 = int_to_ptr.vmem [resolvable:$true] %s305
          %311 = dma.hbm_to_vmem [thread:$0]  %s3, 256, %s306, [#allocation17], 64, 64, 4
        $region20: #{concat_pooling_gru_adaptive.1} parent=11 // pred_fallthru
          _
        // Predicated region
        $region21: #{concat_pooling_gru_adaptive.1} parent=11 // pred_check
          %p312 = pneg %p161
        $region22: #{concat_pooling_gru_adaptive.1} parent=11 // pred_check_branch
          %314 = sbr.rel (%p312) target = $region24
        $region23: #{concat_pooling_gru_adaptive.1} parent=11 // pred_region
          %s316 = ssub.s32 512, 512
          %317 = vsyncadd [#allocation17], %s316
          %s318 = sshll.u32 [#allocation18], 4
          %s319 = int_to_ptr.vmem [resolvable:$true] %s318
          %324 = dma.hbm_to_vmem [thread:$0]  %s4, 512, %s319, [#allocation17], 64, 64, 4
        $region24: #{concat_pooling_gru_adaptive.1} parent=11 // pred_fallthru
          _
        // Predicated region
        $region25: #{concat_pooling_gru_adaptive.1} parent=11 // pred_check
          %p325 = pneg %p182
        $region26: #{concat_pooling_gru_adaptive.1} parent=11 // pred_check_branch
          %327 = sbr.rel (%p325) target = $region28
        $region27: #{concat_pooling_gru_adaptive.1} parent=11 // pred_region
          %s329 = ssub.s32 32, 32
          %330 = vsyncadd [#allocation20], %s329
          %s331 = sshll.u32 [#allocation19], 4
          %s332 = int_to_ptr.vmem [resolvable:$true] %s331
          %337 = dma.hbm_to_vmem [thread:$0]  %s5, 32, %s332, [#allocation20], 16, 16, 1
        $region28: #{concat_pooling_gru_adaptive.1} parent=11 // pred_fallthru
          _
        // Predicated region
        $region29: #{concat_pooling_gru_adaptive.1} parent=11 // pred_check
          %p338 = pneg %p203
        $region30: #{concat_pooling_gru_adaptive.1} parent=11 // pred_check_branch
          %340 = sbr.rel (%p338) target = $region32
        $region31: #{concat_pooling_gru_adaptive.1} parent=11 // pred_region
          %s342 = ssub.s32 32, 32
          %343 = vsyncadd [#allocation20], %s342
          %s344 = sshll.u32 [#allocation21], 4
          %s345 = int_to_ptr.vmem [resolvable:$true] %s344
          %350 = dma.hbm_to_vmem [thread:$0]  %s6, 32, %s345, [#allocation20], 16, 16, 1
        $region32: #{concat_pooling_gru_adaptive.1} parent=11 // pred_fallthru
          _
        // Predicated region
        $region33: #{concat_pooling_gru_adaptive.1} parent=11 // pred_check
          %p351 = pneg %p224
        $region34: #{concat_pooling_gru_adaptive.1} parent=11 // pred_check_branch
          %353 = sbr.rel (%p351) target = $region36
        $region35: #{concat_pooling_gru_adaptive.1} parent=11 // pred_region
          %s355 = ssub.s32 2048, 2048
          %356 = vsyncadd [#allocation23], %s355
          %s357 = sshll.u32 [#allocation22], 4
          %s358 = int_to_ptr.vmem [resolvable:$true] %s357
          %363 = dma.hbm_to_vmem [thread:$0]  %s7, 2048, %s358, [#allocation23], 128, 128, 8
        $region36: #{concat_pooling_gru_adaptive.1} parent=11 // pred_fallthru
          _
        // Predicated region
        $region37: #{concat_pooling_gru_adaptive.1} parent=11 // pred_check
          %p364 = pneg %p245
        $region38: #{concat_pooling_gru_adaptive.1} parent=11 // pred_check_branch
          %366 = sbr.rel (%p364) target = $region40
        $region39: #{concat_pooling_gru_adaptive.1} parent=11 // pred_region
          %s368 = ssub.s32 16, 16
          %369 = vsyncadd [#allocation23], %s368
          %s371 = sshll.u32 [#allocation24], 4
          %s372 = int_to_ptr.vmem [resolvable:$true] %s371
          %374 = dma.hbm_to_vmem [thread:$0]  %s8, 16, %s372, [#allocation23]
        $region40: #{concat_pooling_gru_adaptive.1} parent=11 // pred_fallthru
          _
      $region12: #{concat_pooling_gru_adaptive.1} parent=5 // pred_fallthru
        _
      %p375 = scmp.lt.s32.totalorder %s23, 2
      // Predicated region
      $region41: #{concat_pooling_gru_adaptive.1} parent=5 // pred_check
        %p376 = pneg %p375
      $region42: #{concat_pooling_gru_adaptive.1} parent=5 // pred_check_branch
        %378 = sbr.rel (%p376) target = $region44
      $region43: #{concat_pooling_gru_adaptive.1} parent=5 // pred_region
        // Predicated region
        $region45: #{concat_pooling_gru_adaptive.1} parent=43 // pred_check
          %p379 = pneg %p83
        $region46: #{concat_pooling_gru_adaptive.1} parent=43 // pred_check_branch
          %381 = sbr.rel (%p379) target = $region48
        $region47: #{concat_pooling_gru_adaptive.1} parent=43 // pred_region
          %s382 = sand.u32 %s23, 1
          %s383 = scalar_lea.sflag [#allocation14], %s382
          %s384 = sand.u32 %s73, 1
          %s385 = smul.addr %s384, 4
          %s386 = scalar_lea.vmem [#allocation13], %s385
          %s387 = smul.u32 4, %s31
          %s389 = ssub.s32 64, 64
          %390 = vsyncadd %s383, %s389
          %s391 = sadd.s32 %s30, %s387
          %s392 = smul.addr %s391, 16
          %s393 = scalar_lea.hbm %s1, %s392
          %s394 = sshll.u32 %s386, 4
          %s395 = int_to_ptr.vmem [resolvable:$true] %s394
          %400 = dma.hbm_to_vmem [thread:$0]  %s393, 64, %s395, %s383, 16, 16, 1
        $region48: #{concat_pooling_gru_adaptive.1} parent=43 // pred_fallthru
          _
        // Predicated region
        $region49: #{concat_pooling_gru_adaptive.1} parent=43 // pred_check
          %p401 = pneg %p113
        $region50: #{concat_pooling_gru_adaptive.1} parent=43 // pred_check_branch
          %403 = sbr.rel (%p401) target = $region52
        $region51: #{concat_pooling_gru_adaptive.1} parent=43 // pred_region
          %s404 = sand.u32 %s23, 1
          %s405 = scalar_lea.sflag [#allocation14], %s404
          %s406 = sand.u32 %s103, 1
          %s407 = smul.addr %s406, 4
          %s408 = scalar_lea.vmem [#allocation15], %s407
          %s409 = ssub.s32 1, %s31
          %s410 = smul.u32 4, %s409
          %s412 = ssub.s32 64, 64
          %413 = vsyncadd %s405, %s412
          %s414 = sadd.s32 %s30, %s410
          %s415 = smul.addr %s414, 16
          %s416 = scalar_lea.hbm %s2, %s415
          %s417 = sshll.u32 %s408, 4
          %s418 = int_to_ptr.vmem [resolvable:$true] %s417
          %423 = dma.hbm_to_vmem [thread:$0]  %s416, 64, %s418, %s405, 16, 16, 1
        $region52: #{concat_pooling_gru_adaptive.1} parent=43 // pred_fallthru
          _
      $region44: #{concat_pooling_gru_adaptive.1} parent=5 // pred_fallthru
        _
      %p424 = scmp.le.s32.totalorder 1, %s23
      %p425 = scmp.lt.s32.totalorder %s23, 3
      %p426 = pnand %p424, %p425
      %p427 = pneg %p426
      // Predicated region
      $region53: #{concat_pooling_gru_adaptive.1} parent=5 // pred_check
        _
      $region54: #{concat_pooling_gru_adaptive.1} parent=5 // pred_check_branch
        %429 = sbr.rel (%p426) target = $region56
      $region55: #{concat_pooling_gru_adaptive.1} parent=5 // pred_region
        %s430 = ssub.s32 %s23, 1
        // Predicated region
        $region57: #{concat_pooling_gru_adaptive.1} parent=55 // pred_check
          %p431 = pneg %p61
        $region58: #{concat_pooling_gru_adaptive.1} parent=55 // pred_check_branch
          %433 = sbr.rel (%p431) target = $region60
        $region59: #{concat_pooling_gru_adaptive.1} parent=55 // pred_region
          %434 = dma.done [#allocation11], 32
        $region60: #{concat_pooling_gru_adaptive.1} parent=55 // pred_fallthru
          _
        %s435 = sand.u32 %s28, 1
        %s436 = scalar_lea.sflag [#allocation14], %s435
        %s437 = sand.u32 %s76, 1
        %s438 = smul.addr %s437, 4
        %s439 = scalar_lea.vmem [#allocation13], %s438
        // Predicated region
        $region61: #{concat_pooling_gru_adaptive.1} parent=55 // pred_check
          %p440 = pneg %p89
        $region62: #{concat_pooling_gru_adaptive.1} parent=55 // pred_check_branch
          %442 = sbr.rel (%p440) target = $region64
        $region63: #{concat_pooling_gru_adaptive.1} parent=55 // pred_region
          %443 = dma.done %s436, 64
        $region64: #{concat_pooling_gru_adaptive.1} parent=55 // pred_fallthru
          _
        %s444 = sand.u32 %s28, 1
        %s445 = scalar_lea.sflag [#allocation14], %s444
        %s446 = sand.u32 %s106, 1
        %s447 = smul.addr %s446, 4
        %s448 = scalar_lea.vmem [#allocation15], %s447
        // Predicated region
        $region65: #{concat_pooling_gru_adaptive.1} parent=55 // pred_check
          %p449 = pneg %p119
        $region66: #{concat_pooling_gru_adaptive.1} parent=55 // pred_check_branch
          %451 = sbr.rel (%p449) target = $region68
        $region67: #{concat_pooling_gru_adaptive.1} parent=55 // pred_region
          %452 = dma.done %s445, 64
        $region68: #{concat_pooling_gru_adaptive.1} parent=55 // pred_fallthru
          _
        // Predicated region
        $region69: #{concat_pooling_gru_adaptive.1} parent=55 // pred_check
          %p453 = pneg %p140
        $region70: #{concat_pooling_gru_adaptive.1} parent=55 // pred_check_branch
          %455 = sbr.rel (%p453) target = $region72
        $region71: #{concat_pooling_gru_adaptive.1} parent=55 // pred_region
          %456 = dma.done [#allocation17], 256
        $region72: #{concat_pooling_gru_adaptive.1} parent=55 // pred_fallthru
          _
        // Predicated region
        $region73: #{concat_pooling_gru_adaptive.1} parent=55 // pred_check
          %p457 = pneg %p161
        $region74: #{concat_pooling_gru_adaptive.1} parent=55 // pred_check_branch
          %459 = sbr.rel (%p457) target = $region76
        $region75: #{concat_pooling_gru_adaptive.1} parent=55 // pred_region
          %460 = dma.done [#allocation17], 512
        $region76: #{concat_pooling_gru_adaptive.1} parent=55 // pred_fallthru
          _
        // Predicated region
        $region77: #{concat_pooling_gru_adaptive.1} parent=55 // pred_check
          %p461 = pneg %p182
        $region78: #{concat_pooling_gru_adaptive.1} parent=55 // pred_check_branch
          %463 = sbr.rel (%p461) target = $region80
        $region79: #{concat_pooling_gru_adaptive.1} parent=55 // pred_region
          %464 = dma.done [#allocation20], 32
        $region80: #{concat_pooling_gru_adaptive.1} parent=55 // pred_fallthru
          _
        // Predicated region
        $region81: #{concat_pooling_gru_adaptive.1} parent=55 // pred_check
          %p465 = pneg %p203
        $region82: #{concat_pooling_gru_adaptive.1} parent=55 // pred_check_branch
          %467 = sbr.rel (%p465) target = $region84
        $region83: #{concat_pooling_gru_adaptive.1} parent=55 // pred_region
          %468 = dma.done [#allocation20], 32
        $region84: #{concat_pooling_gru_adaptive.1} parent=55 // pred_fallthru
          _
        // Predicated region
        $region85: #{concat_pooling_gru_adaptive.1} parent=55 // pred_check
          %p469 = pneg %p224
        $region86: #{concat_pooling_gru_adaptive.1} parent=55 // pred_check_branch
          %471 = sbr.rel (%p469) target = $region88
        $region87: #{concat_pooling_gru_adaptive.1} parent=55 // pred_region
          %472 = dma.done [#allocation23], 2048
        $region88: #{concat_pooling_gru_adaptive.1} parent=55 // pred_fallthru
          _
        // Predicated region
        $region89: #{concat_pooling_gru_adaptive.1} parent=55 // pred_check
          %p473 = pneg %p245
        $region90: #{concat_pooling_gru_adaptive.1} parent=55 // pred_check_branch
          %475 = sbr.rel (%p473) target = $region92
        $region91: #{concat_pooling_gru_adaptive.1} parent=55 // pred_region
          %476 = dma.done [#allocation23], 16
        $region92: #{concat_pooling_gru_adaptive.1} parent=55 // pred_fallthru
          _
        %p477 = pneg %p61
        %p478 = pneg %p58
        %s479 = sand.u32 %s28, 1
        %s480 = scalar_lea.sflag [#allocation14], %s479
        %s481 = sand.u32 %s76, 1
        %s482 = smul.addr %s481, 4
        %s483 = scalar_lea.vmem [#allocation13], %s482
        %p484 = pneg %p89
        %p485 = pneg %p86
        %s486 = sand.u32 %s28, 1
        %s487 = scalar_lea.sflag [#allocation14], %s486
        %s488 = sand.u32 %s106, 1
        %s489 = smul.addr %s488, 4
        %s490 = scalar_lea.vmem [#allocation15], %s489
        %p491 = pneg %p119
        %p492 = pneg %p116
        %p493 = pneg %p140
        %p494 = pneg %p137
        %p495 = pneg %p161
        %p496 = pneg %p158
        %p497 = pneg %p182
        %p498 = pneg %p179
        %p499 = pneg %p203
        %p500 = pneg %p200
        %p501 = pneg %p224
        %p502 = pneg %p221
        %p503 = pneg %p245
        %p504 = pneg %p242
        %p505 = pneg %p271
        %p506 = pneg %p268
        %s507 = smul.u32 4, %s33
        %s508 = ssub.s32 1, %s33
        %s509 = smul.u32 4, %s508
        %p511 = scmp.eq.s32.totalorder %s33, 0
        // Predicated region
        $region93: #{concat_pooling_gru_adaptive.1} parent=55 // pred_check
          %p512 = pneg %p511
        $region94: #{concat_pooling_gru_adaptive.1} parent=55 // pred_check_branch
          %514 = sbr.rel (%p512) target = $region96
        $region95: #{concat_pooling_gru_adaptive.1} parent=55 // pred_region
          %vm515 = vcmask 254976
          %516 = vst.msk [vmem:[#allocation4] sm:$0x3] %vm515, 0.0
          %517 = vst.msk [vmem:[#allocation5] sm:$0x3] %vm515, 0.0
          %518 = vst.msk [vmem:[#allocation6] sm:$0x3] %vm515, 0.0
          %519 = vst.msk [vmem:[#allocation7] sm:$0x3] %vm515, 0.0
          %520 = vst.msk [vmem:[#allocation8] sm:$0x3] %vm515, -inf
          %521 = vst.msk [vmem:[#allocation9] sm:$0x3] %vm515, -inf
        $region96: #{concat_pooling_gru_adaptive.1} parent=55 // pred_fallthru
          _
        %v522 = vld [vmem:[#allocation16] sm:$0xf]
        %v523 = vld [vmem:[#allocation16 + $0x4] sm:$0xf]
        %s524 = scalar_lea.vmem [#allocation16], 8
        %v525 = vld [vmem:[%s524] sm:$0xf]
        %v526 = vld [vmem:[%s524 + $0x4] sm:$0xf]
        %v527 = vld [vmem:[#allocation18] sm:$0xf]
        %v528 = vld [vmem:[#allocation18 + $0x4] sm:$0xf]
        %v529 = vld [vmem:[#allocation18 + $0x8] sm:$0xf]
        %v530 = vld [vmem:[#allocation18 + $0xc] sm:$0xf]
        %s531 = scalar_lea.vmem [#allocation18], 16
        %v532 = vld [vmem:[%s531] sm:$0xf]
        %v533 = vld [vmem:[%s531 + $0x4] sm:$0xf]
        %v534 = vld [vmem:[%s531 + $0x8] sm:$0xf]
        %v535 = vld [vmem:[%s531 + $0xc] sm:$0xf]
        %v536 = vld [vmem:[#allocation19] sm:$0x1]
        %v538 = vlaneseq
        %v539 = vshrl.u32 %v538, 7
        %v540 = vsub.s32 0, %v539
        %v541 = vrot.slane %v536, %v540
        %s543 = scalar_lea.vmem [#allocation19], 1
        %v544 = vld [vmem:[%s543] sm:$0x1]
        %v546 = vlaneseq
        %v547 = vshrl.u32 %v546, 7
        %v548 = vsub.s32 0, %v547
        %v549 = vrot.slane %v544, %v548
        %v551 = vld [vmem:[#allocation21] sm:$0x1]
        %v553 = vlaneseq
        %v554 = vshrl.u32 %v553, 7
        %v555 = vsub.s32 0, %v554
        %v556 = vrot.slane %v551, %v555
        %s557 = scalar_lea.vmem [#allocation21], 1
        %v558 = vld [vmem:[%s557] sm:$0x1]
        %v560 = vlaneseq
        %v561 = vshrl.u32 %v560, 7
        %v562 = vsub.s32 0, %v561
        %v563 = vrot.slane %v558, %v562
        %v564 = vld [vmem:[#allocation10] sm:$0x3]
        %v565 = vld [vmem:[%s439] sm:$0x1]
        %v568 = vunpack.c.l.b16 %v522
        %v569 = vunpack.c.l.b16 %v523
        %v570 = vpack.c.b16 %v569, %v568
        %vm572 = vcmask 130048
        %v574 = vsel %vm572, %v565, 0
        %576 = vmatprep.subr.bf16.mxu0 0
        %577 = vmatpush1.bf16.msra.mxu0 %v570
        %578 = vmatprep.subr.bf16.mxu0 0
        %579 = vmatpush1.bf16.msra.mxu0 0
        %580 = vmatprep.subr.bf16.mxu0 0
        %581 = vmatpush1.bf16.msra.mxu0 0
        %582 = vmatprep.subr.bf16.mxu0 0
        %583 = vmatpush1.bf16.msra.mxu0 0
        %584 = vmatprep.subr.bf16.mxu0 0
        %585 = vmatpush1.bf16.msra.mxu0 0
        %586 = vmatprep.subr.bf16.mxu0 0
        %587 = vmatpush1.bf16.msra.mxu0 0
        %588 = vmatprep.subr.bf16.mxu0 0
        %589 = vmatpush1.bf16.msra.mxu0 0
        %590 = vmatprep.subr.bf16.mxu0 0
        %591 = vmatpush1.bf16.msra.mxu0 0
        %592 = vmatprep.subr.bf16.mxu0 0
        %593 = vmatpush1.bf16.msra.mxu0 0
        %594 = vmatprep.subr.bf16.mxu0 0
        %595 = vmatpush1.bf16.msra.mxu0 0
        %596 = vmatprep.subr.bf16.mxu0 0
        %597 = vmatpush1.bf16.msra.mxu0 0
        %598 = vmatprep.subr.bf16.mxu0 0
        %599 = vmatpush1.bf16.msra.mxu0 0
        %600 = vmatprep.subr.bf16.mxu0 0
        %601 = vmatpush1.bf16.msra.mxu0 0
        %602 = vmatprep.subr.bf16.mxu0 0
        %603 = vmatpush1.bf16.msra.mxu0 0
        %604 = vmatprep.subr.bf16.mxu0 0
        %605 = vmatpush1.bf16.msra.mxu0 0
        %606 = vmatprep.subr.bf16.mxu0 0
        %607 = vmatpush1.bf16.msra.mxu0 0
        %608 = vmatprep.mubr.bf16.mxu0 0
        %609 = vmatmul.mubr.bf16.gmra.mrb[0].mxu0 %v574
        %v610 = vpop.f32.mrb[0].mxu0
        %v611 = vadd.f32 %v541, %v610
        %v612 = vpop.f32.mrb[0].mxu0
        %v613 = vpop.f32.mrb[0].mxu0
        %v614 = vpop.f32.mrb[0].mxu0
        %615 = vdwg.mxu0
        %vm616 = vcmask 779264
        %617 = vst.msk [vmem:[#allocation2] sm:$0x3] %vm616, %v611
        %v618 = vld [vmem:[%s448] sm:$0x1]
        %v621 = vunpack.c.l.b16 %v525
        %v622 = vunpack.c.l.b16 %v526
        %v623 = vpack.c.b16 %v622, %v621
        %v626 = vsel %vm572, %v618, 0
        %628 = vmatprep.subr.bf16.mxu0 0
        %629 = vmatpush1.bf16.msra.mxu0 %v623
        %630 = vmatprep.subr.bf16.mxu0 0
        %631 = vmatpush1.bf16.msra.mxu0 0
        %632 = vmatprep.subr.bf16.mxu0 0
        %633 = vmatpush1.bf16.msra.mxu0 0
        %634 = vmatprep.subr.bf16.mxu0 0
        %635 = vmatpush1.bf16.msra.mxu0 0
        %636 = vmatprep.subr.bf16.mxu0 0
        %637 = vmatpush1.bf16.msra.mxu0 0
        %638 = vmatprep.subr.bf16.mxu0 0
        %639 = vmatpush1.bf16.msra.mxu0 0
        %640 = vmatprep.subr.bf16.mxu0 0
        %641 = vmatpush1.bf16.msra.mxu0 0
        %642 = vmatprep.subr.bf16.mxu0 0
        %643 = vmatpush1.bf16.msra.mxu0 0
        %644 = vmatprep.subr.bf16.mxu0 0
        %645 = vmatpush1.bf16.msra.mxu0 0
        %646 = vmatprep.subr.bf16.mxu0 0
        %647 = vmatpush1.bf16.msra.mxu0 0
        %648 = vmatprep.subr.bf16.mxu0 0
        %649 = vmatpush1.bf16.msra.mxu0 0
        %650 = vmatprep.subr.bf16.mxu0 0
        %651 = vmatpush1.bf16.msra.mxu0 0
        %652 = vmatprep.subr.bf16.mxu0 0
        %653 = vmatpush1.bf16.msra.mxu0 0
        %654 = vmatprep.subr.bf16.mxu0 0
        %655 = vmatpush1.bf16.msra.mxu0 0
        %656 = vmatprep.subr.bf16.mxu0 0
        %657 = vmatpush1.bf16.msra.mxu0 0
        %658 = vmatprep.subr.bf16.mxu0 0
        %659 = vmatpush1.bf16.msra.mxu0 0
        %660 = vmatprep.mubr.bf16.mxu0 0
        %661 = vmatmul.mubr.bf16.gmra.mrb[0].mxu0 %v626
        %v662 = vpop.f32.mrb[0].mxu0
        %v663 = vadd.f32 %v549, %v662
        %v664 = vpop.f32.mrb[0].mxu0
        %v665 = vpop.f32.mrb[0].mxu0
        %v666 = vpop.f32.mrb[0].mxu0
        %667 = vdwg.mxu0
        %668 = vst.msk [vmem:[#allocation3] sm:$0x3] %vm616, %v663
        %s669 = scalar_lea.vmem %s439, 1 [#allocation13]
        %v670 = vld [vmem:[%s669] sm:$0x1]
        %v672 = vsel %vm572, %v670, 0
        %674 = vmatprep.subr.bf16.mxu0 0
        %675 = vmatpush1.bf16.msra.mxu0 %v570
        %676 = vmatprep.subr.bf16.mxu0 0
        %677 = vmatpush1.bf16.msra.mxu0 0
        %678 = vmatprep.subr.bf16.mxu0 0
        %679 = vmatpush1.bf16.msra.mxu0 0
        %680 = vmatprep.subr.bf16.mxu0 0
        %681 = vmatpush1.bf16.msra.mxu0 0
        %682 = vmatprep.subr.bf16.mxu0 0
        %683 = vmatpush1.bf16.msra.mxu0 0
        %684 = vmatprep.subr.bf16.mxu0 0
        %685 = vmatpush1.bf16.msra.mxu0 0
        %686 = vmatprep.subr.bf16.mxu0 0
        %687 = vmatpush1.bf16.msra.mxu0 0
        %688 = vmatprep.subr.bf16.mxu0 0
        %689 = vmatpush1.bf16.msra.mxu0 0
        %690 = vmatprep.subr.bf16.mxu0 0
        %691 = vmatpush1.bf16.msra.mxu0 0
        %692 = vmatprep.subr.bf16.mxu0 0
        %693 = vmatpush1.bf16.msra.mxu0 0
        %694 = vmatprep.subr.bf16.mxu0 0
        %695 = vmatpush1.bf16.msra.mxu0 0
        %696 = vmatprep.subr.bf16.mxu0 0
        %697 = vmatpush1.bf16.msra.mxu0 0
        %698 = vmatprep.subr.bf16.mxu0 0
        %699 = vmatpush1.bf16.msra.mxu0 0
        %700 = vmatprep.subr.bf16.mxu0 0
        %701 = vmatpush1.bf16.msra.mxu0 0
        %702 = vmatprep.subr.bf16.mxu0 0
        %703 = vmatpush1.bf16.msra.mxu0 0
        %704 = vmatprep.subr.bf16.mxu0 0
        %705 = vmatpush1.bf16.msra.mxu0 0
        %706 = vmatprep.mubr.bf16.mxu0 0
        %707 = vmatmul.mubr.bf16.gmra.mrb[0].mxu0 %v672
        %v708 = vpop.f32.mrb[0].mxu0
        %v709 = vadd.f32 %v541, %v708
        %v710 = vpop.f32.mrb[0].mxu0
        %v711 = vpop.f32.mrb[0].mxu0
        %v712 = vpop.f32.mrb[0].mxu0
        %713 = vdwg.mxu0
        %s714 = scalar_lea.vmem [#allocation2], 2
        %715 = vst.msk [vmem:[%s714] sm:$0x3] %vm616, %v709
        %s716 = scalar_lea.vmem %s448, 1 [#allocation15]
        %v717 = vld [vmem:[%s716] sm:$0x1]
        %v719 = vsel %vm572, %v717, 0
        %721 = vmatprep.subr.bf16.mxu0 0
        %722 = vmatpush1.bf16.msra.mxu0 %v623
        %723 = vmatprep.subr.bf16.mxu0 0
        %724 = vmatpush1.bf16.msra.mxu0 0
        %725 = vmatprep.subr.bf16.mxu0 0
        %726 = vmatpush1.bf16.msra.mxu0 0
        %727 = vmatprep.subr.bf16.mxu0 0
        %728 = vmatpush1.bf16.msra.mxu0 0
        %729 = vmatprep.subr.bf16.mxu0 0
        %730 = vmatpush1.bf16.msra.mxu0 0
        %731 = vmatprep.subr.bf16.mxu0 0
        %732 = vmatpush1.bf16.msra.mxu0 0
        %733 = vmatprep.subr.bf16.mxu0 0
        %734 = vmatpush1.bf16.msra.mxu0 0
        %735 = vmatprep.subr.bf16.mxu0 0
        %736 = vmatpush1.bf16.msra.mxu0 0
        %737 = vmatprep.subr.bf16.mxu0 0
        %738 = vmatpush1.bf16.msra.mxu0 0
        %739 = vmatprep.subr.bf16.mxu0 0
        %740 = vmatpush1.bf16.msra.mxu0 0
        %741 = vmatprep.subr.bf16.mxu0 0
        %742 = vmatpush1.bf16.msra.mxu0 0
        %743 = vmatprep.subr.bf16.mxu0 0
        %744 = vmatpush1.bf16.msra.mxu0 0
        %745 = vmatprep.subr.bf16.mxu0 0
        %746 = vmatpush1.bf16.msra.mxu0 0
        %747 = vmatprep.subr.bf16.mxu0 0
        %748 = vmatpush1.bf16.msra.mxu0 0
        %749 = vmatprep.subr.bf16.mxu0 0
        %750 = vmatpush1.bf16.msra.mxu0 0
        %751 = vmatprep.subr.bf16.mxu0 0
        %752 = vmatpush1.bf16.msra.mxu0 0
        %753 = vmatprep.mubr.bf16.mxu0 0
        %754 = vmatmul.mubr.bf16.gmra.mrb[0].mxu0 %v719
        %v755 = vpop.f32.mrb[0].mxu0
        %v756 = vadd.f32 %v549, %v755
        %v757 = vpop.f32.mrb[0].mxu0
        %v758 = vpop.f32.mrb[0].mxu0
        %v759 = vpop.f32.mrb[0].mxu0
        %760 = vdwg.mxu0
        %s761 = scalar_lea.vmem [#allocation3], 2
        %762 = vst.msk [vmem:[%s761] sm:$0x3] %vm616, %v756
        %s763 = scalar_lea.vmem %s439, 2 [#allocation13]
        %v764 = vld [vmem:[%s763] sm:$0x1]
        %v766 = vsel %vm572, %v764, 0
        %768 = vmatprep.subr.bf16.mxu0 0
        %769 = vmatpush1.bf16.msra.mxu0 %v570
        %770 = vmatprep.subr.bf16.mxu0 0
        %771 = vmatpush1.bf16.msra.mxu0 0
        %772 = vmatprep.subr.bf16.mxu0 0
        %773 = vmatpush1.bf16.msra.mxu0 0
        %774 = vmatprep.subr.bf16.mxu0 0
        %775 = vmatpush1.bf16.msra.mxu0 0
        %776 = vmatprep.subr.bf16.mxu0 0
        %777 = vmatpush1.bf16.msra.mxu0 0
        %778 = vmatprep.subr.bf16.mxu0 0
        %779 = vmatpush1.bf16.msra.mxu0 0
        %780 = vmatprep.subr.bf16.mxu0 0
        %781 = vmatpush1.bf16.msra.mxu0 0
        %782 = vmatprep.subr.bf16.mxu0 0
        %783 = vmatpush1.bf16.msra.mxu0 0
        %784 = vmatprep.subr.bf16.mxu0 0
        %785 = vmatpush1.bf16.msra.mxu0 0
        %786 = vmatprep.subr.bf16.mxu0 0
        %787 = vmatpush1.bf16.msra.mxu0 0
        %788 = vmatprep.subr.bf16.mxu0 0
        %789 = vmatpush1.bf16.msra.mxu0 0
        %790 = vmatprep.subr.bf16.mxu0 0
        %791 = vmatpush1.bf16.msra.mxu0 0
        %792 = vmatprep.subr.bf16.mxu0 0
        %793 = vmatpush1.bf16.msra.mxu0 0
        %794 = vmatprep.subr.bf16.mxu0 0
        %795 = vmatpush1.bf16.msra.mxu0 0
        %796 = vmatprep.subr.bf16.mxu0 0
        %797 = vmatpush1.bf16.msra.mxu0 0
        %798 = vmatprep.subr.bf16.mxu0 0
        %799 = vmatpush1.bf16.msra.mxu0 0
        %800 = vmatprep.mubr.bf16.mxu0 0
        %801 = vmatmul.mubr.bf16.gmra.mrb[0].mxu0 %v766
        %v802 = vpop.f32.mrb[0].mxu0
        %v803 = vadd.f32 %v541, %v802
        %v804 = vpop.f32.mrb[0].mxu0
        %v805 = vpop.f32.mrb[0].mxu0
        %v806 = vpop.f32.mrb[0].mxu0
        %807 = vdwg.mxu0
        %s808 = scalar_lea.vmem [#allocation2], 4
        %809 = vst.msk [vmem:[%s808] sm:$0x3] %vm616, %v803
        %s810 = scalar_lea.vmem %s448, 2 [#allocation15]
        %v811 = vld [vmem:[%s810] sm:$0x1]
        %v813 = vsel %vm572, %v811, 0
        %815 = vmatprep.subr.bf16.mxu0 0
        %816 = vmatpush1.bf16.msra.mxu0 %v623
        %817 = vmatprep.subr.bf16.mxu0 0
        %818 = vmatpush1.bf16.msra.mxu0 0
        %819 = vmatprep.subr.bf16.mxu0 0
        %820 = vmatpush1.bf16.msra.mxu0 0
        %821 = vmatprep.subr.bf16.mxu0 0
        %822 = vmatpush1.bf16.msra.mxu0 0
        %823 = vmatprep.subr.bf16.mxu0 0
        %824 = vmatpush1.bf16.msra.mxu0 0
        %825 = vmatprep.subr.bf16.mxu0 0
        %826 = vmatpush1.bf16.msra.mxu0 0
        %827 = vmatprep.subr.bf16.mxu0 0
        %828 = vmatpush1.bf16.msra.mxu0 0
        %829 = vmatprep.subr.bf16.mxu0 0
        %830 = vmatpush1.bf16.msra.mxu0 0
        %831 = vmatprep.subr.bf16.mxu0 0
        %832 = vmatpush1.bf16.msra.mxu0 0
        %833 = vmatprep.subr.bf16.mxu0 0
        %834 = vmatpush1.bf16.msra.mxu0 0
        %835 = vmatprep.subr.bf16.mxu0 0
        %836 = vmatpush1.bf16.msra.mxu0 0
        %837 = vmatprep.subr.bf16.mxu0 0
        %838 = vmatpush1.bf16.msra.mxu0 0
        %839 = vmatprep.subr.bf16.mxu0 0
        %840 = vmatpush1.bf16.msra.mxu0 0
        %841 = vmatprep.subr.bf16.mxu0 0
        %842 = vmatpush1.bf16.msra.mxu0 0
        %843 = vmatprep.subr.bf16.mxu0 0
        %844 = vmatpush1.bf16.msra.mxu0 0
        %845 = vmatprep.subr.bf16.mxu0 0
        %846 = vmatpush1.bf16.msra.mxu0 0
        %847 = vmatprep.mubr.bf16.mxu0 0
        %848 = vmatmul.mubr.bf16.gmra.mrb[0].mxu0 %v813
        %v849 = vpop.f32.mrb[0].mxu0
        %v850 = vadd.f32 %v549, %v849
        %v851 = vpop.f32.mrb[0].mxu0
        %v852 = vpop.f32.mrb[0].mxu0
        %v853 = vpop.f32.mrb[0].mxu0
        %854 = vdwg.mxu0
        %s855 = scalar_lea.vmem [#allocation3], 4
        %856 = vst.msk [vmem:[%s855] sm:$0x3] %vm616, %v850
        %s857 = scalar_lea.vmem %s439, 3 [#allocation13]
        %v858 = vld [vmem:[%s857] sm:$0x1]
        %v860 = vsel %vm572, %v858, 0
        %862 = vmatprep.subr.bf16.mxu0 0
        %863 = vmatpush1.bf16.msra.mxu0 %v570
        %864 = vmatprep.subr.bf16.mxu0 0
        %865 = vmatpush1.bf16.msra.mxu0 0
        %866 = vmatprep.subr.bf16.mxu0 0
        %867 = vmatpush1.bf16.msra.mxu0 0
        %868 = vmatprep.subr.bf16.mxu0 0
        %869 = vmatpush1.bf16.msra.mxu0 0
        %870 = vmatprep.subr.bf16.mxu0 0
        %871 = vmatpush1.bf16.msra.mxu0 0
        %872 = vmatprep.subr.bf16.mxu0 0
        %873 = vmatpush1.bf16.msra.mxu0 0
        %874 = vmatprep.subr.bf16.mxu0 0
        %875 = vmatpush1.bf16.msra.mxu0 0
        %876 = vmatprep.subr.bf16.mxu0 0
        %877 = vmatpush1.bf16.msra.mxu0 0
        %878 = vmatprep.subr.bf16.mxu0 0
        %879 = vmatpush1.bf16.msra.mxu0 0
        %880 = vmatprep.subr.bf16.mxu0 0
        %881 = vmatpush1.bf16.msra.mxu0 0
        %882 = vmatprep.subr.bf16.mxu0 0
        %883 = vmatpush1.bf16.msra.mxu0 0
        %884 = vmatprep.subr.bf16.mxu0 0
        %885 = vmatpush1.bf16.msra.mxu0 0
        %886 = vmatprep.subr.bf16.mxu0 0
        %887 = vmatpush1.bf16.msra.mxu0 0
        %888 = vmatprep.subr.bf16.mxu0 0
        %889 = vmatpush1.bf16.msra.mxu0 0
        %890 = vmatprep.subr.bf16.mxu0 0
        %891 = vmatpush1.bf16.msra.mxu0 0
        %892 = vmatprep.subr.bf16.mxu0 0
        %893 = vmatpush1.bf16.msra.mxu0 0
        %894 = vmatprep.mubr.bf16.mxu0 0
        %895 = vmatmul.mubr.bf16.gmra.mrb[0].mxu0 %v860
        %v896 = vpop.f32.mrb[0].mxu0
        %v897 = vadd.f32 %v541, %v896
        %v898 = vpop.f32.mrb[0].mxu0
        %v899 = vpop.f32.mrb[0].mxu0
        %v900 = vpop.f32.mrb[0].mxu0
        %901 = vdwg.mxu0
        %s902 = scalar_lea.vmem [#allocation2], 6
        %903 = vst.msk [vmem:[%s902] sm:$0x3] %vm616, %v897
        %s904 = scalar_lea.vmem %s448, 3 [#allocation15]
        %v905 = vld [vmem:[%s904] sm:$0x1]
        %v907 = vsel %vm572, %v905, 0
        %909 = vmatprep.subr.bf16.mxu0 0
        %910 = vmatpush1.bf16.msra.mxu0 %v623
        %911 = vmatprep.subr.bf16.mxu0 0
        %912 = vmatpush1.bf16.msra.mxu0 0
        %913 = vmatprep.subr.bf16.mxu0 0
        %914 = vmatpush1.bf16.msra.mxu0 0
        %915 = vmatprep.subr.bf16.mxu0 0
        %916 = vmatpush1.bf16.msra.mxu0 0
        %917 = vmatprep.subr.bf16.mxu0 0
        %918 = vmatpush1.bf16.msra.mxu0 0
        %919 = vmatprep.subr.bf16.mxu0 0
        %920 = vmatpush1.bf16.msra.mxu0 0
        %921 = vmatprep.subr.bf16.mxu0 0
        %922 = vmatpush1.bf16.msra.mxu0 0
        %923 = vmatprep.subr.bf16.mxu0 0
        %924 = vmatpush1.bf16.msra.mxu0 0
        %925 = vmatprep.subr.bf16.mxu0 0
        %926 = vmatpush1.bf16.msra.mxu0 0
        %927 = vmatprep.subr.bf16.mxu0 0
        %928 = vmatpush1.bf16.msra.mxu0 0
        %929 = vmatprep.subr.bf16.mxu0 0
        %930 = vmatpush1.bf16.msra.mxu0 0
        %931 = vmatprep.subr.bf16.mxu0 0
        %932 = vmatpush1.bf16.msra.mxu0 0
        %933 = vmatprep.subr.bf16.mxu0 0
        %934 = vmatpush1.bf16.msra.mxu0 0
        %935 = vmatprep.subr.bf16.mxu0 0
        %936 = vmatpush1.bf16.msra.mxu0 0
        %937 = vmatprep.subr.bf16.mxu0 0
        %938 = vmatpush1.bf16.msra.mxu0 0
        %939 = vmatprep.subr.bf16.mxu0 0
        %940 = vmatpush1.bf16.msra.mxu0 0
        %941 = vmatprep.mubr.bf16.mxu0 0
        %942 = vmatmul.mubr.bf16.gmra.mrb[0].mxu0 %v907
        %v943 = vpop.f32.mrb[0].mxu0
        %v944 = vadd.f32 %v549, %v943
        %v945 = vpop.f32.mrb[0].mxu0
        %v946 = vpop.f32.mrb[0].mxu0
        %v947 = vpop.f32.mrb[0].mxu0
        %948 = vdwg.mxu0
        %s949 = scalar_lea.vmem [#allocation3], 6
        %950 = vst.msk [vmem:[%s949] sm:$0x3] %vm616, %v944
        %s951 = smul.u32 %s33, 4
        %v952 = vstv %s951
        %v953 = vadd.s32 %v952, 1
        %v954 = vadd.s32 %v952, 2
        %v955 = vadd.s32 %v952, 3
        %vm956 = vcmp.lt.s32.totalorder %v952, %v564
        %vm957 = vcmp.lt.s32.totalorder %v953, %v564
        %vm958 = vcmp.lt.s32.totalorder %v954, %v564
        %vm959 = vcmp.lt.s32.totalorder %v955, %v564
        %v960 = vsel %vm956, 1, 0
        %v961 = vsel %vm957, 1, 0
        %v962 = vsel %vm958, 1, 0
        %v963 = vsel %vm959, 1, 0
        %v964 = vcvt.s32.f32 %v960
        %v965 = vcvt.s32.f32 %v961
        %v966 = vcvt.s32.f32 %v962
        %v967 = vcvt.s32.f32 %v963
        %v968 = vsub.s32 7, %v952
        %v969 = vsub.s32 7, %v953
        %v970 = vsub.s32 7, %v954
        %v971 = vsub.s32 7, %v955
        %vm972 = vcmp.lt.s32.totalorder %v968, %v564
        %vm973 = vcmp.lt.s32.totalorder %v969, %v564
        %vm974 = vcmp.lt.s32.totalorder %v970, %v564
        %vm975 = vcmp.lt.s32.totalorder %v971, %v564
        %v976 = vsel %vm972, 1, 0
        %v977 = vsel %vm973, 1, 0
        %v978 = vsel %vm974, 1, 0
        %v979 = vsel %vm975, 1, 0
        %v980 = vcvt.s32.f32 %v976
        %v981 = vcvt.s32.f32 %v977
        %v982 = vcvt.s32.f32 %v978
        %v983 = vcvt.s32.f32 %v979
        %v984 = vld [vmem:[#allocation4] sm:$0x3]
        %v985 = vld [vmem:[#allocation5] sm:$0x3]
        %v986 = vld [vmem:[#allocation6] sm:$0x3]
        %v987 = vld [vmem:[#allocation7] sm:$0x3]
        %v988 = vld [vmem:[#allocation8] sm:$0x3]
        %v989 = vld [vmem:[#allocation9] sm:$0x3]
        %v990 = vld [vmem:[#allocation2] sm:$0x3]
        %v991 = vpack.c.bf16 %v984, %v984
        %v996 = vunpack.c.l.b16 %v527
        %v997 = vunpack.c.l.b16 %v528
        %v998 = vunpack.c.l.b16 %v529
        %v999 = vunpack.c.l.b16 %v530
        %v1000 = vpack.c.b16 %v997, %v996
        %v1001 = vpack.c.b16 %v999, %v998
        %vm1004 = vcmask 261120
        %v1006 = vsel %vm1004, %v991, 0
        %1008 = vmatprep.subr.bf16.mxu0 0
        %1009 = vmatpush1.bf16.msra.mxu0 %v1000
        %1010 = vmatprep.subr.bf16.mxu0 0
        %1011 = vmatpush1.bf16.msra.mxu0 %v1001
        %1012 = vmatprep.subr.bf16.mxu0 0
        %1013 = vmatpush1.bf16.msra.mxu0 0
        %1014 = vmatprep.subr.bf16.mxu0 0
        %1015 = vmatpush1.bf16.msra.mxu0 0
        %1016 = vmatprep.subr.bf16.mxu0 0
        %1017 = vmatpush1.bf16.msra.mxu0 0
        %1018 = vmatprep.subr.bf16.mxu0 0
        %1019 = vmatpush1.bf16.msra.mxu0 0
        %1020 = vmatprep.subr.bf16.mxu0 0
        %1021 = vmatpush1.bf16.msra.mxu0 0
        %1022 = vmatprep.subr.bf16.mxu0 0
        %1023 = vmatpush1.bf16.msra.mxu0 0
        %1024 = vmatprep.subr.bf16.mxu0 0
        %1025 = vmatpush1.bf16.msra.mxu0 0
        %1026 = vmatprep.subr.bf16.mxu0 0
        %1027 = vmatpush1.bf16.msra.mxu0 0
        %1028 = vmatprep.subr.bf16.mxu0 0
        %1029 = vmatpush1.bf16.msra.mxu0 0
        %1030 = vmatprep.subr.bf16.mxu0 0
        %1031 = vmatpush1.bf16.msra.mxu0 0
        %1032 = vmatprep.subr.bf16.mxu0 0
        %1033 = vmatpush1.bf16.msra.mxu0 0
        %1034 = vmatprep.subr.bf16.mxu0 0
        %1035 = vmatpush1.bf16.msra.mxu0 0
        %1036 = vmatprep.subr.bf16.mxu0 0
        %1037 = vmatpush1.bf16.msra.mxu0 0
        %1038 = vmatprep.subr.bf16.mxu0 0
        %1039 = vmatpush1.bf16.msra.mxu0 0
        %1040 = vmatprep.mubr.bf16.mxu0 0
        %1041 = vmatmul.mubr.bf16.gmra.mrb[0].mxu0 %v1006
        %v1042 = vpop.f32.mrb[0].mxu0
        %v1043 = vadd.f32 0.0, %v1042
        %v1044 = vpop.f32.mrb[0].mxu0
        %v1045 = vpop.f32.mrb[0].mxu0
        %v1046 = vpop.f32.mrb[0].mxu0
        %1047 = vdwg.mxu0
        %v1048 = vadd.f32 %v990, %v1043
        %v1049 = vxor.u32 %v1048, 2147483648
        %v1050 = vmul.f32 %v1049, 1.442695
        %v1051 = vpow.pop %v1050
        %v1052 = vadd.f32 %v1051, 1.0
        %v1053 = vrcp.pop %v1052
        %v1054 = vmul.f32 1.0, %v1053
        %1055 = vrot.lane.b32.xlu0 %v556, 64
        %v1056 = vpop.permute.xlu0 %1055
        %v1058 = vadd.f32 %v1043, %v1056
        %1060 = vrot.lane.b32.xlu0 %v1058, 64
        %v1061 = vpop.permute.xlu0 %1060
        %v1063 = vmul.f32 %v1054, %v1061
        %1065 = vrot.lane.b32.xlu0 %v1063, 64
        %v1066 = vpop.permute.xlu0 %1065
        %v1068 = vadd.f32 %v990, %v1066
        %v1069 = vtanh.pop %v1068
        %1071 = vrot.lane.b32.xlu0 %v1069, 64
        %v1072 = vpop.permute.xlu0 %1071
        %v1074 = vsub.f32 %v984, %v1072
        %1076 = vrot.lane.b32.xlu0 %v1074, 32
        %v1077 = vpop.permute.xlu0 %1076
        %v1079 = vmul.f32 %v1054, %v1077
        %1081 = vrot.lane.b32.xlu0 %v1079, 32
        %v1082 = vpop.permute.xlu0 %1081
        %v1084 = vadd.f32 %v1069, %v1082
        %1086 = vrot.lane.b32.xlu0 %v984, 64
        %v1087 = vpop.permute.xlu0 %1086
        %v1089 = vsub.f32 %v1084, %v1087
        %1091 = vset.pattern.permute.xlu0 0
        %1092 = vperm.xlu0 %1091, %v964
        %v1093 = vpop.permute.xlu0 %1092
        %v1095 = vmul.f32 %v1093, %v1089
        %1097 = vrot.lane.b32.xlu0 %v1095, 64
        %v1098 = vpop.permute.xlu0 %1097
        %v1100 = vadd.f32 %v984, %v1098
        %v1101 = vmul.f32 %v1093, %v1100
        %v1102 = vld [vmem:[%s949] sm:$0x3]
        %v1103 = vpack.c.bf16 %v985, %v985
        %v1108 = vunpack.c.l.b16 %v532
        %v1109 = vunpack.c.l.b16 %v533
        %v1110 = vunpack.c.l.b16 %v534
        %v1111 = vunpack.c.l.b16 %v535
        %v1112 = vpack.c.b16 %v1109, %v1108
        %v1113 = vpack.c.b16 %v1111, %v1110
        %v1117 = vsel %vm1004, %v1103, 0
        %1119 = vmatprep.subr.bf16.mxu0 0
        %1120 = vmatpush1.bf16.msra.mxu0 %v1112
        %1121 = vmatprep.subr.bf16.mxu0 0
        %1122 = vmatpush1.bf16.msra.mxu0 %v1113
        %1123 = vmatprep.subr.bf16.mxu0 0
        %1124 = vmatpush1.bf16.msra.mxu0 0
        %1125 = vmatprep.subr.bf16.mxu0 0
        %1126 = vmatpush1.bf16.msra.mxu0 0
        %1127 = vmatprep.subr.bf16.mxu0 0
        %1128 = vmatpush1.bf16.msra.mxu0 0
        %1129 = vmatprep.subr.bf16.mxu0 0
        %1130 = vmatpush1.bf16.msra.mxu0 0
        %1131 = vmatprep.subr.bf16.mxu0 0
        %1132 = vmatpush1.bf16.msra.mxu0 0
        %1133 = vmatprep.subr.bf16.mxu0 0
        %1134 = vmatpush1.bf16.msra.mxu0 0
        %1135 = vmatprep.subr.bf16.mxu0 0
        %1136 = vmatpush1.bf16.msra.mxu0 0
        %1137 = vmatprep.subr.bf16.mxu0 0
        %1138 = vmatpush1.bf16.msra.mxu0 0
        %1139 = vmatprep.subr.bf16.mxu0 0
        %1140 = vmatpush1.bf16.msra.mxu0 0
        %1141 = vmatprep.subr.bf16.mxu0 0
        %1142 = vmatpush1.bf16.msra.mxu0 0
        %1143 = vmatprep.subr.bf16.mxu0 0
        %1144 = vmatpush1.bf16.msra.mxu0 0
        %1145 = vmatprep.subr.bf16.mxu0 0
        %1146 = vmatpush1.bf16.msra.mxu0 0
        %1147 = vmatprep.subr.bf16.mxu0 0
        %1148 = vmatpush1.bf16.msra.mxu0 0
        %1149 = vmatprep.subr.bf16.mxu0 0
        %1150 = vmatpush1.bf16.msra.mxu0 0
        %1151 = vmatprep.mubr.bf16.mxu0 0
        %1152 = vmatmul.mubr.bf16.gmra.mrb[0].mxu0 %v1117
        %v1153 = vpop.f32.mrb[0].mxu0
        %v1154 = vadd.f32 0.0, %v1153
        %v1155 = vpop.f32.mrb[0].mxu0
        %v1156 = vpop.f32.mrb[0].mxu0
        %v1157 = vpop.f32.mrb[0].mxu0
        %1158 = vdwg.mxu0
        %v1159 = vadd.f32 %v1102, %v1154
        %v1160 = vxor.u32 %v1159, 2147483648
        %v1161 = vmul.f32 %v1160, 1.442695
        %v1162 = vpow.pop %v1161
        %v1163 = vadd.f32 %v1162, 1.0
        %v1164 = vrcp.pop %v1163
        %v1165 = vmul.f32 1.0, %v1164
        %1166 = vrot.lane.b32.xlu0 %v563, 64
        %v1167 = vpop.permute.xlu0 %1166
        %v1169 = vadd.f32 %v1154, %v1167
        %1171 = vrot.lane.b32.xlu0 %v1169, 64
        %v1172 = vpop.permute.xlu0 %1171
        %v1174 = vmul.f32 %v1165, %v1172
        %1176 = vrot.lane.b32.xlu0 %v1174, 64
        %v1177 = vpop.permute.xlu0 %1176
        %v1179 = vadd.f32 %v1102, %v1177
        %v1180 = vtanh.pop %v1179
        %1182 = vrot.lane.b32.xlu0 %v1180, 64
        %v1183 = vpop.permute.xlu0 %1182
        %v1185 = vsub.f32 %v985, %v1183
        %1187 = vrot.lane.b32.xlu0 %v1185, 32
        %v1188 = vpop.permute.xlu0 %1187
        %v1190 = vmul.f32 %v1165, %v1188
        %1192 = vrot.lane.b32.xlu0 %v1190, 32
        %v1193 = vpop.permute.xlu0 %1192
        %v1195 = vadd.f32 %v1180, %v1193
        %1197 = vrot.lane.b32.xlu0 %v985, 64
        %v1198 = vpop.permute.xlu0 %1197
        %v1200 = vsub.f32 %v1195, %v1198
        %1202 = vset.pattern.permute.xlu0 0
        %1203 = vperm.xlu0 %1202, %v980
        %v1204 = vpop.permute.xlu0 %1203
        %v1206 = vmul.f32 %v1204, %v1200
        %1208 = vrot.lane.b32.xlu0 %v1206, 64
        %v1209 = vpop.permute.xlu0 %1208
        %v1211 = vadd.f32 %v985, %v1209
        %v1212 = vmul.f32 %v1204, %v1211
        %v1213 = vadd.f32 %v986, %v1101
        %v1214 = vadd.f32 %v987, %v1212
        %v1215 = vmax.f32 %v988, %v1101
        %v1216 = vmax.f32 %v989, %v1212
        %v1217 = vld [vmem:[%s714] sm:$0x3]
        %v1218 = vpack.c.bf16 %v1100, %v1100
        %v1220 = vsel %vm1004, %v1218, 0
        %1222 = vmatprep.subr.bf16.mxu0 0
        %1223 = vmatpush1.bf16.msra.mxu0 %v1000
        %1224 = vmatprep.subr.bf16.mxu0 0
        %1225 = vmatpush1.bf16.msra.mxu0 %v1001
        %1226 = vmatprep.subr.bf16.mxu0 0
        %1227 = vmatpush1.bf16.msra.mxu0 0
        %1228 = vmatprep.subr.bf16.mxu0 0
        %1229 = vmatpush1.bf16.msra.mxu0 0
        %1230 = vmatprep.subr.bf16.mxu0 0
        %1231 = vmatpush1.bf16.msra.mxu0 0
        %1232 = vmatprep.subr.bf16.mxu0 0
        %1233 = vmatpush1.bf16.msra.mxu0 0
        %1234 = vmatprep.subr.bf16.mxu0 0
        %1235 = vmatpush1.bf16.msra.mxu0 0
        %1236 = vmatprep.subr.bf16.mxu0 0
        %1237 = vmatpush1.bf16.msra.mxu0 0
        %1238 = vmatprep.subr.bf16.mxu0 0
        %1239 = vmatpush1.bf16.msra.mxu0 0
        %1240 = vmatprep.subr.bf16.mxu0 0
        %1241 = vmatpush1.bf16.msra.mxu0 0
        %1242 = vmatprep.subr.bf16.mxu0 0
        %1243 = vmatpush1.bf16.msra.mxu0 0
        %1244 = vmatprep.subr.bf16.mxu0 0
        %1245 = vmatpush1.bf16.msra.mxu0 0
        %1246 = vmatprep.subr.bf16.mxu0 0
        %1247 = vmatpush1.bf16.msra.mxu0 0
        %1248 = vmatprep.subr.bf16.mxu0 0
        %1249 = vmatpush1.bf16.msra.mxu0 0
        %1250 = vmatprep.subr.bf16.mxu0 0
        %1251 = vmatpush1.bf16.msra.mxu0 0
        %1252 = vmatprep.subr.bf16.mxu0 0
        %1253 = vmatpush1.bf16.msra.mxu0 0
        %1254 = vmatprep.mubr.bf16.mxu0 0
        %1255 = vmatmul.mubr.bf16.gmra.mrb[0].mxu0 %v1220
        %v1256 = vpop.f32.mrb[0].mxu0
        %v1257 = vadd.f32 0.0, %v1256
        %v1258 = vpop.f32.mrb[0].mxu0
        %v1259 = vpop.f32.mrb[0].mxu0
        %v1260 = vpop.f32.mrb[0].mxu0
        %1261 = vdwg.mxu0
        %v1262 = vadd.f32 %v1217, %v1257
        %v1263 = vxor.u32 %v1262, 2147483648
        %v1264 = vmul.f32 %v1263, 1.442695
        %v1265 = vpow.pop %v1264
        %v1266 = vadd.f32 %v1265, 1.0
        %v1267 = vrcp.pop %v1266
        %v1268 = vmul.f32 1.0, %v1267
        %v1269 = vadd.f32 %v1257, %v1056
        %1271 = vrot.lane.b32.xlu0 %v1269, 64
        %v1272 = vpop.permute.xlu0 %1271
        %v1274 = vmul.f32 %v1268, %v1272
        %1276 = vrot.lane.b32.xlu0 %v1274, 64
        %v1277 = vpop.permute.xlu0 %1276
        %v1279 = vadd.f32 %v1217, %v1277
        %v1280 = vtanh.pop %v1279
        %1282 = vrot.lane.b32.xlu0 %v1280, 64
        %v1283 = vpop.permute.xlu0 %1282
        %v1285 = vsub.f32 %v1100, %v1283
        %1287 = vrot.lane.b32.xlu0 %v1285, 32
        %v1288 = vpop.permute.xlu0 %1287
        %v1290 = vmul.f32 %v1268, %v1288
        %1292 = vrot.lane.b32.xlu0 %v1290, 32
        %v1293 = vpop.permute.xlu0 %1292
        %v1295 = vadd.f32 %v1280, %v1293
        %1297 = vrot.lane.b32.xlu0 %v1100, 64
        %v1298 = vpop.permute.xlu0 %1297
        %v1300 = vsub.f32 %v1295, %v1298
        %1302 = vset.pattern.permute.xlu0 0
        %1303 = vperm.xlu0 %1302, %v965
        %v1304 = vpop.permute.xlu0 %1303
        %v1306 = vmul.f32 %v1304, %v1300
        %1308 = vrot.lane.b32.xlu0 %v1306, 64
        %v1309 = vpop.permute.xlu0 %1308
        %v1311 = vadd.f32 %v1100, %v1309
        %v1312 = vmul.f32 %v1304, %v1311
        %v1313 = vld [vmem:[%s855] sm:$0x3]
        %v1314 = vpack.c.bf16 %v1211, %v1211
        %v1316 = vsel %vm1004, %v1314, 0
        %1318 = vmatprep.subr.bf16.mxu0 0
        %1319 = vmatpush1.bf16.msra.mxu0 %v1112
        %1320 = vmatprep.subr.bf16.mxu0 0
        %1321 = vmatpush1.bf16.msra.mxu0 %v1113
        %1322 = vmatprep.subr.bf16.mxu0 0
        %1323 = vmatpush1.bf16.msra.mxu0 0
        %1324 = vmatprep.subr.bf16.mxu0 0
        %1325 = vmatpush1.bf16.msra.mxu0 0
        %1326 = vmatprep.subr.bf16.mxu0 0
        %1327 = vmatpush1.bf16.msra.mxu0 0
        %1328 = vmatprep.subr.bf16.mxu0 0
        %1329 = vmatpush1.bf16.msra.mxu0 0
        %1330 = vmatprep.subr.bf16.mxu0 0
        %1331 = vmatpush1.bf16.msra.mxu0 0
        %1332 = vmatprep.subr.bf16.mxu0 0
        %1333 = vmatpush1.bf16.msra.mxu0 0
        %1334 = vmatprep.subr.bf16.mxu0 0
        %1335 = vmatpush1.bf16.msra.mxu0 0
        %1336 = vmatprep.subr.bf16.mxu0 0
        %1337 = vmatpush1.bf16.msra.mxu0 0
        %1338 = vmatprep.subr.bf16.mxu0 0
        %1339 = vmatpush1.bf16.msra.mxu0 0
        %1340 = vmatprep.subr.bf16.mxu0 0
        %1341 = vmatpush1.bf16.msra.mxu0 0
        %1342 = vmatprep.subr.bf16.mxu0 0
        %1343 = vmatpush1.bf16.msra.mxu0 0
        %1344 = vmatprep.subr.bf16.mxu0 0
        %1345 = vmatpush1.bf16.msra.mxu0 0
        %1346 = vmatprep.subr.bf16.mxu0 0
        %1347 = vmatpush1.bf16.msra.mxu0 0
        %1348 = vmatprep.subr.bf16.mxu0 0
        %1349 = vmatpush1.bf16.msra.mxu0 0
        %1350 = vmatprep.mubr.bf16.mxu0 0
        %1351 = vmatmul.mubr.bf16.gmra.mrb[0].mxu0 %v1316
        %v1352 = vpop.f32.mrb[0].mxu0
        %v1353 = vadd.f32 0.0, %v1352
        %v1354 = vpop.f32.mrb[0].mxu0
        %v1355 = vpop.f32.mrb[0].mxu0
        %v1356 = vpop.f32.mrb[0].mxu0
        %1357 = vdwg.mxu0
        %v1358 = vadd.f32 %v1313, %v1353
        %v1359 = vxor.u32 %v1358, 2147483648
        %v1360 = vmul.f32 %v1359, 1.442695
        %v1361 = vpow.pop %v1360
        %v1362 = vadd.f32 %v1361, 1.0
        %v1363 = vrcp.pop %v1362
        %v1364 = vmul.f32 1.0, %v1363
        %v1365 = vadd.f32 %v1353, %v1167
        %1367 = vrot.lane.b32.xlu0 %v1365, 64
        %v1368 = vpop.permute.xlu0 %1367
        %v1370 = vmul.f32 %v1364, %v1368
        %1372 = vrot.lane.b32.xlu0 %v1370, 64
        %v1373 = vpop.permute.xlu0 %1372
        %v1375 = vadd.f32 %v1313, %v1373
        %v1376 = vtanh.pop %v1375
        %1378 = vrot.lane.b32.xlu0 %v1376, 64
        %v1379 = vpop.permute.xlu0 %1378
        %v1381 = vsub.f32 %v1211, %v1379
        %1383 = vrot.lane.b32.xlu0 %v1381, 32
        %v1384 = vpop.permute.xlu0 %1383
        %v1386 = vmul.f32 %v1364, %v1384
        %1388 = vrot.lane.b32.xlu0 %v1386, 32
        %v1389 = vpop.permute.xlu0 %1388
        %v1391 = vadd.f32 %v1376, %v1389
        %1393 = vrot.lane.b32.xlu0 %v1211, 64
        %v1394 = vpop.permute.xlu0 %1393
        %v1396 = vsub.f32 %v1391, %v1394
        %1398 = vset.pattern.permute.xlu0 0
        %1399 = vperm.xlu0 %1398, %v981
        %v1400 = vpop.permute.xlu0 %1399
        %v1402 = vmul.f32 %v1400, %v1396
        %1404 = vrot.lane.b32.xlu0 %v1402, 64
        %v1405 = vpop.permute.xlu0 %1404
        %v1407 = vadd.f32 %v1211, %v1405
        %v1408 = vmul.f32 %v1400, %v1407
        %v1409 = vadd.f32 %v1213, %v1312
        %v1410 = vadd.f32 %v1214, %v1408
        %v1411 = vmax.f32 %v1215, %v1312
        %v1412 = vmax.f32 %v1216, %v1408
        %v1413 = vld [vmem:[%s808] sm:$0x3]
        %v1414 = vpack.c.bf16 %v1311, %v1311
        %v1416 = vsel %vm1004, %v1414, 0
        %1418 = vmatprep.subr.bf16.mxu0 0
        %1419 = vmatpush1.bf16.msra.mxu0 %v1000
        %1420 = vmatprep.subr.bf16.mxu0 0
        %1421 = vmatpush1.bf16.msra.mxu0 %v1001
        %1422 = vmatprep.subr.bf16.mxu0 0
        %1423 = vmatpush1.bf16.msra.mxu0 0
        %1424 = vmatprep.subr.bf16.mxu0 0
        %1425 = vmatpush1.bf16.msra.mxu0 0
        %1426 = vmatprep.subr.bf16.mxu0 0
        %1427 = vmatpush1.bf16.msra.mxu0 0
        %1428 = vmatprep.subr.bf16.mxu0 0
        %1429 = vmatpush1.bf16.msra.mxu0 0
        %1430 = vmatprep.subr.bf16.mxu0 0
        %1431 = vmatpush1.bf16.msra.mxu0 0
        %1432 = vmatprep.subr.bf16.mxu0 0
        %1433 = vmatpush1.bf16.msra.mxu0 0
        %1434 = vmatprep.subr.bf16.mxu0 0
        %1435 = vmatpush1.bf16.msra.mxu0 0
        %1436 = vmatprep.subr.bf16.mxu0 0
        %1437 = vmatpush1.bf16.msra.mxu0 0
        %1438 = vmatprep.subr.bf16.mxu0 0
        %1439 = vmatpush1.bf16.msra.mxu0 0
        %1440 = vmatprep.subr.bf16.mxu0 0
        %1441 = vmatpush1.bf16.msra.mxu0 0
        %1442 = vmatprep.subr.bf16.mxu0 0
        %1443 = vmatpush1.bf16.msra.mxu0 0
        %1444 = vmatprep.subr.bf16.mxu0 0
        %1445 = vmatpush1.bf16.msra.mxu0 0
        %1446 = vmatprep.subr.bf16.mxu0 0
        %1447 = vmatpush1.bf16.msra.mxu0 0
        %1448 = vmatprep.subr.bf16.mxu0 0
        %1449 = vmatpush1.bf16.msra.mxu0 0
        %1450 = vmatprep.mubr.bf16.mxu0 0
        %1451 = vmatmul.mubr.bf16.gmra.mrb[0].mxu0 %v1416
        %v1452 = vpop.f32.mrb[0].mxu0
        %v1453 = vadd.f32 0.0, %v1452
        %v1454 = vpop.f32.mrb[0].mxu0
        %v1455 = vpop.f32.mrb[0].mxu0
        %v1456 = vpop.f32.mrb[0].mxu0
        %1457 = vdwg.mxu0
        %v1458 = vadd.f32 %v1413, %v1453
        %v1459 = vxor.u32 %v1458, 2147483648
        %v1460 = vmul.f32 %v1459, 1.442695
        %v1461 = vpow.pop %v1460
        %v1462 = vadd.f32 %v1461, 1.0
        %v1463 = vrcp.pop %v1462
        %v1464 = vmul.f32 1.0, %v1463
        %v1465 = vadd.f32 %v1453, %v1056
        %1467 = vrot.lane.b32.xlu0 %v1465, 64
        %v1468 = vpop.permute.xlu0 %1467
        %v1470 = vmul.f32 %v1464, %v1468
        %1472 = vrot.lane.b32.xlu0 %v1470, 64
        %v1473 = vpop.permute.xlu0 %1472
        %v1475 = vadd.f32 %v1413, %v1473
        %v1476 = vtanh.pop %v1475
        %1478 = vrot.lane.b32.xlu0 %v1476, 64
        %v1479 = vpop.permute.xlu0 %1478
        %v1481 = vsub.f32 %v1311, %v1479
        %1483 = vrot.lane.b32.xlu0 %v1481, 32
        %v1484 = vpop.permute.xlu0 %1483
        %v1486 = vmul.f32 %v1464, %v1484
        %1488 = vrot.lane.b32.xlu0 %v1486, 32
        %v1489 = vpop.permute.xlu0 %1488
        %v1491 = vadd.f32 %v1476, %v1489
        %1493 = vrot.lane.b32.xlu0 %v1311, 64
        %v1494 = vpop.permute.xlu0 %1493
        %v1496 = vsub.f32 %v1491, %v1494
        %1498 = vset.pattern.permute.xlu0 0
        %1499 = vperm.xlu0 %1498, %v966
        %v1500 = vpop.permute.xlu0 %1499
        %v1502 = vmul.f32 %v1500, %v1496
        %1504 = vrot.lane.b32.xlu0 %v1502, 64
        %v1505 = vpop.permute.xlu0 %1504
        %v1507 = vadd.f32 %v1311, %v1505
        %v1508 = vmul.f32 %v1500, %v1507
        %v1509 = vld [vmem:[%s761] sm:$0x3]
        %v1510 = vpack.c.bf16 %v1407, %v1407
        %v1512 = vsel %vm1004, %v1510, 0
        %1514 = vmatprep.subr.bf16.mxu0 0
        %1515 = vmatpush1.bf16.msra.mxu0 %v1112
        %1516 = vmatprep.subr.bf16.mxu0 0
        %1517 = vmatpush1.bf16.msra.mxu0 %v1113
        %1518 = vmatprep.subr.bf16.mxu0 0
        %1519 = vmatpush1.bf16.msra.mxu0 0
        %1520 = vmatprep.subr.bf16.mxu0 0
        %1521 = vmatpush1.bf16.msra.mxu0 0
        %1522 = vmatprep.subr.bf16.mxu0 0
        %1523 = vmatpush1.bf16.msra.mxu0 0
        %1524 = vmatprep.subr.bf16.mxu0 0
        %1525 = vmatpush1.bf16.msra.mxu0 0
        %1526 = vmatprep.subr.bf16.mxu0 0
        %1527 = vmatpush1.bf16.msra.mxu0 0
        %1528 = vmatprep.subr.bf16.mxu0 0
        %1529 = vmatpush1.bf16.msra.mxu0 0
        %1530 = vmatprep.subr.bf16.mxu0 0
        %1531 = vmatpush1.bf16.msra.mxu0 0
        %1532 = vmatprep.subr.bf16.mxu0 0
        %1533 = vmatpush1.bf16.msra.mxu0 0
        %1534 = vmatprep.subr.bf16.mxu0 0
        %1535 = vmatpush1.bf16.msra.mxu0 0
        %1536 = vmatprep.subr.bf16.mxu0 0
        %1537 = vmatpush1.bf16.msra.mxu0 0
        %1538 = vmatprep.subr.bf16.mxu0 0
        %1539 = vmatpush1.bf16.msra.mxu0 0
        %1540 = vmatprep.subr.bf16.mxu0 0
        %1541 = vmatpush1.bf16.msra.mxu0 0
        %1542 = vmatprep.subr.bf16.mxu0 0
        %1543 = vmatpush1.bf16.msra.mxu0 0
        %1544 = vmatprep.subr.bf16.mxu0 0
        %1545 = vmatpush1.bf16.msra.mxu0 0
        %1546 = vmatprep.mubr.bf16.mxu0 0
        %1547 = vmatmul.mubr.bf16.gmra.mrb[0].mxu0 %v1512
        %v1548 = vpop.f32.mrb[0].mxu0
        %v1549 = vadd.f32 0.0, %v1548
        %v1550 = vpop.f32.mrb[0].mxu0
        %v1551 = vpop.f32.mrb[0].mxu0
        %v1552 = vpop.f32.mrb[0].mxu0
        %1553 = vdwg.mxu0
        %v1554 = vadd.f32 %v1509, %v1549
        %v1555 = vxor.u32 %v1554, 2147483648
        %v1556 = vmul.f32 %v1555, 1.442695
        %v1557 = vpow.pop %v1556
        %v1558 = vadd.f32 %v1557, 1.0
        %v1559 = vrcp.pop %v1558
        %v1560 = vmul.f32 1.0, %v1559
        %v1561 = vadd.f32 %v1549, %v1167
        %1563 = vrot.lane.b32.xlu0 %v1561, 64
        %v1564 = vpop.permute.xlu0 %1563
        %v1566 = vmul.f32 %v1560, %v1564
        %1568 = vrot.lane.b32.xlu0 %v1566, 64
        %v1569 = vpop.permute.xlu0 %1568
        %v1571 = vadd.f32 %v1509, %v1569
        %v1572 = vtanh.pop %v1571
        %1574 = vrot.lane.b32.xlu0 %v1572, 64
        %v1575 = vpop.permute.xlu0 %1574
        %v1577 = vsub.f32 %v1407, %v1575
        %1579 = vrot.lane.b32.xlu0 %v1577, 32
        %v1580 = vpop.permute.xlu0 %1579
        %v1582 = vmul.f32 %v1560, %v1580
        %1584 = vrot.lane.b32.xlu0 %v1582, 32
        %v1585 = vpop.permute.xlu0 %1584
        %v1587 = vadd.f32 %v1572, %v1585
        %1589 = vrot.lane.b32.xlu0 %v1407, 64
        %v1590 = vpop.permute.xlu0 %1589
        %v1592 = vsub.f32 %v1587, %v1590
        %1594 = vset.pattern.permute.xlu0 0
        %1595 = vperm.xlu0 %1594, %v982
        %v1596 = vpop.permute.xlu0 %1595
        %v1598 = vmul.f32 %v1596, %v1592
        %1600 = vrot.lane.b32.xlu0 %v1598, 64
        %v1601 = vpop.permute.xlu0 %1600
        %v1603 = vadd.f32 %v1407, %v1601
        %v1604 = vmul.f32 %v1596, %v1603
        %v1605 = vadd.f32 %v1409, %v1508
        %v1606 = vadd.f32 %v1410, %v1604
        %v1607 = vmax.f32 %v1411, %v1508
        %v1608 = vmax.f32 %v1412, %v1604
        %v1609 = vld [vmem:[%s902] sm:$0x3]
        %v1610 = vpack.c.bf16 %v1507, %v1507
        %v1612 = vsel %vm1004, %v1610, 0
        %1614 = vmatprep.subr.bf16.mxu0 0
        %1615 = vmatpush1.bf16.msra.mxu0 %v1000
        %1616 = vmatprep.subr.bf16.mxu0 0
        %1617 = vmatpush1.bf16.msra.mxu0 %v1001
        %1618 = vmatprep.subr.bf16.mxu0 0
        %1619 = vmatpush1.bf16.msra.mxu0 0
        %1620 = vmatprep.subr.bf16.mxu0 0
        %1621 = vmatpush1.bf16.msra.mxu0 0
        %1622 = vmatprep.subr.bf16.mxu0 0
        %1623 = vmatpush1.bf16.msra.mxu0 0
        %1624 = vmatprep.subr.bf16.mxu0 0
        %1625 = vmatpush1.bf16.msra.mxu0 0
        %1626 = vmatprep.subr.bf16.mxu0 0
        %1627 = vmatpush1.bf16.msra.mxu0 0
        %1628 = vmatprep.subr.bf16.mxu0 0
        %1629 = vmatpush1.bf16.msra.mxu0 0
        %1630 = vmatprep.subr.bf16.mxu0 0
        %1631 = vmatpush1.bf16.msra.mxu0 0
        %1632 = vmatprep.subr.bf16.mxu0 0
        %1633 = vmatpush1.bf16.msra.mxu0 0
        %1634 = vmatprep.subr.bf16.mxu0 0
        %1635 = vmatpush1.bf16.msra.mxu0 0
        %1636 = vmatprep.subr.bf16.mxu0 0
        %1637 = vmatpush1.bf16.msra.mxu0 0
        %1638 = vmatprep.subr.bf16.mxu0 0
        %1639 = vmatpush1.bf16.msra.mxu0 0
        %1640 = vmatprep.subr.bf16.mxu0 0
        %1641 = vmatpush1.bf16.msra.mxu0 0
        %1642 = vmatprep.subr.bf16.mxu0 0
        %1643 = vmatpush1.bf16.msra.mxu0 0
        %1644 = vmatprep.subr.bf16.mxu0 0
        %1645 = vmatpush1.bf16.msra.mxu0 0
        %1646 = vmatprep.mubr.bf16.mxu0 0
        %1647 = vmatmul.mubr.bf16.gmra.mrb[0].mxu0 %v1612
        %v1648 = vpop.f32.mrb[0].mxu0
        %v1649 = vadd.f32 0.0, %v1648
        %v1650 = vpop.f32.mrb[0].mxu0
        %v1651 = vpop.f32.mrb[0].mxu0
        %v1652 = vpop.f32.mrb[0].mxu0
        %1653 = vdwg.mxu0
        %v1654 = vadd.f32 %v1609, %v1649
        %v1655 = vxor.u32 %v1654, 2147483648
        %v1656 = vmul.f32 %v1655, 1.442695
        %v1657 = vpow.pop %v1656
        %v1658 = vadd.f32 %v1657, 1.0
        %v1659 = vrcp.pop %v1658
        %v1660 = vmul.f32 1.0, %v1659
        %v1661 = vadd.f32 %v1649, %v1056
        %1663 = vrot.lane.b32.xlu0 %v1661, 64
        %v1664 = vpop.permute.xlu0 %1663
        %v1666 = vmul.f32 %v1660, %v1664
        %1668 = vrot.lane.b32.xlu0 %v1666, 64
        %v1669 = vpop.permute.xlu0 %1668
        %v1671 = vadd.f32 %v1609, %v1669
        %v1672 = vtanh.pop %v1671
        %1674 = vrot.lane.b32.xlu0 %v1672, 64
        %v1675 = vpop.permute.xlu0 %1674
        %v1677 = vsub.f32 %v1507, %v1675
        %1679 = vrot.lane.b32.xlu0 %v1677, 32
        %v1680 = vpop.permute.xlu0 %1679
        %v1682 = vmul.f32 %v1660, %v1680
        %1684 = vrot.lane.b32.xlu0 %v1682, 32
        %v1685 = vpop.permute.xlu0 %1684
        %v1687 = vadd.f32 %v1672, %v1685
        %1689 = vrot.lane.b32.xlu0 %v1507, 64
        %v1690 = vpop.permute.xlu0 %1689
        %v1692 = vsub.f32 %v1687, %v1690
        %1694 = vset.pattern.permute.xlu0 0
        %1695 = vperm.xlu0 %1694, %v967
        %v1696 = vpop.permute.xlu0 %1695
        %v1698 = vmul.f32 %v1696, %v1692
        %1700 = vrot.lane.b32.xlu0 %v1698, 64
        %v1701 = vpop.permute.xlu0 %1700
        %v1703 = vadd.f32 %v1507, %v1701
        %v1704 = vmul.f32 %v1696, %v1703
        %v1705 = vld [vmem:[#allocation3] sm:$0x3]
        %v1706 = vpack.c.bf16 %v1603, %v1603
        %v1708 = vsel %vm1004, %v1706, 0
        %1710 = vmatprep.subr.bf16.mxu0 0
        %1711 = vmatpush1.bf16.msra.mxu0 %v1112
        %1712 = vmatprep.subr.bf16.mxu0 0
        %1713 = vmatpush1.bf16.msra.mxu0 %v1113
        %1714 = vmatprep.subr.bf16.mxu0 0
        %1715 = vmatpush1.bf16.msra.mxu0 0
        %1716 = vmatprep.subr.bf16.mxu0 0
        %1717 = vmatpush1.bf16.msra.mxu0 0
        %1718 = vmatprep.subr.bf16.mxu0 0
        %1719 = vmatpush1.bf16.msra.mxu0 0
        %1720 = vmatprep.subr.bf16.mxu0 0
        %1721 = vmatpush1.bf16.msra.mxu0 0
        %1722 = vmatprep.subr.bf16.mxu0 0
        %1723 = vmatpush1.bf16.msra.mxu0 0
        %1724 = vmatprep.subr.bf16.mxu0 0
        %1725 = vmatpush1.bf16.msra.mxu0 0
        %1726 = vmatprep.subr.bf16.mxu0 0
        %1727 = vmatpush1.bf16.msra.mxu0 0
        %1728 = vmatprep.subr.bf16.mxu0 0
        %1729 = vmatpush1.bf16.msra.mxu0 0
        %1730 = vmatprep.subr.bf16.mxu0 0
        %1731 = vmatpush1.bf16.msra.mxu0 0
        %1732 = vmatprep.subr.bf16.mxu0 0
        %1733 = vmatpush1.bf16.msra.mxu0 0
        %1734 = vmatprep.subr.bf16.mxu0 0
        %1735 = vmatpush1.bf16.msra.mxu0 0
        %1736 = vmatprep.subr.bf16.mxu0 0
        %1737 = vmatpush1.bf16.msra.mxu0 0
        %1738 = vmatprep.subr.bf16.mxu0 0
        %1739 = vmatpush1.bf16.msra.mxu0 0
        %1740 = vmatprep.subr.bf16.mxu0 0
        %1741 = vmatpush1.bf16.msra.mxu0 0
        %1742 = vmatprep.mubr.bf16.mxu0 0
        %1743 = vmatmul.mubr.bf16.gmra.mrb[0].mxu0 %v1708
        %v1744 = vpop.f32.mrb[0].mxu0
        %v1745 = vadd.f32 0.0, %v1744
        %v1746 = vpop.f32.mrb[0].mxu0
        %v1747 = vpop.f32.mrb[0].mxu0
        %v1748 = vpop.f32.mrb[0].mxu0
        %1749 = vdwg.mxu0
        %v1750 = vadd.f32 %v1705, %v1745
        %v1751 = vxor.u32 %v1750, 2147483648
        %v1752 = vmul.f32 %v1751, 1.442695
        %v1753 = vpow.pop %v1752
        %v1754 = vadd.f32 %v1753, 1.0
        %v1755 = vrcp.pop %v1754
        %v1756 = vmul.f32 1.0, %v1755
        %v1757 = vadd.f32 %v1745, %v1167
        %1759 = vrot.lane.b32.xlu0 %v1757, 64
        %v1760 = vpop.permute.xlu0 %1759
        %v1762 = vmul.f32 %v1756, %v1760
        %1764 = vrot.lane.b32.xlu0 %v1762, 64
        %v1765 = vpop.permute.xlu0 %1764
        %v1767 = vadd.f32 %v1705, %v1765
        %v1768 = vtanh.pop %v1767
        %1770 = vrot.lane.b32.xlu0 %v1768, 64
        %v1771 = vpop.permute.xlu0 %1770
        %v1773 = vsub.f32 %v1603, %v1771
        %1775 = vrot.lane.b32.xlu0 %v1773, 32
        %v1776 = vpop.permute.xlu0 %1775
        %v1778 = vmul.f32 %v1756, %v1776
        %1780 = vrot.lane.b32.xlu0 %v1778, 32
        %v1781 = vpop.permute.xlu0 %1780
        %v1783 = vadd.f32 %v1768, %v1781
        %1785 = vrot.lane.b32.xlu0 %v1603, 64
        %v1786 = vpop.permute.xlu0 %1785
        %v1788 = vsub.f32 %v1783, %v1786
        %1790 = vset.pattern.permute.xlu0 0
        %1791 = vperm.xlu0 %1790, %v983
        %v1792 = vpop.permute.xlu0 %1791
        %v1794 = vmul.f32 %v1792, %v1788
        %1796 = vrot.lane.b32.xlu0 %v1794, 64
        %v1797 = vpop.permute.xlu0 %1796
        %v1799 = vadd.f32 %v1603, %v1797
        %v1800 = vmul.f32 %v1792, %v1799
        %v1801 = vadd.f32 %v1605, %v1704
        %v1802 = vadd.f32 %v1606, %v1800
        %v1803 = vmax.f32 %v1607, %v1704
        %v1804 = vmax.f32 %v1608, %v1800
        %vm1805 = vcmask 254976
        %1806 = vst.msk [vmem:[#allocation4] sm:$0x3] %vm1805, %v1703
        %1807 = vst.msk [vmem:[#allocation5] sm:$0x3] %vm1805, %v1799
        %1808 = vst.msk [vmem:[#allocation6] sm:$0x3] %vm1805, %v1801
        %1809 = vst.msk [vmem:[#allocation7] sm:$0x3] %vm1805, %v1802
        %1810 = vst.msk [vmem:[#allocation8] sm:$0x3] %vm1805, %v1803
        %1811 = vst.msk [vmem:[#allocation9] sm:$0x3] %vm1805, %v1804
        %p1812 = scmp.eq.s32.totalorder %s33, 1
        // Predicated region
        $region97: #{concat_pooling_gru_adaptive.1} parent=55 // pred_check
          %p1813 = pneg %p1812
        $region98: #{concat_pooling_gru_adaptive.1} parent=55 // pred_check_branch
          %1815 = sbr.rel (%p1813) target = $region100
        $region99: #{concat_pooling_gru_adaptive.1} parent=55 // pred_region
          %v1816 = vld [vmem:[#allocation22] sm:$0xff]
          %v1817 = vld [vmem:[#allocation22 + $0x8] sm:$0xff]
          %v1818 = vld [vmem:[#allocation22 + $0x10] sm:$0xff]
          %v1819 = vld [vmem:[#allocation22 + $0x18] sm:$0xff]
          %v1820 = vld [vmem:[#allocation22 + $0x20] sm:$0xff]
          %v1821 = vld [vmem:[#allocation22 + $0x28] sm:$0xff]
          %v1822 = vld [vmem:[#allocation22 + $0x30] sm:$0xff]
          %v1823 = vld [vmem:[#allocation22 + $0x38] sm:$0xff]
          %v1824 = vld [vmem:[#allocation22 + $0x40] sm:$0xff]
          %v1825 = vld [vmem:[#allocation22 + $0x48] sm:$0xff]
          %v1826 = vld [vmem:[#allocation22 + $0x50] sm:$0xff]
          %v1827 = vld [vmem:[#allocation22 + $0x58] sm:$0xff]
          %v1828 = vld [vmem:[#allocation22 + $0x60] sm:$0xff]
          %v1829 = vld [vmem:[#allocation22 + $0x68] sm:$0xff]
          %v1830 = vld [vmem:[#allocation22 + $0x70] sm:$0xff]
          %v1831 = vld [vmem:[#allocation22 + $0x78] sm:$0xff]
          %v1832 = vld [vmem:[#allocation6] sm:$0x3]
          %v1833 = vmul.f32 %v1832, 0.125
          %v1834 = vld [vmem:[#allocation7] sm:$0x3]
          %v1835 = vmul.f32 %v1834, 0.125
          %v1837 = vsel %vm1004, %v1835, 0
          %1839 = vmatprep.subr.mxu0 0.0
          %1840 = vmatpush1.msra.mxu0 %v1820
          %1841 = vmatprep.subr.mxu0 0.0
          %1842 = vmatpush1.msra.mxu0 %v1821
          %1843 = vmatprep.subr.mxu0 0.0
          %1844 = vmatpush1.msra.mxu0 %v1822
          %1845 = vmatprep.subr.mxu0 0.0
          %1846 = vmatpush1.msra.mxu0 %v1823
          %1847 = vmatprep.subr.mxu0 0.0
          %1848 = vmatpush1.msra.mxu0 0.0
          %1849 = vmatprep.subr.mxu0 0.0
          %1850 = vmatpush1.msra.mxu0 0.0
          %1851 = vmatprep.subr.mxu0 0.0
          %1852 = vmatpush1.msra.mxu0 0.0
          %1853 = vmatprep.subr.mxu0 0.0
          %1854 = vmatpush1.msra.mxu0 0.0
          %1855 = vmatprep.subr.mxu0 0.0
          %1856 = vmatpush1.msra.mxu0 0.0
          %1857 = vmatprep.subr.mxu0 0.0
          %1858 = vmatpush1.msra.mxu0 0.0
          %1859 = vmatprep.subr.mxu0 0.0
          %1860 = vmatpush1.msra.mxu0 0.0
          %1861 = vmatprep.subr.mxu0 0.0
          %1862 = vmatpush1.msra.mxu0 0.0
          %1863 = vmatprep.subr.mxu0 0.0
          %1864 = vmatpush1.msra.mxu0 0.0
          %1865 = vmatprep.subr.mxu0 0.0
          %1866 = vmatpush1.msra.mxu0 0.0
          %1867 = vmatprep.subr.mxu0 0.0
          %1868 = vmatpush1.msra.mxu0 0.0
          %1869 = vmatprep.subr.mxu0 0.0
          %1870 = vmatpush1.msra.mxu0 0.0
          %1871 = vmatprep.subr.mxu0 0.0
          %1872 = vmatpush1.msra.mxu0 0.0
          %1873 = vmatprep.subr.mxu0 0.0
          %1874 = vmatpush1.msra.mxu0 0.0
          %1875 = vmatprep.subr.mxu0 0.0
          %1876 = vmatpush1.msra.mxu0 0.0
          %1877 = vmatprep.subr.mxu0 0.0
          %1878 = vmatpush1.msra.mxu0 0.0
          %1879 = vmatprep.subr.mxu0 0.0
          %1880 = vmatpush1.msra.mxu0 0.0
          %1881 = vmatprep.subr.mxu0 0.0
          %1882 = vmatpush1.msra.mxu0 0.0
          %1883 = vmatprep.subr.mxu0 0.0
          %1884 = vmatpush1.msra.mxu0 0.0
          %1885 = vmatprep.subr.mxu0 0.0
          %1886 = vmatpush1.msra.mxu0 0.0
          %1887 = vmatprep.subr.mxu0 0.0
          %1888 = vmatpush1.msra.mxu0 0.0
          %1889 = vmatprep.subr.mxu0 0.0
          %1890 = vmatpush1.msra.mxu0 0.0
          %1891 = vmatprep.subr.mxu0 0.0
          %1892 = vmatpush1.msra.mxu0 0.0
          %1893 = vmatprep.subr.mxu0 0.0
          %1894 = vmatpush1.msra.mxu0 0.0
          %1895 = vmatprep.subr.mxu0 0.0
          %1896 = vmatpush1.msra.mxu0 0.0
          %1897 = vmatprep.subr.mxu0 0.0
          %1898 = vmatpush1.msra.mxu0 0.0
          %1899 = vmatprep.subr.mxu0 0.0
          %1900 = vmatpush1.msra.mxu0 0.0
          %1901 = vmatprep.subr.mxu0 0.0
          %1902 = vmatpush1.msra.mxu0 0.0
          %1903 = vmatprep.mubr.f32.mxu0 0.0
          %1904 = vmatmul.mubr.f32.gmra.mrb[0].mxu0 %v1837
          %v1905 = vpop.f32.mrb[0].mxu0
          %v1906 = vadd.f32 0.0, %v1905
          %v1907 = vpop.f32.mrb[0].mxu0
          %1908 = vdwg.mxu0
          %v1910 = vsel %vm1004, %v1833, 0
          %1912 = vmatprep.subr.mxu0 0.0
          %1913 = vmatpush1.msra.mxu0 %v1816
          %1914 = vmatprep.subr.mxu0 0.0
          %1915 = vmatpush1.msra.mxu0 %v1817
          %1916 = vmatprep.subr.mxu0 0.0
          %1917 = vmatpush1.msra.mxu0 %v1818
          %1918 = vmatprep.subr.mxu0 0.0
          %1919 = vmatpush1.msra.mxu0 %v1819
          %1920 = vmatprep.subr.mxu0 0.0
          %1921 = vmatpush1.msra.mxu0 0.0
          %1922 = vmatprep.subr.mxu0 0.0
          %1923 = vmatpush1.msra.mxu0 0.0
          %1924 = vmatprep.subr.mxu0 0.0
          %1925 = vmatpush1.msra.mxu0 0.0
          %1926 = vmatprep.subr.mxu0 0.0
          %1927 = vmatpush1.msra.mxu0 0.0
          %1928 = vmatprep.subr.mxu0 0.0
          %1929 = vmatpush1.msra.mxu0 0.0
          %1930 = vmatprep.subr.mxu0 0.0
          %1931 = vmatpush1.msra.mxu0 0.0
          %1932 = vmatprep.subr.mxu0 0.0
          %1933 = vmatpush1.msra.mxu0 0.0
          %1934 = vmatprep.subr.mxu0 0.0
          %1935 = vmatpush1.msra.mxu0 0.0
          %1936 = vmatprep.subr.mxu0 0.0
          %1937 = vmatpush1.msra.mxu0 0.0
          %1938 = vmatprep.subr.mxu0 0.0
          %1939 = vmatpush1.msra.mxu0 0.0
          %1940 = vmatprep.subr.mxu0 0.0
          %1941 = vmatpush1.msra.mxu0 0.0
          %1942 = vmatprep.subr.mxu0 0.0
          %1943 = vmatpush1.msra.mxu0 0.0
          %1944 = vmatprep.subr.mxu0 0.0
          %1945 = vmatpush1.msra.mxu0 0.0
          %1946 = vmatprep.subr.mxu0 0.0
          %1947 = vmatpush1.msra.mxu0 0.0
          %1948 = vmatprep.subr.mxu0 0.0
          %1949 = vmatpush1.msra.mxu0 0.0
          %1950 = vmatprep.subr.mxu0 0.0
          %1951 = vmatpush1.msra.mxu0 0.0
          %1952 = vmatprep.subr.mxu0 0.0
          %1953 = vmatpush1.msra.mxu0 0.0
          %1954 = vmatprep.subr.mxu0 0.0
          %1955 = vmatpush1.msra.mxu0 0.0
          %1956 = vmatprep.subr.mxu0 0.0
          %1957 = vmatpush1.msra.mxu0 0.0
          %1958 = vmatprep.subr.mxu0 0.0
          %1959 = vmatpush1.msra.mxu0 0.0
          %1960 = vmatprep.subr.mxu0 0.0
          %1961 = vmatpush1.msra.mxu0 0.0
          %1962 = vmatprep.subr.mxu0 0.0
          %1963 = vmatpush1.msra.mxu0 0.0
          %1964 = vmatprep.subr.mxu0 0.0
          %1965 = vmatpush1.msra.mxu0 0.0
          %1966 = vmatprep.subr.mxu0 0.0
          %1967 = vmatpush1.msra.mxu0 0.0
          %1968 = vmatprep.subr.mxu0 0.0
          %1969 = vmatpush1.msra.mxu0 0.0
          %1970 = vmatprep.subr.mxu0 0.0
          %1971 = vmatpush1.msra.mxu0 0.0
          %1972 = vmatprep.subr.mxu0 0.0
          %1973 = vmatpush1.msra.mxu0 0.0
          %1974 = vmatprep.subr.mxu0 0.0
          %1975 = vmatpush1.msra.mxu0 0.0
          %1976 = vmatprep.mubr.f32.mxu0 0.0
          %1977 = vmatmul.mubr.f32.gmra.mrb[0].mxu0 %v1910
          %v1978 = vpop.f32.mrb[0].mxu0
          %v1979 = vadd.f32 %v1906, %v1978
          %v1980 = vpop.f32.mrb[0].mxu0
          %1981 = vdwg.mxu0
          %v1982 = vld [vmem:[#allocation8] sm:$0x3]
          %v1984 = vsel %vm1004, %v1982, 0
          %1986 = vmatprep.subr.mxu0 0.0
          %1987 = vmatpush1.msra.mxu0 %v1824
          %1988 = vmatprep.subr.mxu0 0.0
          %1989 = vmatpush1.msra.mxu0 %v1825
          %1990 = vmatprep.subr.mxu0 0.0
          %1991 = vmatpush1.msra.mxu0 %v1826
          %1992 = vmatprep.subr.mxu0 0.0
          %1993 = vmatpush1.msra.mxu0 %v1827
          %1994 = vmatprep.subr.mxu0 0.0
          %1995 = vmatpush1.msra.mxu0 0.0
          %1996 = vmatprep.subr.mxu0 0.0
          %1997 = vmatpush1.msra.mxu0 0.0
          %1998 = vmatprep.subr.mxu0 0.0
          %1999 = vmatpush1.msra.mxu0 0.0
          %2000 = vmatprep.subr.mxu0 0.0
          %2001 = vmatpush1.msra.mxu0 0.0
          %2002 = vmatprep.subr.mxu0 0.0
          %2003 = vmatpush1.msra.mxu0 0.0
          %2004 = vmatprep.subr.mxu0 0.0
          %2005 = vmatpush1.msra.mxu0 0.0
          %2006 = vmatprep.subr.mxu0 0.0
          %2007 = vmatpush1.msra.mxu0 0.0
          %2008 = vmatprep.subr.mxu0 0.0
          %2009 = vmatpush1.msra.mxu0 0.0
          %2010 = vmatprep.subr.mxu0 0.0
          %2011 = vmatpush1.msra.mxu0 0.0
          %2012 = vmatprep.subr.mxu0 0.0
          %2013 = vmatpush1.msra.mxu0 0.0
          %2014 = vmatprep.subr.mxu0 0.0
          %2015 = vmatpush1.msra.mxu0 0.0
          %2016 = vmatprep.subr.mxu0 0.0
          %2017 = vmatpush1.msra.mxu0 0.0
          %2018 = vmatprep.subr.mxu0 0.0
          %2019 = vmatpush1.msra.mxu0 0.0
          %2020 = vmatprep.subr.mxu0 0.0
          %2021 = vmatpush1.msra.mxu0 0.0
          %2022 = vmatprep.subr.mxu0 0.0
          %2023 = vmatpush1.msra.mxu0 0.0
          %2024 = vmatprep.subr.mxu0 0.0
          %2025 = vmatpush1.msra.mxu0 0.0
          %2026 = vmatprep.subr.mxu0 0.0
          %2027 = vmatpush1.msra.mxu0 0.0
          %2028 = vmatprep.subr.mxu0 0.0
          %2029 = vmatpush1.msra.mxu0 0.0
          %2030 = vmatprep.subr.mxu0 0.0
          %2031 = vmatpush1.msra.mxu0 0.0
          %2032 = vmatprep.subr.mxu0 0.0
          %2033 = vmatpush1.msra.mxu0 0.0
          %2034 = vmatprep.subr.mxu0 0.0
          %2035 = vmatpush1.msra.mxu0 0.0
          %2036 = vmatprep.subr.mxu0 0.0
          %2037 = vmatpush1.msra.mxu0 0.0
          %2038 = vmatprep.subr.mxu0 0.0
          %2039 = vmatpush1.msra.mxu0 0.0
          %2040 = vmatprep.subr.mxu0 0.0
          %2041 = vmatpush1.msra.mxu0 0.0
          %2042 = vmatprep.subr.mxu0 0.0
          %2043 = vmatpush1.msra.mxu0 0.0
          %2044 = vmatprep.subr.mxu0 0.0
          %2045 = vmatpush1.msra.mxu0 0.0
          %2046 = vmatprep.subr.mxu0 0.0
          %2047 = vmatpush1.msra.mxu0 0.0
          %2048 = vmatprep.subr.mxu0 0.0
          %2049 = vmatpush1.msra.mxu0 0.0
          %2050 = vmatprep.mubr.f32.mxu0 0.0
          %2051 = vmatmul.mubr.f32.gmra.mrb[0].mxu0 %v1984
          %v2052 = vpop.f32.mrb[0].mxu0
          %v2053 = vadd.f32 0.0, %v2052
          %v2054 = vpop.f32.mrb[0].mxu0
          %2055 = vdwg.mxu0
          %v2056 = vadd.f32 %v1979, %v2053
          %v2057 = vld [vmem:[#allocation9] sm:$0x3]
          %v2059 = vsel %vm1004, %v2057, 0
          %2061 = vmatprep.subr.mxu0 0.0
          %2062 = vmatpush1.msra.mxu0 %v1828
          %2063 = vmatprep.subr.mxu0 0.0
          %2064 = vmatpush1.msra.mxu0 %v1829
          %2065 = vmatprep.subr.mxu0 0.0
          %2066 = vmatpush1.msra.mxu0 %v1830
          %2067 = vmatprep.subr.mxu0 0.0
          %2068 = vmatpush1.msra.mxu0 %v1831
          %2069 = vmatprep.subr.mxu0 0.0
          %2070 = vmatpush1.msra.mxu0 0.0
          %2071 = vmatprep.subr.mxu0 0.0
          %2072 = vmatpush1.msra.mxu0 0.0
          %2073 = vmatprep.subr.mxu0 0.0
          %2074 = vmatpush1.msra.mxu0 0.0
          %2075 = vmatprep.subr.mxu0 0.0
          %2076 = vmatpush1.msra.mxu0 0.0
          %2077 = vmatprep.subr.mxu0 0.0
          %2078 = vmatpush1.msra.mxu0 0.0
          %2079 = vmatprep.subr.mxu0 0.0
          %2080 = vmatpush1.msra.mxu0 0.0
          %2081 = vmatprep.subr.mxu0 0.0
          %2082 = vmatpush1.msra.mxu0 0.0
          %2083 = vmatprep.subr.mxu0 0.0
          %2084 = vmatpush1.msra.mxu0 0.0
          %2085 = vmatprep.subr.mxu0 0.0
          %2086 = vmatpush1.msra.mxu0 0.0
          %2087 = vmatprep.subr.mxu0 0.0
          %2088 = vmatpush1.msra.mxu0 0.0
          %2089 = vmatprep.subr.mxu0 0.0
          %2090 = vmatpush1.msra.mxu0 0.0
          %2091 = vmatprep.subr.mxu0 0.0
          %2092 = vmatpush1.msra.mxu0 0.0
          %2093 = vmatprep.subr.mxu0 0.0
          %2094 = vmatpush1.msra.mxu0 0.0
          %2095 = vmatprep.subr.mxu0 0.0
          %2096 = vmatpush1.msra.mxu0 0.0
          %2097 = vmatprep.subr.mxu0 0.0
          %2098 = vmatpush1.msra.mxu0 0.0
          %2099 = vmatprep.subr.mxu0 0.0
          %2100 = vmatpush1.msra.mxu0 0.0
          %2101 = vmatprep.subr.mxu0 0.0
          %2102 = vmatpush1.msra.mxu0 0.0
          %2103 = vmatprep.subr.mxu0 0.0
          %2104 = vmatpush1.msra.mxu0 0.0
          %2105 = vmatprep.subr.mxu0 0.0
          %2106 = vmatpush1.msra.mxu0 0.0
          %2107 = vmatprep.subr.mxu0 0.0
          %2108 = vmatpush1.msra.mxu0 0.0
          %2109 = vmatprep.subr.mxu0 0.0
          %2110 = vmatpush1.msra.mxu0 0.0
          %2111 = vmatprep.subr.mxu0 0.0
          %2112 = vmatpush1.msra.mxu0 0.0
          %2113 = vmatprep.subr.mxu0 0.0
          %2114 = vmatpush1.msra.mxu0 0.0
          %2115 = vmatprep.subr.mxu0 0.0
          %2116 = vmatpush1.msra.mxu0 0.0
          %2117 = vmatprep.subr.mxu0 0.0
          %2118 = vmatpush1.msra.mxu0 0.0
          %2119 = vmatprep.subr.mxu0 0.0
          %2120 = vmatpush1.msra.mxu0 0.0
          %2121 = vmatprep.subr.mxu0 0.0
          %2122 = vmatpush1.msra.mxu0 0.0
          %2123 = vmatprep.subr.mxu0 0.0
          %2124 = vmatpush1.msra.mxu0 0.0
          %2125 = vmatprep.mubr.f32.mxu0 0.0
          %2126 = vmatmul.mubr.f32.gmra.mrb[0].mxu0 %v2059
          %v2127 = vpop.f32.mrb[0].mxu0
          %v2128 = vadd.f32 0.0, %v2127
          %v2129 = vpop.f32.mrb[0].mxu0
          %2130 = vdwg.mxu0
          %v2131 = vadd.f32 %v2056, %v2128
          %v2132 = vld [vmem:[#allocation24] sm:$0x1]
          %v2134 = vlaneseq
          %v2135 = vshrl.u32 %v2134, 7
          %v2136 = vsub.s32 0, %v2135
          %v2137 = vrot.slane %v2132, %v2136
          %v2139 = vadd.f32 %v2131, %v2137
          %vm2140 = vcmask 17408
          %v2141 = vsel %vm2140, %v2139, -inf
          %2142 = vmax.xlane.f32.xlu0 %v2141
          %v2143 = vpop.xlane.xlu0 %2142
          %v2144 = vsub.f32 %v2139, %v2143
          %v2145 = vmul.f32 %v2144, 1.442695
          %v2146 = vpow.pop %v2145
          %v2147 = vsel %vm2140, %v2146, 0.0
          %2148 = vadd.xlane.f32.xlu0 %v2147
          %v2149 = vpop.xlane.xlu0 %2148
          %v2150 = vlog2.pop %v2149
          %v2151 = vmul.f32 %v2150, 0.6931472
          %v2152 = vadd.f32 %v2151, %v2143
          %v2153 = vsub.f32 %v2139, %v2152
          %2154 = vst.msk [vmem:[#allocation25] sm:$0x3] %vm2140, %v2153
        $region100: #{concat_pooling_gru_adaptive.1} parent=55 // pred_fallthru
          _
        // Predicated region
        $region101: #{concat_pooling_gru_adaptive.1} parent=55 // pred_check
          %p2155 = pneg %p268
        $region102: #{concat_pooling_gru_adaptive.1} parent=55 // pred_check_branch
          %2157 = sbr.rel (%p2155) target = $region104
        $region103: #{concat_pooling_gru_adaptive.1} parent=55 // pred_region
          %s2159 = ssub.s32 32, 32
          %2160 = vsyncadd [#allocation12], %s2159
          %s2161 = smul.addr %s32, 32
          %s2162 = scalar_lea.hbm %s9, %s2161
          %s2164 = sshll.u32 [#allocation25], 4
          %s2165 = int_to_ptr.vmem [resolvable:$true] %s2164
          %2167 = dma.vmem_to_hbm [thread:$0]  %s2165, 32, %s2162, [#allocation12]
        $region104: #{concat_pooling_gru_adaptive.1} parent=55 // pred_fallthru
          _
        // Predicated region
        $region105: #{concat_pooling_gru_adaptive.1} parent=55 // pred_check
          %p2168 = pneg %p268
        $region106: #{concat_pooling_gru_adaptive.1} parent=55 // pred_check_branch
          %2170 = sbr.rel (%p2168) target = $region108
        $region107: #{concat_pooling_gru_adaptive.1} parent=55 // pred_region
          %2171 = dma.done [#allocation12], 32
        $region108: #{concat_pooling_gru_adaptive.1} parent=55 // pred_fallthru
          _
      $region56: #{concat_pooling_gru_adaptive.1} parent=5 // pred_fallthru
        _
      %p2172 = scmp.le.s32.totalorder 2, %s23
      // Predicated region
      $region109: #{concat_pooling_gru_adaptive.1} parent=5 // pred_check
        %p2173 = pneg %p2172
      $region110: #{concat_pooling_gru_adaptive.1} parent=5 // pred_check_branch
        %2175 = sbr.rel (%p2173) target = $region112
      $region111: #{concat_pooling_gru_adaptive.1} parent=5 // pred_region
        %s2176 = ssub.s32 %s23, 2
      $region112: #{concat_pooling_gru_adaptive.1} parent=5 // pred_fallthru
        _
    $region6: #{concat_pooling_gru_adaptive.1} parent=1 // loop_footer
      %s27 = sadd.s32 1, %s23
    $region7: #{concat_pooling_gru_adaptive.1} parent=1 // loop_footer_branch
      %22 = sbr.rel target = $region3
    $region8: #{concat_pooling_gru_adaptive.1} parent=1 // loop_exit
      _
    %2177 = vsyncpa [#allocation11], 1
    %s2178 = scalar_lea.sflag [#allocation11], 1
    %2179 = vsyncpa %s2178, 1
    %2180 = vsyncpa [#allocation14], 1
    %s2181 = scalar_lea.sflag [#allocation14], 1
    %2182 = vsyncpa %s2181, 1
    %2183 = vsyncpa [#allocation17], 1
    %2184 = vsyncpa [#allocation20], 1
    %2185 = vsyncpa [#allocation23], 1
    %2186 = vsyncpa [#allocation12], 1
    %s2187 = scalar_lea.sflag [#allocation12], 1
    %2188 = vsyncpa %s2187, 1

</llo_original>
